<compile_context>
chip_gen: v7x
topology: tpu7x:2x2x1
jax: 0.10.0
libtpu: 0.0.40
codegen_flags: <defaults>
</compile_context>

<pallas_src>
import jax
import jax.numpy as jnp
from jax import lax
from jax.experimental import pallas as pl
from jax.experimental.pallas import tpu as pltpu

_MIB = 1024 * 1024
_STATS_LANES = 128  # lane-dense width for flash running max/sum scratch


def _vmem_limit_bytes():
    """Per-generation scoped-VMEM budget: physical VMEM minus ~24 MiB headroom
    (=> ~40 MiB on v7x's 64 MiB, ~104 MiB on v5e/v6e's 128 MiB)."""
    try:
        cap = pltpu.get_tpu_info().vmem_capacity_bytes
    except Exception:
        cap = 64 * _MIB  # assume the smallest (v7x) if the query fails
    return max(32 * _MIB, cap - 24 * _MIB)


def _supports_bf16_eup():
    """bf16 transcendentals exist on v6e/v7x, not on v5-class and older."""
    try:
        kind = jax.devices()[0].device_kind.lower()
    except Exception:
        return False
    return not any(v in kind for v in ("v2", "v3", "v4", "v5"))


def _pick_tile(dim, preferred, aligns):
    """Largest tile <= preferred that divides dim and is a multiple of one of
    `aligns` (tried in order); falls back to the full dim (always legal)."""
    if dim <= preferred:
        return dim
    for align in aligns:
        t = preferred - (preferred % align)
        while t >= align:
            if dim % t == 0:
                return t
            t -= align
    return dim


def _weights_vmem_estimate(S, D, tq, itemsize):
    kv_resident = 2 * 2 * S * D * itemsize   # K + V, double-buffered
    q_and_o = 2 * 2 * tq * D * itemsize      # q in + o out, double-buffered
    w_tile = 2 * tq * S * itemsize           # (tq, S) weights tile, double-buffered
    scores_f32 = tq * S * 4                  # f32 score intermediate
    return kv_resident + q_and_o + w_tile + scores_f32


def _scaled_scores(q_ref, k_ref):
    """(tq, D) x (tk, D)^T -> (tq, tk) f32 scores, scaled by 1/sqrt(d_k).
    Fold the scale into q only for f32 inputs (no pre-matmul rounding for
    low-precision dtypes); contract last dims so no transpose materializes."""
    d_k = q_ref.shape[-1]
    inv_sqrt = 1.0 / (d_k ** 0.5)
    if q_ref.dtype == jnp.float32:
        q = q_ref[...] * jnp.float32(inv_sqrt)
        return lax.dot_general(q, k_ref[...], (((1,), (1,)), ((), ())),
                               preferred_element_type=jnp.float32)
    s = lax.dot_general(q_ref[...], k_ref[...], (((1,), (1,)), ((), ())),
                        preferred_element_type=jnp.float32)
    return s * jnp.float32(inv_sqrt)


# ---------------------------------------------------------------------------
# Path 1: returns (output, attn_weights) -- tiled over query blocks.
# ---------------------------------------------------------------------------
def _make_weights_kernel(bf16_exp):
    def kernel(q_ref, k_ref, v_ref, o_ref, w_ref):
        scores = _scaled_scores(q_ref, k_ref)                  # (tq, S) f32
        m = jnp.max(scores, axis=-1, keepdims=True)
        x = scores - m
        if bf16_exp:
            e = jnp.exp(x.astype(jnp.bfloat16)).astype(jnp.float32)
        else:
            e = jnp.exp(x)
        denom = jnp.sum(e, axis=-1, keepdims=True)
        # Exact reciprocal: attn_weights is a user-visible probability output.
        attn = e * pl.reciprocal(denom, approx=False)          # (tq, S) f32

        out = jnp.dot(attn.astype(v_ref.dtype), v_ref[...],
                      preferred_element_type=jnp.float32)      # (tq, D) f32
        o_ref[...] = out.astype(o_ref.dtype)
        w_ref[...] = attn.astype(w_ref.dtype)

    return kernel


# ---------------------------------------------------------------------------
# Path 2: flash-style forward (output only), online softmax over kv blocks.
# ---------------------------------------------------------------------------
def _make_flash_kernel(bf16_exp):
    def kernel(q_ref, k_ref, v_ref, o_ref, m_sc, l_sc, acc_sc):
        ki = pl.program_id(2)

        @pl.when(ki == 0)
        def _():
            m_sc[...] = jnp.full(m_sc.shape, -jnp.inf, m_sc.dtype)
            l_sc[...] = jnp.zeros(l_sc.shape, l_sc.dtype)
            acc_sc[...] = jnp.zeros(acc_sc.shape, acc_sc.dtype)

        s = _scaled_scores(q_ref, k_ref)                       # (tq, tk) f32

        # Lane-dense running stats: (tq, 128) with the value replicated across
        # lanes -> full-lane stores every kv step (no vst.msk / relayouts).
        m_prev = m_sc[...]
        l_prev = l_sc[...]
        m_new = jnp.maximum(m_prev, jnp.max(s, axis=-1, keepdims=True))
        alpha = jnp.exp(m_prev - m_new)                        # (tq, 128)
        x = s - m_new[:, 0:1]
        if bf16_exp:
            p = jnp.exp(x.astype(jnp.bfloat16))                # bf16 EUP exp
            p_sum = jnp.sum(p.astype(jnp.float32), axis=-1, keepdims=True)
        else:
            p = jnp.exp(x)
            p_sum = jnp.sum(p, axis=-1, keepdims=True)
        l_sc[...] = alpha * l_prev + p_sum
        m_sc[...] = m_new
        acc_sc[...] = acc_sc[...] * alpha[:, 0:1] + jnp.dot(
            p.astype(v_ref.dtype), v_ref[...],
            preferred_element_type=jnp.float32)

        @pl.when(ki == pl.num_programs(2) - 1)
        def _():
            inv = pl.reciprocal(l_sc[...], approx=True)        # (tq, 128)
            o_ref[...] = (acc_sc[...] * inv[:, 0:1]).astype(o_ref.dtype)

    return kernel


def scaled_dp_attn(query, key, value, *, return_weights=True,
                   block_q=None, block_kv=None, bf16_exp=None):
    """Pallas implementation of ScaledDPAttn.forward (eval mode, mask=None).

    Args:
      query, key, value: (B, S, D) arrays of the same dtype.
      return_weights: if True (default, matches the PyTorch module) return
        (output, attn_weights); if False, use the flash-style kernel and
        return only the output (no O(S^2) HBM traffic).
      block_q, block_kv: optional explicit tile sizes (must divide S).
      bf16_exp: compute exp in bf16 on the EUP.  None -> auto: enabled only
        for bf16 inputs on chips with a bf16 EUP (v6e/v7x).
    """
    B, S, D = query.shape
    assert key.shape == (B, S, D) and value.shape == (B, S, D)

    itemsize = jnp.dtype(query.dtype).itemsize
    sub = max(8, 32 // itemsize)          # sublane packing: 8 f32 / 16 bf16 / 32 int8
    if bf16_exp is None:
        bf16_exp = (query.dtype == jnp.bfloat16) and _supports_bf16_eup()
    vmem_limit = _vmem_limit_bytes()

    if return_weights:
        if block_q is not None:
            tq = block_q
        else:
            tq = _pick_tile(S, 256, (256, sub))
            # Shrink tq if the weights path would blow the per-generation
            # VMEM budget (resident K/V + double-buffered (tq, S) weight tile).
            while (tq > sub and
                   _weights_vmem_estimate(S, D, tq, itemsize) > int(0.8 * vmem_limit)):
                smaller = None
                cand = tq // 2 - (tq // 2) % sub
                while cand >= sub:
                    if S % cand == 0:
                        smaller = cand
                        break
                    cand -= sub
                if smaller is None or smaller == tq:
                    break
                tq = smaller

        grid = (B, S // tq)
        in_specs = [
            pl.BlockSpec((None, tq, D), lambda b, qi: (b, qi, 0)),
            pl.BlockSpec((None, S, D), lambda b, qi: (b, 0, 0)),
            pl.BlockSpec((None, S, D), lambda b, qi: (b, 0, 0)),
        ]
        out_specs = (
            pl.BlockSpec((None, tq, D), lambda b, qi: (b, qi, 0)),
            pl.BlockSpec((None, tq, S), lambda b, qi: (b, qi, 0)),
        )
        out_shape = (
            jax.ShapeDtypeStruct((B, S, D), query.dtype),
            jax.ShapeDtypeStruct((B, S, S), query.dtype),
        )
        return pl.pallas_call(
            _make_weights_kernel(bf16_exp),
            out_shape=out_shape,
            grid_spec=pltpu.PrefetchScalarGridSpec(
                num_scalar_prefetch=0,
                grid=grid,
                in_specs=in_specs,
                out_specs=out_specs,
            ),
            compiler_params=pltpu.CompilerParams(
                dimension_semantics=("parallel", "parallel"),
                vmem_limit_bytes=vmem_limit,
            ),
        )(query, key, value)

    # Flash path (output only).  Large tiles: 512 preferred (256-multiples to
    # fill the 256-wide MXU on v6e/v7x) to amortize the ~0.35 us/step grid
    # overhead and cut K/V HBM re-reads.
    tq = block_q if block_q is not None else _pick_tile(S, 512, (256, sub))
    tk = block_kv if block_kv is not None else _pick_tile(S, 512, (256, 128))
    grid = (B, S // tq, S // tk)
    in_specs = [
        pl.BlockSpec((None, tq, D), lambda b, qi, ki: (b, qi, 0)),
        pl.BlockSpec((None, tk, D), lambda b, qi, ki: (b, ki, 0)),
        pl.BlockSpec((None, tk, D), lambda b, qi, ki: (b, ki, 0)),
    ]
    out_specs = pl.BlockSpec((None, tq, D), lambda b, qi, ki: (b, qi, 0))
    out_shape = jax.ShapeDtypeStruct((B, S, D), query.dtype)
    return pl.pallas_call(
        _make_flash_kernel(bf16_exp),
        out_shape=out_shape,
        grid_spec=pltpu.PrefetchScalarGridSpec(
            num_scalar_prefetch=0,
            grid=grid,
            in_specs=in_specs,
            out_specs=out_specs,
            scratch_shapes=[
                pltpu.VMEM((tq, _STATS_LANES), jnp.float32),  # running max
                pltpu.VMEM((tq, _STATS_LANES), jnp.float32),  # running sum
                pltpu.VMEM((tq, D), jnp.float32),             # f32 accumulator
            ],
        ),
        compiler_params=pltpu.CompilerParams(
            dimension_semantics=("parallel", "parallel", "arbitrary"),
            vmem_limit_bytes=vmem_limit,
        ),
    )(query, key, value)


def _reference(query, key, value):
    d_k = query.shape[-1]
    q32 = query.astype(jnp.float32)
    k32 = key.astype(jnp.float32)
    v32 = value.astype(jnp.float32)
    scores = jnp.einsum("bqd,bkd->bqk", q32, k32) / (d_k ** 0.5)
    attn = jax.nn.softmax(scores, axis=-1)
    out = jnp.einsum("bqk,bkd->bqd", attn, v32)
    return out, attn


if __name__ == "__main__":
    key0 = jax.random.PRNGKey(0)
    kq, kk, kv = jax.random.split(key0, 3)

    # (8, 128)-aligned shapes that give multi-step grids with the larger
    # default tiles: weights grid (2, 4); flash grid (2, 2, 2).
    B, S, D = 2, 1024, 128
    query = jax.random.normal(kq, (B, S, D), dtype=jnp.float32)
    key_ = jax.random.normal(kk, (B, S, D), dtype=jnp.float32)
    value = jax.random.normal(kv, (B, S, D), dtype=jnp.float32)

    # Module-exact path (output + attn_weights).
    out, attn_w = scaled_dp_attn(query, key_, value)
    # Flash path with default (large) tiles and with explicit smaller tiles.
    out_flash = scaled_dp_attn(query, key_, value, return_weights=False)
    out_flash_small = scaled_dp_attn(query, key_, value, return_weights=False,
                                     block_q=256, block_kv=256)
    jax.block_until_ready((out, attn_w, out_flash, out_flash_small))

    ref_out, ref_attn = _reference(query, key_, value)
    assert out.shape == (B, S, D) and attn_w.shape == (B, S, S)
    assert jnp.allclose(out, ref_out, atol=2e-3, rtol=2e-3)
    assert jnp.allclose(attn_w, ref_attn, atol=2e-3, rtol=2e-3)
    assert jnp.allclose(out_flash, ref_out, atol=2e-3, rtol=2e-3)
    assert jnp.allclose(out_flash_small, ref_out, atol=2e-3, rtol=2e-3)

    # bf16 smoke test: exercises the non-f32 scale path and (on v6e/v7x) the
    # bf16 EUP exp.  Loose thresholds: bf16 operands / exp / output rounding.
    q16 = query.astype(jnp.bfloat16)
    k16 = key_.astype(jnp.bfloat16)
    v16 = value.astype(jnp.bfloat16)
    out16 = scaled_dp_attn(q16, k16, v16, return_weights=False)
    jax.block_until_ready(out16)
    ref16, _ = _reference(q16, k16, v16)
    diff = jnp.abs(out16.astype(jnp.float32) - ref16)
    assert bool(jnp.all(jnp.isfinite(out16.astype(jnp.float32))))
    assert float(jnp.mean(diff)) < 2e-2
    assert float(jnp.max(diff)) < 2.5e-1

    print("KERNEL_OK")
</pallas_src>

<mosaic_0001>
module attributes {stable_mosaic.version = 11 : i64} {
  func.func @kernel(%arg0: i32, %arg1: i32, %arg2: memref<1x256x128xf32, #tpu.memory_space<vmem>>, %arg3: memref<1x1024x128xf32, #tpu.memory_space<vmem>>, %arg4: memref<1x1024x128xf32, #tpu.memory_space<vmem>>, %arg5: memref<1x256x128xf32, #tpu.memory_space<vmem>>, %arg6: memref<1x256x1024xf32, #tpu.memory_space<vmem>>) attributes {dimension_semantics = [#tpu.dimension_semantics<parallel>, #tpu.dimension_semantics<parallel>], iteration_bounds = array<i64: 2, 4>, scalar_prefetch = 0 : i64, scratch_operands = 0 : i64, tpu.core_type = #tpu.core_type<tc>, window_params = [{transform_indices = @transform_0, window_bounds = array<i64: 1, 256, 128>}, {transform_indices = @transform_1, window_bounds = array<i64: 1, 1024, 128>}, {transform_indices = @transform_2, window_bounds = array<i64: 1, 1024, 128>}, {transform_indices = @transform_3, window_bounds = array<i64: 1, 256, 128>}, {transform_indices = @transform_4, window_bounds = array<i64: 1, 256, 1024>}]} {
    %c0 = arith.constant 0 : index
    %c0_0 = arith.constant 0 : index
    %c0_1 = arith.constant 0 : index
    %0 = vector.load %arg2[%c0, %c0_0, %c0_1] : memref<1x256x128xf32, #tpu.memory_space<vmem>>, vector<1x256x128xf32>
    %1 = vector.shape_cast %0 : vector<1x256x128xf32> to vector<256x128xf32>
    %cst = arith.constant 0.0883883461 : f32
    %2 = vector.broadcast %cst : f32 to vector<256x128xf32>
    %3 = arith.mulf %1, %2 : vector<256x128xf32>
    %c0_2 = arith.constant 0 : index
    %c0_3 = arith.constant 0 : index
    %c0_4 = arith.constant 0 : index
    %4 = vector.load %arg3[%c0_2, %c0_3, %c0_4] : memref<1x1024x128xf32, #tpu.memory_space<vmem>>, vector<1x1024x128xf32>
    %5 = vector.shape_cast %4 : vector<1x1024x128xf32> to vector<1024x128xf32>
    %cst_5 = arith.constant dense<0.000000e+00> : vector<256x1024xf32>
    %6 = tpu.matmul %3, %5, %cst_5 {dimension_numbers = #tpu.dot_dimension_numbers<[1], [1], [0], [0], [0, 0, 1, 0], [], []>} : vector<256x128xf32>, vector<1024x128xf32>, vector<256x1024xf32> -> vector<256x1024xf32>
    %cst_6 = arith.constant dense<0xFF800000> : vector<256xf32>
    %7 = vector.multi_reduction <maximumf>, %6, %cst_6 [1] : vector<256x1024xf32> to vector<256xf32>
    %8 = vector.shape_cast %7 : vector<256xf32> to vector<256x1xf32>
    %9 = vector.broadcast %8 : vector<256x1xf32> to vector<256x1024xf32>
    %10 = arith.subf %6, %9 : vector<256x1024xf32>
    %11 = math.exp %10 : vector<256x1024xf32>
    %cst_7 = arith.constant dense<0.000000e+00> : vector<256xf32>
    %12 = vector.multi_reduction <add>, %11, %cst_7 [1] : vector<256x1024xf32> to vector<256xf32>
    %13 = vector.shape_cast %12 : vector<256xf32> to vector<256x1xf32>
    %14 = tpu.reciprocal %13 : vector<256x1xf32> -> vector<256x1xf32>
    %15 = vector.broadcast %14 : vector<256x1xf32> to vector<256x1024xf32>
    %16 = arith.mulf %11, %15 : vector<256x1024xf32>
    %c0_8 = arith.constant 0 : index
    %c0_9 = arith.constant 0 : index
    %c0_10 = arith.constant 0 : index
    %17 = vector.load %arg4[%c0_8, %c0_9, %c0_10] : memref<1x1024x128xf32, #tpu.memory_space<vmem>>, vector<1x1024x128xf32>
    %18 = vector.shape_cast %17 : vector<1x1024x128xf32> to vector<1024x128xf32>
    %cst_11 = arith.constant dense<0.000000e+00> : vector<256x128xf32>
    %19 = tpu.matmul %16, %18, %cst_11 {dimension_numbers = #tpu.dot_dimension_numbers<[1], [0], [0], [1], [0, 0, 1, 1], [], []>} : vector<256x1024xf32>, vector<1024x128xf32>, vector<256x128xf32> -> vector<256x128xf32>
    %c0_12 = arith.constant 0 : index
    %c0_13 = arith.constant 0 : index
    %c0_14 = arith.constant 0 : index
    %20 = vector.load %arg5[%c0_12, %c0_13, %c0_14] : memref<1x256x128xf32, #tpu.memory_space<vmem>>, vector<1x256x128xf32>
    %21 = vector.shape_cast %20 : vector<1x256x128xf32> to vector<256x128xf32>
    %22 = vector.shape_cast %19 : vector<256x128xf32> to vector<1x256x128xf32>
    tpu.vector_store %arg5[%c0_12, %c0_13, %c0_14], %22 {strides = array<i32>} : memref<1x256x128xf32, #tpu.memory_space<vmem>>, vector<1x256x128xf32>,
    %c0_15 = arith.constant 0 : index
    %c0_16 = arith.constant 0 : index
    %c0_17 = arith.constant 0 : index
    %23 = vector.load %arg6[%c0_15, %c0_16, %c0_17] : memref<1x256x1024xf32, #tpu.memory_space<vmem>>, vector<1x256x1024xf32>
    %24 = vector.shape_cast %23 : vector<1x256x1024xf32> to vector<256x1024xf32>
    %25 = vector.shape_cast %16 : vector<256x1024xf32> to vector<1x256x1024xf32>
    tpu.vector_store %arg6[%c0_15, %c0_16, %c0_17], %25 {strides = array<i32>} : memref<1x256x1024xf32, #tpu.memory_space<vmem>>, vector<1x256x1024xf32>,
    return
  }
  func.func @transform_0(%arg0: i32, %arg1: i32) -> (i32, i32, i32) {
    %c0_i32 = arith.constant 0 : i32
    %c0_i32_0 = arith.constant 0 : i32
    return %arg0, %arg1, %c0_i32 : i32, i32, i32
  }
  func.func @transform_1(%arg0: i32, %arg1: i32) -> (i32, i32, i32) {
    %c0_i32 = arith.constant 0 : i32
    %c0_i32_0 = arith.constant 0 : i32
    %c0_i32_1 = arith.constant 0 : i32
    return %arg0, %c0_i32, %c0_i32_0 : i32, i32, i32
  }
  func.func @transform_2(%arg0: i32, %arg1: i32) -> (i32, i32, i32) {
    %c0_i32 = arith.constant 0 : i32
    %c0_i32_0 = arith.constant 0 : i32
    %c0_i32_1 = arith.constant 0 : i32
    return %arg0, %c0_i32, %c0_i32_0 : i32, i32, i32
  }
  func.func @transform_3(%arg0: i32, %arg1: i32) -> (i32, i32, i32) {
    %c0_i32 = arith.constant 0 : i32
    %c0_i32_0 = arith.constant 0 : i32
    return %arg0, %arg1, %c0_i32 : i32, i32, i32
  }
  func.func @transform_4(%arg0: i32, %arg1: i32) -> (i32, i32, i32) {
    %c0_i32 = arith.constant 0 : i32
    %c0_i32_0 = arith.constant 0 : i32
    return %arg0, %arg1, %c0_i32 : i32, i32, i32
  }
}

</mosaic_0001>

<llo_original>
// kernel: tpu_custom_call.1
$region0: #{tpu_custom_call.1}
  #allocation0 [shape = 'u32[]', space=smem, size = 0x4, offset = 0x4, fixed_abs, tag = 'smem constant byte address 0x4 - core index']
  #allocation1 [shape = 'u32[144,128]{1,0:T(1,128)}', space=vmem, size = 0x12000, scoped, tag = 'internal scratch']
  %s0 = inlined_call_operand.hbm [shape: f32[2,1024,128], index: 0, kind: input, shape index: {}]
  %s1 = inlined_call_operand.hbm [shape: f32[2,1024,128], index: 1, kind: input, shape index: {}]
  %s2 = inlined_call_operand.hbm [shape: f32[2,1024,128], index: 2, kind: input, shape index: {}]
  %s3 = inlined_call_operand.hbm [shape: f32[2,1024,128], index: 3, kind: output, shape index: {0}]
  %s4 = inlined_call_operand.hbm [shape: f32[2,1024,1024], index: 4, kind: output, shape index: {1}]
  %5 = xla_tuple %s3, %s4
  %s6 = sld [smem:[#allocation0]]
  $region65: #{tpu_custom_call.1} parent=0
    _
  %s8 = ssub.s32 1, %s6
  %s9 = scalar_select 0, %s8, %s6
  $region1: #{tpu_custom_call.1} parent=0
    #allocation2 [shape = 'u8[262144]{0}', space=vmem, size = 0x40000, scoped, tag = 'input window, operand 0']
    #allocation3 [shape = 's32[2]{0}', space=sflag, size = 0x8, scoped, tag = 'scoped memory for tpu_custom_call.1']
    #allocation4 [shape = 's32[2]{0}', space=sflag, size = 0x8, scoped, tag = 'scoped memory for tpu_custom_call.1']
    #allocation5 [shape = 'u8[1048576]{0}', space=vmem, size = 0x100000, scoped, tag = 'input window, operand 1']
    #allocation6 [shape = 's32[2]{0}', space=sflag, size = 0x8, scoped, tag = 'scoped memory for tpu_custom_call.1']
    #allocation7 [shape = 'u8[1048576]{0}', space=vmem, size = 0x100000, scoped, tag = 'input window, operand 2']
    #allocation8 [shape = 'u8[262144]{0}', space=vmem, size = 0x40000, scoped, tag = 'output window, operand 0']
    #allocation9 [shape = 'u8[2097152]{0}', space=vmem, size = 0x200000, scoped, tag = 'output window, operand 1']
    #allocation10 [shape = 's32[2]{0}', space=sflag, size = 0x8, scoped, tag = 'scoped memory for tpu_custom_call.1']
    %10 = vsyncpa [#allocation3], 0
    %s11 = scalar_lea.sflag [#allocation3], 1
    %12 = vsyncpa %s11, 0
    %13 = vsyncpa [#allocation6], 0
    %s14 = scalar_lea.sflag [#allocation6], 1
    %15 = vsyncpa %s14, 0
    %16 = vsyncpa [#allocation4], 0
    %s17 = scalar_lea.sflag [#allocation4], 1
    %18 = vsyncpa %s17, 0
    %19 = vsyncpa [#allocation10], 0
    %s20 = scalar_lea.sflag [#allocation10], 1
    %21 = vsyncpa %s20, 0
    loop: start=0, step=1, limit=10
    $region2: #{tpu_custom_call.1} parent=1 // loop_pre_header
      _
    $region3: #{tpu_custom_call.1} parent=1 // loop_header
      %s23 = sphi 0, %s27
      %p24 = scmp.ge.s32.totalorder %s23, 10
      %s30 = sphi 0, %s42
      %s31 = sphi 0, %s38
      %s32 = sphi 0, %s30
      %s33 = sphi 0, %s31
      %s34 = sphi 0, %s32
      %s35 = sphi 0, %s33
      %s47 = sphi 0, %s49
      %s50 = sphi 0, %s47
      %s51 = sphi 0, %s50
      %s67 = sphi 0, %s51
      %s73 = sphi 0, %s75
      %s76 = sphi 0, %s73
      %s77 = sphi 0, %s76
      %s93 = sphi 0, %s77
      %s99 = sphi 0, %s101
      %s102 = sphi 0, %s99
      %s103 = sphi 0, %s102
      %s119 = sphi 0, %s103
      %s127 = sphi 0, %s129
      %s130 = sphi 0, %s127
      %s131 = sphi 0, %s130
      %s147 = sphi 0, %s131
      %s155 = sphi 0, %s157
      %s158 = sphi 0, %s155
      %s159 = sphi 0, %s158
      %s175 = sphi 0, %s159
    $region4: #{tpu_custom_call.1} parent=1 // loop_header_branch
      %26 = sbr.rel (%p24) target = $region8
    $region5: #{tpu_custom_call.1} parent=1 // loop_body
      %s28 = ssub.s32 %s23, 1
      %s29 = ssub.s32 %s23, 2
      %s36 = sadd.s32 1, %s31
      %p37 = scmp.ge.s32.totalorder %s36, 4
      %s38 = scalar_select %p37, 0, %s36
      %s39 = sadd.s32 1, %s30
      %s40 = scalar_select %p37, %s39, %s30
      %p41 = scmp.ge.s32.totalorder %s40, 2
      %s42 = scalar_select %p41, 0, %s40
      %s43 = ssub.s32 %s30, %s42
      %s44 = ssub.s32 %s31, %s38
      %s45 = sor.u32 %s43, %s44
      %p46 = scmp.eq.s32.totalorder %s45, 0
      %s48 = sadd.s32 %s47, 1
      %s49 = scalar_select %p46, %s47, %s48
      %p52 = pneg %p46
      %p53 = scmp.eq.s32.totalorder %s23, 7
      %p54 = por %p52, %p53
      %p55 = scmp.ne.s32.totalorder %s47, %s50
      %p56 = scmp.eq.s32.totalorder %s23, 0
      %p57 = por %p55, %p56
      %p58 = scmp.ne.s32.totalorder %s47, %s50
      %p59 = scmp.eq.s32.totalorder %s28, 7
      %p60 = por %p58, %p59
      %p61 = scmp.ne.s32.totalorder %s50, %s51
      %p62 = scmp.eq.s32.totalorder %s28, 0
      %p63 = por %p61, %p62
      %p64 = scmp.ne.s32.totalorder %s50, %s51
      %p65 = scmp.eq.s32.totalorder %s29, 7
      %p66 = por %p64, %p65
      %p68 = scmp.ne.s32.totalorder %s51, %s67
      %p69 = scmp.eq.s32.totalorder %s29, 0
      %p70 = por %p68, %p69
      %s71 = ssub.s32 %s30, %s42
      %p72 = scmp.eq.s32.totalorder %s71, 0
      %s74 = sadd.s32 %s73, 1
      %s75 = scalar_select %p72, %s73, %s74
      %p78 = pneg %p72
      %p79 = scmp.eq.s32.totalorder %s23, 7
      %p80 = por %p78, %p79
      %p81 = scmp.ne.s32.totalorder %s73, %s76
      %p82 = scmp.eq.s32.totalorder %s23, 0
      %p83 = por %p81, %p82
      %p84 = scmp.ne.s32.totalorder %s73, %s76
      %p85 = scmp.eq.s32.totalorder %s28, 7
      %p86 = por %p84, %p85
      %p87 = scmp.ne.s32.totalorder %s76, %s77
      %p88 = scmp.eq.s32.totalorder %s28, 0
      %p89 = por %p87, %p88
      %p90 = scmp.ne.s32.totalorder %s76, %s77
      %p91 = scmp.eq.s32.totalorder %s29, 7
      %p92 = por %p90, %p91
      %p94 = scmp.ne.s32.totalorder %s77, %s93
      %p95 = scmp.eq.s32.totalorder %s29, 0
      %p96 = por %p94, %p95
      %s97 = ssub.s32 %s30, %s42
      %p98 = scmp.eq.s32.totalorder %s97, 0
      %s100 = sadd.s32 %s99, 1
      %s101 = scalar_select %p98, %s99, %s100
      %p104 = pneg %p98
      %p105 = scmp.eq.s32.totalorder %s23, 7
      %p106 = por %p104, %p105
      %p107 = scmp.ne.s32.totalorder %s99, %s102
      %p108 = scmp.eq.s32.totalorder %s23, 0
      %p109 = por %p107, %p108
      %p110 = scmp.ne.s32.totalorder %s99, %s102
      %p111 = scmp.eq.s32.totalorder %s28, 7
      %p112 = por %p110, %p111
      %p113 = scmp.ne.s32.totalorder %s102, %s103
      %p114 = scmp.eq.s32.totalorder %s28, 0
      %p115 = por %p113, %p114
      %p116 = scmp.ne.s32.totalorder %s102, %s103
      %p117 = scmp.eq.s32.totalorder %s29, 7
      %p118 = por %p116, %p117
      %p120 = scmp.ne.s32.totalorder %s103, %s119
      %p121 = scmp.eq.s32.totalorder %s29, 0
      %p122 = por %p120, %p121
      %s123 = ssub.s32 %s30, %s42
      %s124 = ssub.s32 %s31, %s38
      %s125 = sor.u32 %s123, %s124
      %p126 = scmp.eq.s32.totalorder %s125, 0
      %s128 = sadd.s32 %s127, 1
      %s129 = scalar_select %p126, %s127, %s128
      %p132 = pneg %p126
      %p133 = scmp.eq.s32.totalorder %s23, 7
      %p134 = por %p132, %p133
      %p135 = scmp.ne.s32.totalorder %s127, %s130
      %p136 = scmp.eq.s32.totalorder %s23, 0
      %p137 = por %p135, %p136
      %p138 = scmp.ne.s32.totalorder %s127, %s130
      %p139 = scmp.eq.s32.totalorder %s28, 7
      %p140 = por %p138, %p139
      %p141 = scmp.ne.s32.totalorder %s130, %s131
      %p142 = scmp.eq.s32.totalorder %s28, 0
      %p143 = por %p141, %p142
      %p144 = scmp.ne.s32.totalorder %s130, %s131
      %p145 = scmp.eq.s32.totalorder %s29, 7
      %p146 = por %p144, %p145
      %p148 = scmp.ne.s32.totalorder %s131, %s147
      %p149 = scmp.eq.s32.totalorder %s29, 0
      %p150 = por %p148, %p149
      %s151 = ssub.s32 %s30, %s42
      %s152 = ssub.s32 %s31, %s38
      %s153 = sor.u32 %s151, %s152
      %p154 = scmp.eq.s32.totalorder %s153, 0
      %s156 = sadd.s32 %s155, 1
      %s157 = scalar_select %p154, %s155, %s156
      %p160 = pneg %p154
      %p161 = scmp.eq.s32.totalorder %s23, 7
      %p162 = por %p160, %p161
      %p163 = scmp.ne.s32.totalorder %s155, %s158
      %p164 = scmp.eq.s32.totalorder %s23, 0
      %p165 = por %p163, %p164
      %p166 = scmp.ne.s32.totalorder %s155, %s158
      %p167 = scmp.eq.s32.totalorder %s28, 7
      %p168 = por %p166, %p167
      %p169 = scmp.ne.s32.totalorder %s158, %s159
      %p170 = scmp.eq.s32.totalorder %s28, 0
      %p171 = por %p169, %p170
      %p172 = scmp.ne.s32.totalorder %s158, %s159
      %p173 = scmp.eq.s32.totalorder %s29, 7
      %p174 = por %p172, %p173
      %p176 = scmp.ne.s32.totalorder %s159, %s175
      %p177 = scmp.eq.s32.totalorder %s29, 0
      %p178 = por %p176, %p177
      %p179 = scmp.le.s32.totalorder 1, %s23
      %p180 = scmp.lt.s32.totalorder %s23, 9
      %p181 = pnand %p179, %p180
      %p182 = pneg %p181
      // Predicated region
      $region9: #{tpu_custom_call.1} parent=5 // pred_check
        _
      $region10: #{tpu_custom_call.1} parent=5 // pred_check_branch
        %184 = sbr.rel (%p181) target = $region12
      $region11: #{tpu_custom_call.1} parent=5 // pred_region
        %s185 = ssub.s32 %s23, 1
      $region12: #{tpu_custom_call.1} parent=5 // pred_fallthru
        _
      %p186 = scmp.lt.s32.totalorder %s23, 8
      // Predicated region
      $region13: #{tpu_custom_call.1} parent=5 // pred_check
        %p187 = pneg %p186
      $region14: #{tpu_custom_call.1} parent=5 // pred_check_branch
        %189 = sbr.rel (%p187) target = $region16
      $region15: #{tpu_custom_call.1} parent=5 // pred_region
        // Predicated region
        $region17: #{tpu_custom_call.1} parent=15 // pred_check
          %p190 = pneg %p57
        $region18: #{tpu_custom_call.1} parent=15 // pred_check_branch
          %192 = sbr.rel (%p190) target = $region20
        $region19: #{tpu_custom_call.1} parent=15 // pred_region
          %s193 = sand.u32 %s47, 1
          %s194 = scalar_lea.sflag [#allocation3], %s193
          %s195 = sand.u32 %s47, 1
          %s196 = smul.addr %s195, 256
          %s197 = scalar_lea.vmem [#allocation2], %s196
          %s198 = smul.u32 32, %s31
          %s200 = ssub.s32 4096, 4096
          %201 = vsyncadd %s194, %s200
          %s202 = smul.addr %s30, 128
          %s203 = sadd.s32 %s198, %s202
          %s204 = smul.addr %s203, 128
          %s205 = scalar_lea.hbm %s0, %s204
          %s206 = sshll.u32 %s197, 4
          %s207 = int_to_ptr.vmem [resolvable:$true] %s206
          %212 = dma.hbm_to_vmem [thread:$0]  %s205, 4096, %s207, %s194, 128, 128, 8
        $region20: #{tpu_custom_call.1} parent=15 // pred_fallthru
          _
        // Predicated region
        $region21: #{tpu_custom_call.1} parent=15 // pred_check
          %p213 = pneg %p83
        $region22: #{tpu_custom_call.1} parent=15 // pred_check_branch
          %215 = sbr.rel (%p213) target = $region24
        $region23: #{tpu_custom_call.1} parent=15 // pred_region
          %s216 = sand.u32 %s23, 1
          %s217 = scalar_lea.sflag [#allocation6], %s216
          %s218 = sand.u32 %s73, 1
          %s219 = smul.addr %s218, 1024
          %s220 = scalar_lea.vmem [#allocation5], %s219
          %s222 = ssub.s32 16384, 16384
          %223 = vsyncadd %s217, %s222
          %s224 = smul.addr %s30, 128
          %s225 = smul.addr %s224, 128
          %s226 = scalar_lea.hbm %s1, %s225
          %s227 = sshll.u32 %s220, 4
          %s228 = int_to_ptr.vmem [resolvable:$true] %s227
          %233 = dma.hbm_to_vmem [thread:$0]  %s226, 16384, %s228, %s217, 128, 128, 8
        $region24: #{tpu_custom_call.1} parent=15 // pred_fallthru
          _
        // Predicated region
        $region25: #{tpu_custom_call.1} parent=15 // pred_check
          %p234 = pneg %p109
        $region26: #{tpu_custom_call.1} parent=15 // pred_check_branch
          %236 = sbr.rel (%p234) target = $region28
        $region27: #{tpu_custom_call.1} parent=15 // pred_region
          %s237 = sand.u32 %s23, 1
          %s238 = scalar_lea.sflag [#allocation6], %s237
          %s239 = sand.u32 %s99, 1
          %s240 = smul.addr %s239, 1024
          %s241 = scalar_lea.vmem [#allocation7], %s240
          %s243 = ssub.s32 16384, 16384
          %244 = vsyncadd %s238, %s243
          %s245 = smul.addr %s30, 128
          %s246 = smul.addr %s245, 128
          %s247 = scalar_lea.hbm %s2, %s246
          %s248 = sshll.u32 %s241, 4
          %s249 = int_to_ptr.vmem [resolvable:$true] %s248
          %254 = dma.hbm_to_vmem [thread:$0]  %s247, 16384, %s249, %s238, 128, 128, 8
        $region28: #{tpu_custom_call.1} parent=15 // pred_fallthru
          _
      $region16: #{tpu_custom_call.1} parent=5 // pred_fallthru
        _
      %p255 = scmp.le.s32.totalorder 1, %s23
      %p256 = scmp.lt.s32.totalorder %s23, 9
      %p257 = pnand %p255, %p256
      %p258 = pneg %p257
      // Predicated region
      $region29: #{tpu_custom_call.1} parent=5 // pred_check
        _
      $region30: #{tpu_custom_call.1} parent=5 // pred_check_branch
        %260 = sbr.rel (%p257) target = $region32
      $region31: #{tpu_custom_call.1} parent=5 // pred_region
        %s261 = ssub.s32 %s23, 1
        %s262 = sand.u32 %s50, 1
        %s263 = scalar_lea.sflag [#allocation3], %s262
        %s264 = sand.u32 %s50, 1
        %s265 = smul.addr %s264, 256
        %s266 = scalar_lea.vmem [#allocation2], %s265
        // Predicated region
        $region33: #{tpu_custom_call.1} parent=31 // pred_check
          %p267 = pneg %p63
        $region34: #{tpu_custom_call.1} parent=31 // pred_check_branch
          %269 = sbr.rel (%p267) target = $region36
        $region35: #{tpu_custom_call.1} parent=31 // pred_region
          %270 = dma.done %s263, 4096
        $region36: #{tpu_custom_call.1} parent=31 // pred_fallthru
          _
        %s271 = sand.u32 %s28, 1
        %s272 = scalar_lea.sflag [#allocation6], %s271
        %s273 = sand.u32 %s76, 1
        %s274 = smul.addr %s273, 1024
        %s275 = scalar_lea.vmem [#allocation5], %s274
        // Predicated region
        $region37: #{tpu_custom_call.1} parent=31 // pred_check
          %p276 = pneg %p89
        $region38: #{tpu_custom_call.1} parent=31 // pred_check_branch
          %278 = sbr.rel (%p276) target = $region40
        $region39: #{tpu_custom_call.1} parent=31 // pred_region
          %279 = dma.done %s272, 16384
        $region40: #{tpu_custom_call.1} parent=31 // pred_fallthru
          _
        %s280 = sand.u32 %s28, 1
        %s281 = scalar_lea.sflag [#allocation6], %s280
        %s282 = sand.u32 %s102, 1
        %s283 = smul.addr %s282, 1024
        %s284 = scalar_lea.vmem [#allocation7], %s283
        // Predicated region
        $region41: #{tpu_custom_call.1} parent=31 // pred_check
          %p285 = pneg %p115
        $region42: #{tpu_custom_call.1} parent=31 // pred_check_branch
          %287 = sbr.rel (%p285) target = $region44
        $region43: #{tpu_custom_call.1} parent=31 // pred_region
          %288 = dma.done %s281, 16384
        $region44: #{tpu_custom_call.1} parent=31 // pred_fallthru
          _
        %s289 = sand.u32 %s50, 1
        %s290 = scalar_lea.sflag [#allocation3], %s289
        %s291 = sand.u32 %s50, 1
        %s292 = smul.addr %s291, 256
        %s293 = scalar_lea.vmem [#allocation2], %s292
        %p294 = pneg %p63
        %p295 = pneg %p60
        %s296 = sand.u32 %s28, 1
        %s297 = scalar_lea.sflag [#allocation6], %s296
        %s298 = sand.u32 %s76, 1
        %s299 = smul.addr %s298, 1024
        %s300 = scalar_lea.vmem [#allocation5], %s299
        %p301 = pneg %p89
        %p302 = pneg %p86
        %s303 = sand.u32 %s28, 1
        %s304 = scalar_lea.sflag [#allocation6], %s303
        %s305 = sand.u32 %s102, 1
        %s306 = smul.addr %s305, 1024
        %s307 = scalar_lea.vmem [#allocation7], %s306
        %p308 = pneg %p115
        %p309 = pneg %p112
        %p310 = pneg %p143
        %p311 = pneg %p140
        %s312 = sand.u32 %s130, 1
        %s313 = scalar_lea.sflag [#allocation4], %s312
        %s314 = sand.u32 %s130, 1
        %s315 = smul.addr %s314, 256
        %s316 = scalar_lea.vmem [#allocation8], %s315
        %p317 = pneg %p171
        %p318 = pneg %p168
        %s319 = sand.u32 %s158, 1
        %s320 = scalar_lea.sflag [#allocation10], %s319
        %s321 = sand.u32 %s158, 1
        %s322 = smul.addr %s321, 2048
        %s323 = scalar_lea.vmem [#allocation9], %s322
        %s324 = smul.u32 32, %s33
        %s325 = smul.u32 32, %s33
        %s326 = smul.u32 32, %s33
        %v327 = vld [vmem:[%s266] sm:$0xff]
        %v328 = vld [vmem:[%s266 + $0x8] sm:$0xff]
        %v329 = vld [vmem:[%s266 + $0x10] sm:$0xff]
        %v330 = vld [vmem:[%s266 + $0x18] sm:$0xff]
        %v331 = vld [vmem:[%s266 + $0x20] sm:$0xff]
        %v332 = vld [vmem:[%s266 + $0x28] sm:$0xff]
        %v333 = vld [vmem:[%s266 + $0x30] sm:$0xff]
        %v334 = vld [vmem:[%s266 + $0x38] sm:$0xff]
        %v335 = vld [vmem:[%s266 + $0x40] sm:$0xff]
        %v336 = vld [vmem:[%s266 + $0x48] sm:$0xff]
        %v337 = vld [vmem:[%s266 + $0x50] sm:$0xff]
        %v338 = vld [vmem:[%s266 + $0x58] sm:$0xff]
        %v339 = vld [vmem:[%s266 + $0x60] sm:$0xff]
        %v340 = vld [vmem:[%s266 + $0x68] sm:$0xff]
        %v341 = vld [vmem:[%s266 + $0x70] sm:$0xff]
        %v342 = vld [vmem:[%s266 + $0x78] sm:$0xff]
        %v343 = vld [vmem:[%s266 + $0x80] sm:$0xff]
        %v344 = vld [vmem:[%s266 + $0x88] sm:$0xff]
        %v345 = vld [vmem:[%s266 + $0x90] sm:$0xff]
        %v346 = vld [vmem:[%s266 + $0x98] sm:$0xff]
        %v347 = vld [vmem:[%s266 + $0xa0] sm:$0xff]
        %v348 = vld [vmem:[%s266 + $0xa8] sm:$0xff]
        %v349 = vld [vmem:[%s266 + $0xb0] sm:$0xff]
        %v350 = vld [vmem:[%s266 + $0xb8] sm:$0xff]
        %v351 = vld [vmem:[%s266 + $0xc0] sm:$0xff]
        %v352 = vld [vmem:[%s266 + $0xc8] sm:$0xff]
        %v353 = vld [vmem:[%s266 + $0xd0] sm:$0xff]
        %v354 = vld [vmem:[%s266 + $0xd8] sm:$0xff]
        %v355 = vld [vmem:[%s266 + $0xe0] sm:$0xff]
        %v356 = vld [vmem:[%s266 + $0xe8] sm:$0xff]
        %v357 = vld [vmem:[%s266 + $0xf0] sm:$0xff]
        %v358 = vld [vmem:[%s266 + $0xf8] sm:$0xff]
        %v359 = vmul.f32 %v327, 0.088388346
        %v360 = vmul.f32 %v328, 0.088388346
        %v361 = vmul.f32 %v329, 0.088388346
        %v362 = vmul.f32 %v330, 0.088388346
        %v363 = vmul.f32 %v331, 0.088388346
        %v364 = vmul.f32 %v332, 0.088388346
        %v365 = vmul.f32 %v333, 0.088388346
        %v366 = vmul.f32 %v334, 0.088388346
        %v367 = vmul.f32 %v335, 0.088388346
        %v368 = vmul.f32 %v336, 0.088388346
        %v369 = vmul.f32 %v337, 0.088388346
        %v370 = vmul.f32 %v338, 0.088388346
        %v371 = vmul.f32 %v339, 0.088388346
        %v372 = vmul.f32 %v340, 0.088388346
        %v373 = vmul.f32 %v341, 0.088388346
        %v374 = vmul.f32 %v342, 0.088388346
        %v375 = vmul.f32 %v343, 0.088388346
        %v376 = vmul.f32 %v344, 0.088388346
        %v377 = vmul.f32 %v345, 0.088388346
        %v378 = vmul.f32 %v346, 0.088388346
        %v379 = vmul.f32 %v347, 0.088388346
        %v380 = vmul.f32 %v348, 0.088388346
        %v381 = vmul.f32 %v349, 0.088388346
        %v382 = vmul.f32 %v350, 0.088388346
        %v383 = vmul.f32 %v351, 0.088388346
        %v384 = vmul.f32 %v352, 0.088388346
        %v385 = vmul.f32 %v353, 0.088388346
        %v386 = vmul.f32 %v354, 0.088388346
        %v387 = vmul.f32 %v355, 0.088388346
        %v388 = vmul.f32 %v356, 0.088388346
        %v389 = vmul.f32 %v357, 0.088388346
        %v390 = vmul.f32 %v358, 0.088388346
        %v391 = vld [vmem:[%s275] sm:$0xff]
        %v392 = vld [vmem:[%s275 + $0x8] sm:$0xff]
        %v393 = vld [vmem:[%s275 + $0x10] sm:$0xff]
        %v394 = vld [vmem:[%s275 + $0x18] sm:$0xff]
        %v395 = vld [vmem:[%s275 + $0x20] sm:$0xff]
        %v396 = vld [vmem:[%s275 + $0x28] sm:$0xff]
        %v397 = vld [vmem:[%s275 + $0x30] sm:$0xff]
        %v398 = vld [vmem:[%s275 + $0x38] sm:$0xff]
        %v399 = vld [vmem:[%s275 + $0x40] sm:$0xff]
        %v400 = vld [vmem:[%s275 + $0x48] sm:$0xff]
        %v401 = vld [vmem:[%s275 + $0x50] sm:$0xff]
        %v402 = vld [vmem:[%s275 + $0x58] sm:$0xff]
        %v403 = vld [vmem:[%s275 + $0x60] sm:$0xff]
        %v404 = vld [vmem:[%s275 + $0x68] sm:$0xff]
        %v405 = vld [vmem:[%s275 + $0x70] sm:$0xff]
        %v406 = vld [vmem:[%s275 + $0x78] sm:$0xff]
        %v407 = vld [vmem:[%s275 + $0x80] sm:$0xff]
        %v408 = vld [vmem:[%s275 + $0x88] sm:$0xff]
        %v409 = vld [vmem:[%s275 + $0x90] sm:$0xff]
        %v410 = vld [vmem:[%s275 + $0x98] sm:$0xff]
        %v411 = vld [vmem:[%s275 + $0xa0] sm:$0xff]
        %v412 = vld [vmem:[%s275 + $0xa8] sm:$0xff]
        %v413 = vld [vmem:[%s275 + $0xb0] sm:$0xff]
        %v414 = vld [vmem:[%s275 + $0xb8] sm:$0xff]
        %v415 = vld [vmem:[%s275 + $0xc0] sm:$0xff]
        %v416 = vld [vmem:[%s275 + $0xc8] sm:$0xff]
        %v417 = vld [vmem:[%s275 + $0xd0] sm:$0xff]
        %v418 = vld [vmem:[%s275 + $0xd8] sm:$0xff]
        %v419 = vld [vmem:[%s275 + $0xe0] sm:$0xff]
        %v420 = vld [vmem:[%s275 + $0xe8] sm:$0xff]
        %v421 = vld [vmem:[%s275 + $0xf0] sm:$0xff]
        %v422 = vld [vmem:[%s275 + $0xf8] sm:$0xff]
        %v423 = vld [vmem:[%s275 + $0x100] sm:$0xff]
        %v424 = vld [vmem:[%s275 + $0x108] sm:$0xff]
        %v425 = vld [vmem:[%s275 + $0x110] sm:$0xff]
        %v426 = vld [vmem:[%s275 + $0x118] sm:$0xff]
        %v427 = vld [vmem:[%s275 + $0x120] sm:$0xff]
        %v428 = vld [vmem:[%s275 + $0x128] sm:$0xff]
        %v429 = vld [vmem:[%s275 + $0x130] sm:$0xff]
        %v430 = vld [vmem:[%s275 + $0x138] sm:$0xff]
        %v431 = vld [vmem:[%s275 + $0x140] sm:$0xff]
        %v432 = vld [vmem:[%s275 + $0x148] sm:$0xff]
        %v433 = vld [vmem:[%s275 + $0x150] sm:$0xff]
        %v434 = vld [vmem:[%s275 + $0x158] sm:$0xff]
        %v435 = vld [vmem:[%s275 + $0x160] sm:$0xff]
        %v436 = vld [vmem:[%s275 + $0x168] sm:$0xff]
        %v437 = vld [vmem:[%s275 + $0x170] sm:$0xff]
        %v438 = vld [vmem:[%s275 + $0x178] sm:$0xff]
        %v439 = vld [vmem:[%s275 + $0x180] sm:$0xff]
        %v440 = vld [vmem:[%s275 + $0x188] sm:$0xff]
        %v441 = vld [vmem:[%s275 + $0x190] sm:$0xff]
        %v442 = vld [vmem:[%s275 + $0x198] sm:$0xff]
        %v443 = vld [vmem:[%s275 + $0x1a0] sm:$0xff]
        %v444 = vld [vmem:[%s275 + $0x1a8] sm:$0xff]
        %v445 = vld [vmem:[%s275 + $0x1b0] sm:$0xff]
        %v446 = vld [vmem:[%s275 + $0x1b8] sm:$0xff]
        %v447 = vld [vmem:[%s275 + $0x1c0] sm:$0xff]
        %v448 = vld [vmem:[%s275 + $0x1c8] sm:$0xff]
        %v449 = vld [vmem:[%s275 + $0x1d0] sm:$0xff]
        %v450 = vld [vmem:[%s275 + $0x1d8] sm:$0xff]
        %v451 = vld [vmem:[%s275 + $0x1e0] sm:$0xff]
        %v452 = vld [vmem:[%s275 + $0x1e8] sm:$0xff]
        %v453 = vld [vmem:[%s275 + $0x1f0] sm:$0xff]
        %v454 = vld [vmem:[%s275 + $0x1f8] sm:$0xff]
        %v455 = vld [vmem:[%s275 + $0x200] sm:$0xff]
        %v456 = vld [vmem:[%s275 + $0x208] sm:$0xff]
        %v457 = vld [vmem:[%s275 + $0x210] sm:$0xff]
        %v458 = vld [vmem:[%s275 + $0x218] sm:$0xff]
        %v459 = vld [vmem:[%s275 + $0x220] sm:$0xff]
        %v460 = vld [vmem:[%s275 + $0x228] sm:$0xff]
        %v461 = vld [vmem:[%s275 + $0x230] sm:$0xff]
        %v462 = vld [vmem:[%s275 + $0x238] sm:$0xff]
        %v463 = vld [vmem:[%s275 + $0x240] sm:$0xff]
        %v464 = vld [vmem:[%s275 + $0x248] sm:$0xff]
        %v465 = vld [vmem:[%s275 + $0x250] sm:$0xff]
        %v466 = vld [vmem:[%s275 + $0x258] sm:$0xff]
        %v467 = vld [vmem:[%s275 + $0x260] sm:$0xff]
        %v468 = vld [vmem:[%s275 + $0x268] sm:$0xff]
        %v469 = vld [vmem:[%s275 + $0x270] sm:$0xff]
        %v470 = vld [vmem:[%s275 + $0x278] sm:$0xff]
        %v471 = vld [vmem:[%s275 + $0x280] sm:$0xff]
        %v472 = vld [vmem:[%s275 + $0x288] sm:$0xff]
        %v473 = vld [vmem:[%s275 + $0x290] sm:$0xff]
        %v474 = vld [vmem:[%s275 + $0x298] sm:$0xff]
        %v475 = vld [vmem:[%s275 + $0x2a0] sm:$0xff]
        %v476 = vld [vmem:[%s275 + $0x2a8] sm:$0xff]
        %v477 = vld [vmem:[%s275 + $0x2b0] sm:$0xff]
        %v478 = vld [vmem:[%s275 + $0x2b8] sm:$0xff]
        %v479 = vld [vmem:[%s275 + $0x2c0] sm:$0xff]
        %v480 = vld [vmem:[%s275 + $0x2c8] sm:$0xff]
        %v481 = vld [vmem:[%s275 + $0x2d0] sm:$0xff]
        %v482 = vld [vmem:[%s275 + $0x2d8] sm:$0xff]
        %v483 = vld [vmem:[%s275 + $0x2e0] sm:$0xff]
        %v484 = vld [vmem:[%s275 + $0x2e8] sm:$0xff]
        %v485 = vld [vmem:[%s275 + $0x2f0] sm:$0xff]
        %v486 = vld [vmem:[%s275 + $0x2f8] sm:$0xff]
        %v487 = vld [vmem:[%s275 + $0x300] sm:$0xff]
        %v488 = vld [vmem:[%s275 + $0x308] sm:$0xff]
        %v489 = vld [vmem:[%s275 + $0x310] sm:$0xff]
        %v490 = vld [vmem:[%s275 + $0x318] sm:$0xff]
        %v491 = vld [vmem:[%s275 + $0x320] sm:$0xff]
        %v492 = vld [vmem:[%s275 + $0x328] sm:$0xff]
        %v493 = vld [vmem:[%s275 + $0x330] sm:$0xff]
        %v494 = vld [vmem:[%s275 + $0x338] sm:$0xff]
        %v495 = vld [vmem:[%s275 + $0x340] sm:$0xff]
        %v496 = vld [vmem:[%s275 + $0x348] sm:$0xff]
        %v497 = vld [vmem:[%s275 + $0x350] sm:$0xff]
        %v498 = vld [vmem:[%s275 + $0x358] sm:$0xff]
        %v499 = vld [vmem:[%s275 + $0x360] sm:$0xff]
        %v500 = vld [vmem:[%s275 + $0x368] sm:$0xff]
        %v501 = vld [vmem:[%s275 + $0x370] sm:$0xff]
        %v502 = vld [vmem:[%s275 + $0x378] sm:$0xff]
        %v503 = vld [vmem:[%s275 + $0x380] sm:$0xff]
        %v504 = vld [vmem:[%s275 + $0x388] sm:$0xff]
        %v505 = vld [vmem:[%s275 + $0x390] sm:$0xff]
        %v506 = vld [vmem:[%s275 + $0x398] sm:$0xff]
        %v507 = vld [vmem:[%s275 + $0x3a0] sm:$0xff]
        %v508 = vld [vmem:[%s275 + $0x3a8] sm:$0xff]
        %v509 = vld [vmem:[%s275 + $0x3b0] sm:$0xff]
        %v510 = vld [vmem:[%s275 + $0x3b8] sm:$0xff]
        %v511 = vld [vmem:[%s275 + $0x3c0] sm:$0xff]
        %v512 = vld [vmem:[%s275 + $0x3c8] sm:$0xff]
        %v513 = vld [vmem:[%s275 + $0x3d0] sm:$0xff]
        %v514 = vld [vmem:[%s275 + $0x3d8] sm:$0xff]
        %v515 = vld [vmem:[%s275 + $0x3e0] sm:$0xff]
        %v516 = vld [vmem:[%s275 + $0x3e8] sm:$0xff]
        %v517 = vld [vmem:[%s275 + $0x3f0] sm:$0xff]
        %v518 = vld [vmem:[%s275 + $0x3f8] sm:$0xff]
        %519 = vmatprep.subr.mxu0 0.0
        %520 = vmatpush1.xpose.msra.mxu0 %v391
        %521 = vmatprep.subr.mxu0 0.0
        %522 = vmatpush1.xpose.msra.mxu0 %v392
        %523 = vmatprep.subr.mxu0 0.0
        %524 = vmatpush1.xpose.msra.mxu0 %v393
        %525 = vmatprep.subr.mxu0 0.0
        %526 = vmatpush1.xpose.msra.mxu0 %v394
        %527 = vmatprep.subr.mxu0 0.0
        %528 = vmatpush1.xpose.msra.mxu0 %v395
        %529 = vmatprep.subr.mxu0 0.0
        %530 = vmatpush1.xpose.msra.mxu0 %v396
        %531 = vmatprep.subr.mxu0 0.0
        %532 = vmatpush1.xpose.msra.mxu0 %v397
        %533 = vmatprep.subr.mxu0 0.0
        %534 = vmatpush1.xpose.msra.mxu0 %v398
        %535 = vmatprep.subr.mxu0 0.0
        %536 = vmatpush1.xpose.msra.mxu0 %v399
        %537 = vmatprep.subr.mxu0 0.0
        %538 = vmatpush1.xpose.msra.mxu0 %v400
        %539 = vmatprep.subr.mxu0 0.0
        %540 = vmatpush1.xpose.msra.mxu0 %v401
        %541 = vmatprep.subr.mxu0 0.0
        %542 = vmatpush1.xpose.msra.mxu0 %v402
        %543 = vmatprep.subr.mxu0 0.0
        %544 = vmatpush1.xpose.msra.mxu0 %v403
        %545 = vmatprep.subr.mxu0 0.0
        %546 = vmatpush1.xpose.msra.mxu0 %v404
        %547 = vmatprep.subr.mxu0 0.0
        %548 = vmatpush1.xpose.msra.mxu0 %v405
        %549 = vmatprep.subr.mxu0 0.0
        %550 = vmatpush1.xpose.msra.mxu0 %v406
        %551 = vmatprep.subr.mxu0 0.0
        %552 = vmatpush1.xpose.msra.mxu0 %v407
        %553 = vmatprep.subr.mxu0 0.0
        %554 = vmatpush1.xpose.msra.mxu0 %v408
        %555 = vmatprep.subr.mxu0 0.0
        %556 = vmatpush1.xpose.msra.mxu0 %v409
        %557 = vmatprep.subr.mxu0 0.0
        %558 = vmatpush1.xpose.msra.mxu0 %v410
        %559 = vmatprep.subr.mxu0 0.0
        %560 = vmatpush1.xpose.msra.mxu0 %v411
        %561 = vmatprep.subr.mxu0 0.0
        %562 = vmatpush1.xpose.msra.mxu0 %v412
        %563 = vmatprep.subr.mxu0 0.0
        %564 = vmatpush1.xpose.msra.mxu0 %v413
        %565 = vmatprep.subr.mxu0 0.0
        %566 = vmatpush1.xpose.msra.mxu0 %v414
        %567 = vmatprep.subr.mxu0 0.0
        %568 = vmatpush1.xpose.msra.mxu0 %v415
        %569 = vmatprep.subr.mxu0 0.0
        %570 = vmatpush1.xpose.msra.mxu0 %v416
        %571 = vmatprep.subr.mxu0 0.0
        %572 = vmatpush1.xpose.msra.mxu0 %v417
        %573 = vmatprep.subr.mxu0 0.0
        %574 = vmatpush1.xpose.msra.mxu0 %v418
        %575 = vmatprep.subr.mxu0 0.0
        %576 = vmatpush1.xpose.msra.mxu0 %v419
        %577 = vmatprep.subr.mxu0 0.0
        %578 = vmatpush1.xpose.msra.mxu0 %v420
        %579 = vmatprep.subr.mxu0 0.0
        %580 = vmatpush1.xpose.msra.mxu0 %v421
        %581 = vmatprep.subr.mxu0 0.0
        %582 = vmatpush1.xpose.msra.mxu0 %v422
        %583 = vmatprep.mubr.f32.mxu0 0.0
        %584 = vmatmul.mubr.f32.gmra.mrb[0].mxu0 %v359
        %v585 = vpop.f32.mrb[0].mxu0
        %v586 = vadd.f32 0.0, %v585
        %v587 = vpop.f32.mrb[0].mxu0
        %v588 = vadd.f32 0.0, %v587
        %589 = vmatprep.mubr.f32.mxu0 0.0
        %590 = vmatmul.mubr.f32.gmra.mrb[0].mxu0 %v360
        %v591 = vpop.f32.mrb[0].mxu0
        %v592 = vadd.f32 0.0, %v591
        %v593 = vpop.f32.mrb[0].mxu0
        %v594 = vadd.f32 0.0, %v593
        %595 = vmatprep.mubr.f32.mxu0 0.0
        %596 = vmatmul.mubr.f32.gmra.mrb[0].mxu0 %v361
        %v597 = vpop.f32.mrb[0].mxu0
        %v598 = vadd.f32 0.0, %v597
        %v599 = vpop.f32.mrb[0].mxu0
        %v600 = vadd.f32 0.0, %v599
        %601 = vmatprep.mubr.f32.mxu0 0.0
        %602 = vmatmul.mubr.f32.gmra.mrb[0].mxu0 %v362
        %v603 = vpop.f32.mrb[0].mxu0
        %v604 = vadd.f32 0.0, %v603
        %v605 = vpop.f32.mrb[0].mxu0
        %v606 = vadd.f32 0.0, %v605
        %607 = vmatprep.mubr.f32.mxu0 0.0
        %608 = vmatmul.mubr.f32.gmra.mrb[0].mxu0 %v363
        %v609 = vpop.f32.mrb[0].mxu0
        %v610 = vadd.f32 0.0, %v609
        %v611 = vpop.f32.mrb[0].mxu0
        %v612 = vadd.f32 0.0, %v611
        %613 = vmatprep.mubr.f32.mxu0 0.0
        %614 = vmatmul.mubr.f32.gmra.mrb[0].mxu0 %v364
        %v615 = vpop.f32.mrb[0].mxu0
        %v616 = vadd.f32 0.0, %v615
        %v617 = vpop.f32.mrb[0].mxu0
        %v618 = vadd.f32 0.0, %v617
        %619 = vmatprep.mubr.f32.mxu0 0.0
        %620 = vmatmul.mubr.f32.gmra.mrb[0].mxu0 %v365
        %v621 = vpop.f32.mrb[0].mxu0
        %v622 = vadd.f32 0.0, %v621
        %v623 = vpop.f32.mrb[0].mxu0
        %v624 = vadd.f32 0.0, %v623
        %625 = vmatprep.mubr.f32.mxu0 0.0
        %626 = vmatmul.mubr.f32.gmra.mrb[0].mxu0 %v366
        %v627 = vpop.f32.mrb[0].mxu0
        %v628 = vadd.f32 0.0, %v627
        %v629 = vpop.f32.mrb[0].mxu0
        %v630 = vadd.f32 0.0, %v629
        %631 = vmatprep.mubr.f32.mxu0 0.0
        %632 = vmatmul.mubr.f32.gmra.mrb[0].mxu0 %v367
        %v633 = vpop.f32.mrb[0].mxu0
        %v634 = vadd.f32 0.0, %v633
        %v635 = vpop.f32.mrb[0].mxu0
        %v636 = vadd.f32 0.0, %v635
        %637 = vmatprep.mubr.f32.mxu0 0.0
        %638 = vmatmul.mubr.f32.gmra.mrb[0].mxu0 %v368
        %v639 = vpop.f32.mrb[0].mxu0
        %v640 = vadd.f32 0.0, %v639
        %v641 = vpop.f32.mrb[0].mxu0
        %v642 = vadd.f32 0.0, %v641
        %643 = vmatprep.mubr.f32.mxu0 0.0
        %644 = vmatmul.mubr.f32.gmra.mrb[0].mxu0 %v369
        %v645 = vpop.f32.mrb[0].mxu0
        %v646 = vadd.f32 0.0, %v645
        %v647 = vpop.f32.mrb[0].mxu0
        %v648 = vadd.f32 0.0, %v647
        %649 = vmatprep.mubr.f32.mxu0 0.0
        %650 = vmatmul.mubr.f32.gmra.mrb[0].mxu0 %v370
        %v651 = vpop.f32.mrb[0].mxu0
        %v652 = vadd.f32 0.0, %v651
        %v653 = vpop.f32.mrb[0].mxu0
        %v654 = vadd.f32 0.0, %v653
        %655 = vmatprep.mubr.f32.mxu0 0.0
        %656 = vmatmul.mubr.f32.gmra.mrb[0].mxu0 %v371
        %v657 = vpop.f32.mrb[0].mxu0
        %v658 = vadd.f32 0.0, %v657
        %v659 = vpop.f32.mrb[0].mxu0
        %v660 = vadd.f32 0.0, %v659
        %661 = vmatprep.mubr.f32.mxu0 0.0
        %662 = vmatmul.mubr.f32.gmra.mrb[0].mxu0 %v372
        %v663 = vpop.f32.mrb[0].mxu0
        %v664 = vadd.f32 0.0, %v663
        %v665 = vpop.f32.mrb[0].mxu0
        %v666 = vadd.f32 0.0, %v665
        %667 = vmatprep.mubr.f32.mxu0 0.0
        %668 = vmatmul.mubr.f32.gmra.mrb[0].mxu0 %v373
        %v669 = vpop.f32.mrb[0].mxu0
        %v670 = vadd.f32 0.0, %v669
        %v671 = vpop.f32.mrb[0].mxu0
        %v672 = vadd.f32 0.0, %v671
        %673 = vmatprep.mubr.f32.mxu0 0.0
        %674 = vmatmul.mubr.f32.gmra.mrb[0].mxu0 %v374
        %v675 = vpop.f32.mrb[0].mxu0
        %v676 = vadd.f32 0.0, %v675
        %v677 = vpop.f32.mrb[0].mxu0
        %v678 = vadd.f32 0.0, %v677
        %679 = vmatprep.mubr.f32.mxu0 0.0
        %680 = vmatmul.mubr.f32.gmra.mrb[0].mxu0 %v375
        %v681 = vpop.f32.mrb[0].mxu0
        %v682 = vadd.f32 0.0, %v681
        %v683 = vpop.f32.mrb[0].mxu0
        %v684 = vadd.f32 0.0, %v683
        %685 = vmatprep.mubr.f32.mxu0 0.0
        %686 = vmatmul.mubr.f32.gmra.mrb[0].mxu0 %v376
        %v687 = vpop.f32.mrb[0].mxu0
        %v688 = vadd.f32 0.0, %v687
        %v689 = vpop.f32.mrb[0].mxu0
        %v690 = vadd.f32 0.0, %v689
        %691 = vmatprep.mubr.f32.mxu0 0.0
        %692 = vmatmul.mubr.f32.gmra.mrb[0].mxu0 %v377
        %v693 = vpop.f32.mrb[0].mxu0
        %v694 = vadd.f32 0.0, %v693
        %v695 = vpop.f32.mrb[0].mxu0
        %v696 = vadd.f32 0.0, %v695
        %697 = vmatprep.mubr.f32.mxu0 0.0
        %698 = vmatmul.mubr.f32.gmra.mrb[0].mxu0 %v378
        %v699 = vpop.f32.mrb[0].mxu0
        %v700 = vadd.f32 0.0, %v699
        %v701 = vpop.f32.mrb[0].mxu0
        %v702 = vadd.f32 0.0, %v701
        %703 = vmatprep.mubr.f32.mxu0 0.0
        %704 = vmatmul.mubr.f32.gmra.mrb[0].mxu0 %v379
        %v705 = vpop.f32.mrb[0].mxu0
        %v706 = vadd.f32 0.0, %v705
        %v707 = vpop.f32.mrb[0].mxu0
        %v708 = vadd.f32 0.0, %v707
        %709 = vmatprep.mubr.f32.mxu0 0.0
        %710 = vmatmul.mubr.f32.gmra.mrb[0].mxu0 %v380
        %v711 = vpop.f32.mrb[0].mxu0
        %v712 = vadd.f32 0.0, %v711
        %v713 = vpop.f32.mrb[0].mxu0
        %v714 = vadd.f32 0.0, %v713
        %715 = vmatprep.mubr.f32.mxu0 0.0
        %716 = vmatmul.mubr.f32.gmra.mrb[0].mxu0 %v381
        %v717 = vpop.f32.mrb[0].mxu0
        %v718 = vadd.f32 0.0, %v717
        %v719 = vpop.f32.mrb[0].mxu0
        %v720 = vadd.f32 0.0, %v719
        %721 = vmatprep.mubr.f32.mxu0 0.0
        %722 = vmatmul.mubr.f32.gmra.mrb[0].mxu0 %v382
        %v723 = vpop.f32.mrb[0].mxu0
        %v724 = vadd.f32 0.0, %v723
        %v725 = vpop.f32.mrb[0].mxu0
        %v726 = vadd.f32 0.0, %v725
        %727 = vmatprep.mubr.f32.mxu0 0.0
        %728 = vmatmul.mubr.f32.gmra.mrb[0].mxu0 %v383
        %v729 = vpop.f32.mrb[0].mxu0
        %v730 = vadd.f32 0.0, %v729
        %v731 = vpop.f32.mrb[0].mxu0
        %v732 = vadd.f32 0.0, %v731
        %733 = vmatprep.mubr.f32.mxu0 0.0
        %734 = vmatmul.mubr.f32.gmra.mrb[0].mxu0 %v384
        %v735 = vpop.f32.mrb[0].mxu0
        %v736 = vadd.f32 0.0, %v735
        %v737 = vpop.f32.mrb[0].mxu0
        %v738 = vadd.f32 0.0, %v737
        %739 = vmatprep.mubr.f32.mxu0 0.0
        %740 = vmatmul.mubr.f32.gmra.mrb[0].mxu0 %v385
        %v741 = vpop.f32.mrb[0].mxu0
        %v742 = vadd.f32 0.0, %v741
        %v743 = vpop.f32.mrb[0].mxu0
        %v744 = vadd.f32 0.0, %v743
        %745 = vmatprep.mubr.f32.mxu0 0.0
        %746 = vmatmul.mubr.f32.gmra.mrb[0].mxu0 %v386
        %v747 = vpop.f32.mrb[0].mxu0
        %v748 = vadd.f32 0.0, %v747
        %v749 = vpop.f32.mrb[0].mxu0
        %v750 = vadd.f32 0.0, %v749
        %751 = vmatprep.mubr.f32.mxu0 0.0
        %752 = vmatmul.mubr.f32.gmra.mrb[0].mxu0 %v387
        %v753 = vpop.f32.mrb[0].mxu0
        %v754 = vadd.f32 0.0, %v753
        %v755 = vpop.f32.mrb[0].mxu0
        %v756 = vadd.f32 0.0, %v755
        %757 = vmatprep.mubr.f32.mxu0 0.0
        %758 = vmatmul.mubr.f32.gmra.mrb[0].mxu0 %v388
        %v759 = vpop.f32.mrb[0].mxu0
        %v760 = vadd.f32 0.0, %v759
        %v761 = vpop.f32.mrb[0].mxu0
        %v762 = vadd.f32 0.0, %v761
        %763 = vmatprep.mubr.f32.mxu0 0.0
        %764 = vmatmul.mubr.f32.gmra.mrb[0].mxu0 %v389
        %v765 = vpop.f32.mrb[0].mxu0
        %v766 = vadd.f32 0.0, %v765
        %v767 = vpop.f32.mrb[0].mxu0
        %v768 = vadd.f32 0.0, %v767
        %769 = vmatprep.mubr.f32.mxu0 0.0
        %770 = vmatmul.mubr.f32.gmra.mrb[0].mxu0 %v390
        %v771 = vpop.f32.mrb[0].mxu0
        %v772 = vadd.f32 0.0, %v771
        %v773 = vpop.f32.mrb[0].mxu0
        %v774 = vadd.f32 0.0, %v773
        %775 = vdwg.mxu0
        %776 = vmatprep.subr.mxu0 0.0
        %777 = vmatpush1.xpose.msra.mxu0 %v423
        %778 = vmatprep.subr.mxu0 0.0
        %779 = vmatpush1.xpose.msra.mxu0 %v424
        %780 = vmatprep.subr.mxu0 0.0
        %781 = vmatpush1.xpose.msra.mxu0 %v425
        %782 = vmatprep.subr.mxu0 0.0
        %783 = vmatpush1.xpose.msra.mxu0 %v426
        %784 = vmatprep.subr.mxu0 0.0
        %785 = vmatpush1.xpose.msra.mxu0 %v427
        %786 = vmatprep.subr.mxu0 0.0
        %787 = vmatpush1.xpose.msra.mxu0 %v428
        %788 = vmatprep.subr.mxu0 0.0
        %789 = vmatpush1.xpose.msra.mxu0 %v429
        %790 = vmatprep.subr.mxu0 0.0
        %791 = vmatpush1.xpose.msra.mxu0 %v430
        %792 = vmatprep.subr.mxu0 0.0
        %793 = vmatpush1.xpose.msra.mxu0 %v431
        %794 = vmatprep.subr.mxu0 0.0
        %795 = vmatpush1.xpose.msra.mxu0 %v432
        %796 = vmatprep.subr.mxu0 0.0
        %797 = vmatpush1.xpose.msra.mxu0 %v433
        %798 = vmatprep.subr.mxu0 0.0
        %799 = vmatpush1.xpose.msra.mxu0 %v434
        %800 = vmatprep.subr.mxu0 0.0
        %801 = vmatpush1.xpose.msra.mxu0 %v435
        %802 = vmatprep.subr.mxu0 0.0
        %803 = vmatpush1.xpose.msra.mxu0 %v436
        %804 = vmatprep.subr.mxu0 0.0
        %805 = vmatpush1.xpose.msra.mxu0 %v437
        %806 = vmatprep.subr.mxu0 0.0
        %807 = vmatpush1.xpose.msra.mxu0 %v438
        %808 = vmatprep.subr.mxu0 0.0
        %809 = vmatpush1.xpose.msra.mxu0 %v439
        %810 = vmatprep.subr.mxu0 0.0
        %811 = vmatpush1.xpose.msra.mxu0 %v440
        %812 = vmatprep.subr.mxu0 0.0
        %813 = vmatpush1.xpose.msra.mxu0 %v441
        %814 = vmatprep.subr.mxu0 0.0
        %815 = vmatpush1.xpose.msra.mxu0 %v442
        %816 = vmatprep.subr.mxu0 0.0
        %817 = vmatpush1.xpose.msra.mxu0 %v443
        %818 = vmatprep.subr.mxu0 0.0
        %819 = vmatpush1.xpose.msra.mxu0 %v444
        %820 = vmatprep.subr.mxu0 0.0
        %821 = vmatpush1.xpose.msra.mxu0 %v445
        %822 = vmatprep.subr.mxu0 0.0
        %823 = vmatpush1.xpose.msra.mxu0 %v446
        %824 = vmatprep.subr.mxu0 0.0
        %825 = vmatpush1.xpose.msra.mxu0 %v447
        %826 = vmatprep.subr.mxu0 0.0
        %827 = vmatpush1.xpose.msra.mxu0 %v448
        %828 = vmatprep.subr.mxu0 0.0
        %829 = vmatpush1.xpose.msra.mxu0 %v449
        %830 = vmatprep.subr.mxu0 0.0
        %831 = vmatpush1.xpose.msra.mxu0 %v450
        %832 = vmatprep.subr.mxu0 0.0
        %833 = vmatpush1.xpose.msra.mxu0 %v451
        %834 = vmatprep.subr.mxu0 0.0
        %835 = vmatpush1.xpose.msra.mxu0 %v452
        %836 = vmatprep.subr.mxu0 0.0
        %837 = vmatpush1.xpose.msra.mxu0 %v453
        %838 = vmatprep.subr.mxu0 0.0
        %839 = vmatpush1.xpose.msra.mxu0 %v454
        %840 = vmatprep.mubr.f32.mxu0 0.0
        %841 = vmatmul.mubr.f32.gmra.mrb[0].mxu0 %v359
        %v842 = vpop.f32.mrb[0].mxu0
        %v843 = vadd.f32 0.0, %v842
        %v844 = vpop.f32.mrb[0].mxu0
        %v845 = vadd.f32 0.0, %v844
        %846 = vmatprep.mubr.f32.mxu0 0.0
        %847 = vmatmul.mubr.f32.gmra.mrb[0].mxu0 %v360
        %v848 = vpop.f32.mrb[0].mxu0
        %v849 = vadd.f32 0.0, %v848
        %v850 = vpop.f32.mrb[0].mxu0
        %v851 = vadd.f32 0.0, %v850
        %852 = vmatprep.mubr.f32.mxu0 0.0
        %853 = vmatmul.mubr.f32.gmra.mrb[0].mxu0 %v361
        %v854 = vpop.f32.mrb[0].mxu0
        %v855 = vadd.f32 0.0, %v854
        %v856 = vpop.f32.mrb[0].mxu0
        %v857 = vadd.f32 0.0, %v856
        %858 = vmatprep.mubr.f32.mxu0 0.0
        %859 = vmatmul.mubr.f32.gmra.mrb[0].mxu0 %v362
        %v860 = vpop.f32.mrb[0].mxu0
        %v861 = vadd.f32 0.0, %v860
        %v862 = vpop.f32.mrb[0].mxu0
        %v863 = vadd.f32 0.0, %v862
        %864 = vmatprep.mubr.f32.mxu0 0.0
        %865 = vmatmul.mubr.f32.gmra.mrb[0].mxu0 %v363
        %v866 = vpop.f32.mrb[0].mxu0
        %v867 = vadd.f32 0.0, %v866
        %v868 = vpop.f32.mrb[0].mxu0
        %v869 = vadd.f32 0.0, %v868
        %870 = vmatprep.mubr.f32.mxu0 0.0
        %871 = vmatmul.mubr.f32.gmra.mrb[0].mxu0 %v364
        %v872 = vpop.f32.mrb[0].mxu0
        %v873 = vadd.f32 0.0, %v872
        %v874 = vpop.f32.mrb[0].mxu0
        %v875 = vadd.f32 0.0, %v874
        %876 = vmatprep.mubr.f32.mxu0 0.0
        %877 = vmatmul.mubr.f32.gmra.mrb[0].mxu0 %v365
        %v878 = vpop.f32.mrb[0].mxu0
        %v879 = vadd.f32 0.0, %v878
        %v880 = vpop.f32.mrb[0].mxu0
        %v881 = vadd.f32 0.0, %v880
        %882 = vmatprep.mubr.f32.mxu0 0.0
        %883 = vmatmul.mubr.f32.gmra.mrb[0].mxu0 %v366
        %v884 = vpop.f32.mrb[0].mxu0
        %v885 = vadd.f32 0.0, %v884
        %v886 = vpop.f32.mrb[0].mxu0
        %v887 = vadd.f32 0.0, %v886
        %888 = vmatprep.mubr.f32.mxu0 0.0
        %889 = vmatmul.mubr.f32.gmra.mrb[0].mxu0 %v367
        %v890 = vpop.f32.mrb[0].mxu0
        %v891 = vadd.f32 0.0, %v890
        %v892 = vpop.f32.mrb[0].mxu0
        %v893 = vadd.f32 0.0, %v892
        %894 = vmatprep.mubr.f32.mxu0 0.0
        %895 = vmatmul.mubr.f32.gmra.mrb[0].mxu0 %v368
        %v896 = vpop.f32.mrb[0].mxu0
        %v897 = vadd.f32 0.0, %v896
        %v898 = vpop.f32.mrb[0].mxu0
        %v899 = vadd.f32 0.0, %v898
        %900 = vmatprep.mubr.f32.mxu0 0.0
        %901 = vmatmul.mubr.f32.gmra.mrb[0].mxu0 %v369
        %v902 = vpop.f32.mrb[0].mxu0
        %v903 = vadd.f32 0.0, %v902
        %v904 = vpop.f32.mrb[0].mxu0
        %v905 = vadd.f32 0.0, %v904
        %906 = vmatprep.mubr.f32.mxu0 0.0
        %907 = vmatmul.mubr.f32.gmra.mrb[0].mxu0 %v370
        %v908 = vpop.f32.mrb[0].mxu0
        %v909 = vadd.f32 0.0, %v908
        %v910 = vpop.f32.mrb[0].mxu0
        %v911 = vadd.f32 0.0, %v910
        %912 = vmatprep.mubr.f32.mxu0 0.0
        %913 = vmatmul.mubr.f32.gmra.mrb[0].mxu0 %v371
        %v914 = vpop.f32.mrb[0].mxu0
        %v915 = vadd.f32 0.0, %v914
        %v916 = vpop.f32.mrb[0].mxu0
        %v917 = vadd.f32 0.0, %v916
        %918 = vmatprep.mubr.f32.mxu0 0.0
        %919 = vmatmul.mubr.f32.gmra.mrb[0].mxu0 %v372
        %v920 = vpop.f32.mrb[0].mxu0
        %v921 = vadd.f32 0.0, %v920
        %v922 = vpop.f32.mrb[0].mxu0
        %v923 = vadd.f32 0.0, %v922
        %924 = vmatprep.mubr.f32.mxu0 0.0
        %925 = vmatmul.mubr.f32.gmra.mrb[0].mxu0 %v373
        %v926 = vpop.f32.mrb[0].mxu0
        %v927 = vadd.f32 0.0, %v926
        %v928 = vpop.f32.mrb[0].mxu0
        %v929 = vadd.f32 0.0, %v928
        %930 = vmatprep.mubr.f32.mxu0 0.0
        %931 = vmatmul.mubr.f32.gmra.mrb[0].mxu0 %v374
        %v932 = vpop.f32.mrb[0].mxu0
        %v933 = vadd.f32 0.0, %v932
        %v934 = vpop.f32.mrb[0].mxu0
        %v935 = vadd.f32 0.0, %v934
        %936 = vmatprep.mubr.f32.mxu0 0.0
        %937 = vmatmul.mubr.f32.gmra.mrb[0].mxu0 %v375
        %v938 = vpop.f32.mrb[0].mxu0
        %v939 = vadd.f32 0.0, %v938
        %v940 = vpop.f32.mrb[0].mxu0
        %v941 = vadd.f32 0.0, %v940
        %942 = vmatprep.mubr.f32.mxu0 0.0
        %943 = vmatmul.mubr.f32.gmra.mrb[0].mxu0 %v376
        %v944 = vpop.f32.mrb[0].mxu0
        %v945 = vadd.f32 0.0, %v944
        %v946 = vpop.f32.mrb[0].mxu0
        %v947 = vadd.f32 0.0, %v946
        %948 = vmatprep.mubr.f32.mxu0 0.0
        %949 = vmatmul.mubr.f32.gmra.mrb[0].mxu0 %v377
        %v950 = vpop.f32.mrb[0].mxu0
        %v951 = vadd.f32 0.0, %v950
        %v952 = vpop.f32.mrb[0].mxu0
        %v953 = vadd.f32 0.0, %v952
        %954 = vmatprep.mubr.f32.mxu0 0.0
        %955 = vmatmul.mubr.f32.gmra.mrb[0].mxu0 %v378
        %v956 = vpop.f32.mrb[0].mxu0
        %v957 = vadd.f32 0.0, %v956
        %v958 = vpop.f32.mrb[0].mxu0
        %v959 = vadd.f32 0.0, %v958
        %960 = vmatprep.mubr.f32.mxu0 0.0
        %961 = vmatmul.mubr.f32.gmra.mrb[0].mxu0 %v379
        %v962 = vpop.f32.mrb[0].mxu0
        %v963 = vadd.f32 0.0, %v962
        %v964 = vpop.f32.mrb[0].mxu0
        %v965 = vadd.f32 0.0, %v964
        %966 = vmatprep.mubr.f32.mxu0 0.0
        %967 = vmatmul.mubr.f32.gmra.mrb[0].mxu0 %v380
        %v968 = vpop.f32.mrb[0].mxu0
        %v969 = vadd.f32 0.0, %v968
        %v970 = vpop.f32.mrb[0].mxu0
        %v971 = vadd.f32 0.0, %v970
        %972 = vmatprep.mubr.f32.mxu0 0.0
        %973 = vmatmul.mubr.f32.gmra.mrb[0].mxu0 %v381
        %v974 = vpop.f32.mrb[0].mxu0
        %v975 = vadd.f32 0.0, %v974
        %v976 = vpop.f32.mrb[0].mxu0
        %v977 = vadd.f32 0.0, %v976
        %978 = vmatprep.mubr.f32.mxu0 0.0
        %979 = vmatmul.mubr.f32.gmra.mrb[0].mxu0 %v382
        %v980 = vpop.f32.mrb[0].mxu0
        %v981 = vadd.f32 0.0, %v980
        %v982 = vpop.f32.mrb[0].mxu0
        %v983 = vadd.f32 0.0, %v982
        %984 = vmatprep.mubr.f32.mxu0 0.0
        %985 = vmatmul.mubr.f32.gmra.mrb[0].mxu0 %v383
        %v986 = vpop.f32.mrb[0].mxu0
        %v987 = vadd.f32 0.0, %v986
        %v988 = vpop.f32.mrb[0].mxu0
        %v989 = vadd.f32 0.0, %v988
        %990 = vmatprep.mubr.f32.mxu0 0.0
        %991 = vmatmul.mubr.f32.gmra.mrb[0].mxu0 %v384
        %v992 = vpop.f32.mrb[0].mxu0
        %v993 = vadd.f32 0.0, %v992
        %v994 = vpop.f32.mrb[0].mxu0
        %v995 = vadd.f32 0.0, %v994
        %996 = vmatprep.mubr.f32.mxu0 0.0
        %997 = vmatmul.mubr.f32.gmra.mrb[0].mxu0 %v385
        %v998 = vpop.f32.mrb[0].mxu0
        %v999 = vadd.f32 0.0, %v998
        %v1000 = vpop.f32.mrb[0].mxu0
        %v1001 = vadd.f32 0.0, %v1000
        %1002 = vmatprep.mubr.f32.mxu0 0.0
        %1003 = vmatmul.mubr.f32.gmra.mrb[0].mxu0 %v386
        %v1004 = vpop.f32.mrb[0].mxu0
        %v1005 = vadd.f32 0.0, %v1004
        %v1006 = vpop.f32.mrb[0].mxu0
        %v1007 = vadd.f32 0.0, %v1006
        %1008 = vmatprep.mubr.f32.mxu0 0.0
        %1009 = vmatmul.mubr.f32.gmra.mrb[0].mxu0 %v387
        %v1010 = vpop.f32.mrb[0].mxu0
        %v1011 = vadd.f32 0.0, %v1010
        %v1012 = vpop.f32.mrb[0].mxu0
        %v1013 = vadd.f32 0.0, %v1012
        %1014 = vmatprep.mubr.f32.mxu0 0.0
        %1015 = vmatmul.mubr.f32.gmra.mrb[0].mxu0 %v388
        %v1016 = vpop.f32.mrb[0].mxu0
        %v1017 = vadd.f32 0.0, %v1016
        %v1018 = vpop.f32.mrb[0].mxu0
        %v1019 = vadd.f32 0.0, %v1018
        %1020 = vmatprep.mubr.f32.mxu0 0.0
        %1021 = vmatmul.mubr.f32.gmra.mrb[0].mxu0 %v389
        %v1022 = vpop.f32.mrb[0].mxu0
        %v1023 = vadd.f32 0.0, %v1022
        %v1024 = vpop.f32.mrb[0].mxu0
        %v1025 = vadd.f32 0.0, %v1024
        %1026 = vmatprep.mubr.f32.mxu0 0.0
        %1027 = vmatmul.mubr.f32.gmra.mrb[0].mxu0 %v390
        %v1028 = vpop.f32.mrb[0].mxu0
        %v1029 = vadd.f32 0.0, %v1028
        %v1030 = vpop.f32.mrb[0].mxu0
        %v1031 = vadd.f32 0.0, %v1030
        %1032 = vdwg.mxu0
        %1033 = vmatprep.subr.mxu0 0.0
        %1034 = vmatpush1.xpose.msra.mxu0 %v455
        %1035 = vmatprep.subr.mxu0 0.0
        %1036 = vmatpush1.xpose.msra.mxu0 %v456
        %1037 = vmatprep.subr.mxu0 0.0
        %1038 = vmatpush1.xpose.msra.mxu0 %v457
        %1039 = vmatprep.subr.mxu0 0.0
        %1040 = vmatpush1.xpose.msra.mxu0 %v458
        %1041 = vmatprep.subr.mxu0 0.0
        %1042 = vmatpush1.xpose.msra.mxu0 %v459
        %1043 = vmatprep.subr.mxu0 0.0
        %1044 = vmatpush1.xpose.msra.mxu0 %v460
        %1045 = vmatprep.subr.mxu0 0.0
        %1046 = vmatpush1.xpose.msra.mxu0 %v461
        %1047 = vmatprep.subr.mxu0 0.0
        %1048 = vmatpush1.xpose.msra.mxu0 %v462
        %1049 = vmatprep.subr.mxu0 0.0
        %1050 = vmatpush1.xpose.msra.mxu0 %v463
        %1051 = vmatprep.subr.mxu0 0.0
        %1052 = vmatpush1.xpose.msra.mxu0 %v464
        %1053 = vmatprep.subr.mxu0 0.0
        %1054 = vmatpush1.xpose.msra.mxu0 %v465
        %1055 = vmatprep.subr.mxu0 0.0
        %1056 = vmatpush1.xpose.msra.mxu0 %v466
        %1057 = vmatprep.subr.mxu0 0.0
        %1058 = vmatpush1.xpose.msra.mxu0 %v467
        %1059 = vmatprep.subr.mxu0 0.0
        %1060 = vmatpush1.xpose.msra.mxu0 %v468
        %1061 = vmatprep.subr.mxu0 0.0
        %1062 = vmatpush1.xpose.msra.mxu0 %v469
        %1063 = vmatprep.subr.mxu0 0.0
        %1064 = vmatpush1.xpose.msra.mxu0 %v470
        %1065 = vmatprep.subr.mxu0 0.0
        %1066 = vmatpush1.xpose.msra.mxu0 %v471
        %1067 = vmatprep.subr.mxu0 0.0
        %1068 = vmatpush1.xpose.msra.mxu0 %v472
        %1069 = vmatprep.subr.mxu0 0.0
        %1070 = vmatpush1.xpose.msra.mxu0 %v473
        %1071 = vmatprep.subr.mxu0 0.0
        %1072 = vmatpush1.xpose.msra.mxu0 %v474
        %1073 = vmatprep.subr.mxu0 0.0
        %1074 = vmatpush1.xpose.msra.mxu0 %v475
        %1075 = vmatprep.subr.mxu0 0.0
        %1076 = vmatpush1.xpose.msra.mxu0 %v476
        %1077 = vmatprep.subr.mxu0 0.0
        %1078 = vmatpush1.xpose.msra.mxu0 %v477
        %1079 = vmatprep.subr.mxu0 0.0
        %1080 = vmatpush1.xpose.msra.mxu0 %v478
        %1081 = vmatprep.subr.mxu0 0.0
        %1082 = vmatpush1.xpose.msra.mxu0 %v479
        %1083 = vmatprep.subr.mxu0 0.0
        %1084 = vmatpush1.xpose.msra.mxu0 %v480
        %1085 = vmatprep.subr.mxu0 0.0
        %1086 = vmatpush1.xpose.msra.mxu0 %v481
        %1087 = vmatprep.subr.mxu0 0.0
        %1088 = vmatpush1.xpose.msra.mxu0 %v482
        %1089 = vmatprep.subr.mxu0 0.0
        %1090 = vmatpush1.xpose.msra.mxu0 %v483
        %1091 = vmatprep.subr.mxu0 0.0
        %1092 = vmatpush1.xpose.msra.mxu0 %v484
        %1093 = vmatprep.subr.mxu0 0.0
        %1094 = vmatpush1.xpose.msra.mxu0 %v485
        %1095 = vmatprep.subr.mxu0 0.0
        %1096 = vmatpush1.xpose.msra.mxu0 %v486
        %1097 = vmatprep.mubr.f32.mxu0 0.0
        %1098 = vmatmul.mubr.f32.gmra.mrb[0].mxu0 %v359
        %v1099 = vpop.f32.mrb[0].mxu0
        %v1100 = vadd.f32 0.0, %v1099
        %v1101 = vpop.f32.mrb[0].mxu0
        %v1102 = vadd.f32 0.0, %v1101
        %1103 = vmatprep.mubr.f32.mxu0 0.0
        %1104 = vmatmul.mubr.f32.gmra.mrb[0].mxu0 %v360
        %v1105 = vpop.f32.mrb[0].mxu0
        %v1106 = vadd.f32 0.0, %v1105
        %v1107 = vpop.f32.mrb[0].mxu0
        %v1108 = vadd.f32 0.0, %v1107
        %1109 = vmatprep.mubr.f32.mxu0 0.0
        %1110 = vmatmul.mubr.f32.gmra.mrb[0].mxu0 %v361
        %v1111 = vpop.f32.mrb[0].mxu0
        %v1112 = vadd.f32 0.0, %v1111
        %v1113 = vpop.f32.mrb[0].mxu0
        %v1114 = vadd.f32 0.0, %v1113
        %1115 = vmatprep.mubr.f32.mxu0 0.0
        %1116 = vmatmul.mubr.f32.gmra.mrb[0].mxu0 %v362
        %v1117 = vpop.f32.mrb[0].mxu0
        %v1118 = vadd.f32 0.0, %v1117
        %v1119 = vpop.f32.mrb[0].mxu0
        %v1120 = vadd.f32 0.0, %v1119
        %1121 = vmatprep.mubr.f32.mxu0 0.0
        %1122 = vmatmul.mubr.f32.gmra.mrb[0].mxu0 %v363
        %v1123 = vpop.f32.mrb[0].mxu0
        %v1124 = vadd.f32 0.0, %v1123
        %v1125 = vpop.f32.mrb[0].mxu0
        %v1126 = vadd.f32 0.0, %v1125
        %1127 = vmatprep.mubr.f32.mxu0 0.0
        %1128 = vmatmul.mubr.f32.gmra.mrb[0].mxu0 %v364
        %v1129 = vpop.f32.mrb[0].mxu0
        %v1130 = vadd.f32 0.0, %v1129
        %v1131 = vpop.f32.mrb[0].mxu0
        %v1132 = vadd.f32 0.0, %v1131
        %1133 = vmatprep.mubr.f32.mxu0 0.0
        %1134 = vmatmul.mubr.f32.gmra.mrb[0].mxu0 %v365
        %v1135 = vpop.f32.mrb[0].mxu0
        %v1136 = vadd.f32 0.0, %v1135
        %v1137 = vpop.f32.mrb[0].mxu0
        %v1138 = vadd.f32 0.0, %v1137
        %1139 = vmatprep.mubr.f32.mxu0 0.0
        %1140 = vmatmul.mubr.f32.gmra.mrb[0].mxu0 %v366
        %v1141 = vpop.f32.mrb[0].mxu0
        %v1142 = vadd.f32 0.0, %v1141
        %v1143 = vpop.f32.mrb[0].mxu0
        %v1144 = vadd.f32 0.0, %v1143
        %1145 = vmatprep.mubr.f32.mxu0 0.0
        %1146 = vmatmul.mubr.f32.gmra.mrb[0].mxu0 %v367
        %v1147 = vpop.f32.mrb[0].mxu0
        %v1148 = vadd.f32 0.0, %v1147
        %v1149 = vpop.f32.mrb[0].mxu0
        %v1150 = vadd.f32 0.0, %v1149
        %1151 = vmatprep.mubr.f32.mxu0 0.0
        %1152 = vmatmul.mubr.f32.gmra.mrb[0].mxu0 %v368
        %v1153 = vpop.f32.mrb[0].mxu0
        %v1154 = vadd.f32 0.0, %v1153
        %v1155 = vpop.f32.mrb[0].mxu0
        %v1156 = vadd.f32 0.0, %v1155
        %1157 = vmatprep.mubr.f32.mxu0 0.0
        %1158 = vmatmul.mubr.f32.gmra.mrb[0].mxu0 %v369
        %v1159 = vpop.f32.mrb[0].mxu0
        %v1160 = vadd.f32 0.0, %v1159
        %v1161 = vpop.f32.mrb[0].mxu0
        %v1162 = vadd.f32 0.0, %v1161
        %1163 = vmatprep.mubr.f32.mxu0 0.0
        %1164 = vmatmul.mubr.f32.gmra.mrb[0].mxu0 %v370
        %v1165 = vpop.f32.mrb[0].mxu0
        %v1166 = vadd.f32 0.0, %v1165
        %v1167 = vpop.f32.mrb[0].mxu0
        %v1168 = vadd.f32 0.0, %v1167
        %1169 = vmatprep.mubr.f32.mxu0 0.0
        %1170 = vmatmul.mubr.f32.gmra.mrb[0].mxu0 %v371
        %v1171 = vpop.f32.mrb[0].mxu0
        %v1172 = vadd.f32 0.0, %v1171
        %v1173 = vpop.f32.mrb[0].mxu0
        %v1174 = vadd.f32 0.0, %v1173
        %1175 = vmatprep.mubr.f32.mxu0 0.0
        %1176 = vmatmul.mubr.f32.gmra.mrb[0].mxu0 %v372
        %v1177 = vpop.f32.mrb[0].mxu0
        %v1178 = vadd.f32 0.0, %v1177
        %v1179 = vpop.f32.mrb[0].mxu0
        %v1180 = vadd.f32 0.0, %v1179
        %1181 = vmatprep.mubr.f32.mxu0 0.0
        %1182 = vmatmul.mubr.f32.gmra.mrb[0].mxu0 %v373
        %v1183 = vpop.f32.mrb[0].mxu0
        %v1184 = vadd.f32 0.0, %v1183
        %v1185 = vpop.f32.mrb[0].mxu0
        %v1186 = vadd.f32 0.0, %v1185
        %1187 = vmatprep.mubr.f32.mxu0 0.0
        %1188 = vmatmul.mubr.f32.gmra.mrb[0].mxu0 %v374
        %v1189 = vpop.f32.mrb[0].mxu0
        %v1190 = vadd.f32 0.0, %v1189
        %v1191 = vpop.f32.mrb[0].mxu0
        %v1192 = vadd.f32 0.0, %v1191
        %1193 = vmatprep.mubr.f32.mxu0 0.0
        %1194 = vmatmul.mubr.f32.gmra.mrb[0].mxu0 %v375
        %v1195 = vpop.f32.mrb[0].mxu0
        %v1196 = vadd.f32 0.0, %v1195
        %v1197 = vpop.f32.mrb[0].mxu0
        %v1198 = vadd.f32 0.0, %v1197
        %1199 = vmatprep.mubr.f32.mxu0 0.0
        %1200 = vmatmul.mubr.f32.gmra.mrb[0].mxu0 %v376
        %v1201 = vpop.f32.mrb[0].mxu0
        %v1202 = vadd.f32 0.0, %v1201
        %v1203 = vpop.f32.mrb[0].mxu0
        %v1204 = vadd.f32 0.0, %v1203
        %1205 = vmatprep.mubr.f32.mxu0 0.0
        %1206 = vmatmul.mubr.f32.gmra.mrb[0].mxu0 %v377
        %v1207 = vpop.f32.mrb[0].mxu0
        %v1208 = vadd.f32 0.0, %v1207
        %v1209 = vpop.f32.mrb[0].mxu0
        %v1210 = vadd.f32 0.0, %v1209
        %1211 = vmatprep.mubr.f32.mxu0 0.0
        %1212 = vmatmul.mubr.f32.gmra.mrb[0].mxu0 %v378
        %v1213 = vpop.f32.mrb[0].mxu0
        %v1214 = vadd.f32 0.0, %v1213
        %v1215 = vpop.f32.mrb[0].mxu0
        %v1216 = vadd.f32 0.0, %v1215
        %1217 = vmatprep.mubr.f32.mxu0 0.0
        %1218 = vmatmul.mubr.f32.gmra.mrb[0].mxu0 %v379
        %v1219 = vpop.f32.mrb[0].mxu0
        %v1220 = vadd.f32 0.0, %v1219
        %v1221 = vpop.f32.mrb[0].mxu0
        %v1222 = vadd.f32 0.0, %v1221
        %1223 = vmatprep.mubr.f32.mxu0 0.0
        %1224 = vmatmul.mubr.f32.gmra.mrb[0].mxu0 %v380
        %v1225 = vpop.f32.mrb[0].mxu0
        %v1226 = vadd.f32 0.0, %v1225
        %v1227 = vpop.f32.mrb[0].mxu0
        %v1228 = vadd.f32 0.0, %v1227
        %1229 = vmatprep.mubr.f32.mxu0 0.0
        %1230 = vmatmul.mubr.f32.gmra.mrb[0].mxu0 %v381
        %v1231 = vpop.f32.mrb[0].mxu0
        %v1232 = vadd.f32 0.0, %v1231
        %v1233 = vpop.f32.mrb[0].mxu0
        %v1234 = vadd.f32 0.0, %v1233
        %1235 = vmatprep.mubr.f32.mxu0 0.0
        %1236 = vmatmul.mubr.f32.gmra.mrb[0].mxu0 %v382
        %v1237 = vpop.f32.mrb[0].mxu0
        %v1238 = vadd.f32 0.0, %v1237
        %v1239 = vpop.f32.mrb[0].mxu0
        %v1240 = vadd.f32 0.0, %v1239
        %1241 = vmatprep.mubr.f32.mxu0 0.0
        %1242 = vmatmul.mubr.f32.gmra.mrb[0].mxu0 %v383
        %v1243 = vpop.f32.mrb[0].mxu0
        %v1244 = vadd.f32 0.0, %v1243
        %v1245 = vpop.f32.mrb[0].mxu0
        %v1246 = vadd.f32 0.0, %v1245
        %1247 = vmatprep.mubr.f32.mxu0 0.0
        %1248 = vmatmul.mubr.f32.gmra.mrb[0].mxu0 %v384
        %v1249 = vpop.f32.mrb[0].mxu0
        %v1250 = vadd.f32 0.0, %v1249
        %v1251 = vpop.f32.mrb[0].mxu0
        %v1252 = vadd.f32 0.0, %v1251
        %1253 = vmatprep.mubr.f32.mxu0 0.0
        %1254 = vmatmul.mubr.f32.gmra.mrb[0].mxu0 %v385
        %v1255 = vpop.f32.mrb[0].mxu0
        %v1256 = vadd.f32 0.0, %v1255
        %v1257 = vpop.f32.mrb[0].mxu0
        %v1258 = vadd.f32 0.0, %v1257
        %1259 = vmatprep.mubr.f32.mxu0 0.0
        %1260 = vmatmul.mubr.f32.gmra.mrb[0].mxu0 %v386
        %v1261 = vpop.f32.mrb[0].mxu0
        %v1262 = vadd.f32 0.0, %v1261
        %v1263 = vpop.f32.mrb[0].mxu0
        %v1264 = vadd.f32 0.0, %v1263
        %1265 = vmatprep.mubr.f32.mxu0 0.0
        %1266 = vmatmul.mubr.f32.gmra.mrb[0].mxu0 %v387
        %v1267 = vpop.f32.mrb[0].mxu0
        %v1268 = vadd.f32 0.0, %v1267
        %v1269 = vpop.f32.mrb[0].mxu0
        %v1270 = vadd.f32 0.0, %v1269
        %1271 = vmatprep.mubr.f32.mxu0 0.0
        %1272 = vmatmul.mubr.f32.gmra.mrb[0].mxu0 %v388
        %v1273 = vpop.f32.mrb[0].mxu0
        %v1274 = vadd.f32 0.0, %v1273
        %v1275 = vpop.f32.mrb[0].mxu0
        %v1276 = vadd.f32 0.0, %v1275
        %1277 = vmatprep.mubr.f32.mxu0 0.0
        %1278 = vmatmul.mubr.f32.gmra.mrb[0].mxu0 %v389
        %v1279 = vpop.f32.mrb[0].mxu0
        %v1280 = vadd.f32 0.0, %v1279
        %v1281 = vpop.f32.mrb[0].mxu0
        %v1282 = vadd.f32 0.0, %v1281
        %1283 = vmatprep.mubr.f32.mxu0 0.0
        %1284 = vmatmul.mubr.f32.gmra.mrb[0].mxu0 %v390
        %v1285 = vpop.f32.mrb[0].mxu0
        %v1286 = vadd.f32 0.0, %v1285
        %v1287 = vpop.f32.mrb[0].mxu0
        %v1288 = vadd.f32 0.0, %v1287
        %1289 = vdwg.mxu0
        %1290 = vmatprep.subr.mxu0 0.0
        %1291 = vmatpush1.xpose.msra.mxu0 %v487
        %1292 = vmatprep.subr.mxu0 0.0
        %1293 = vmatpush1.xpose.msra.mxu0 %v488
        %1294 = vmatprep.subr.mxu0 0.0
        %1295 = vmatpush1.xpose.msra.mxu0 %v489
        %1296 = vmatprep.subr.mxu0 0.0
        %1297 = vmatpush1.xpose.msra.mxu0 %v490
        %1298 = vmatprep.subr.mxu0 0.0
        %1299 = vmatpush1.xpose.msra.mxu0 %v491
        %1300 = vmatprep.subr.mxu0 0.0
        %1301 = vmatpush1.xpose.msra.mxu0 %v492
        %1302 = vmatprep.subr.mxu0 0.0
        %1303 = vmatpush1.xpose.msra.mxu0 %v493
        %1304 = vmatprep.subr.mxu0 0.0
        %1305 = vmatpush1.xpose.msra.mxu0 %v494
        %1306 = vmatprep.subr.mxu0 0.0
        %1307 = vmatpush1.xpose.msra.mxu0 %v495
        %1308 = vmatprep.subr.mxu0 0.0
        %1309 = vmatpush1.xpose.msra.mxu0 %v496
        %1310 = vmatprep.subr.mxu0 0.0
        %1311 = vmatpush1.xpose.msra.mxu0 %v497
        %1312 = vmatprep.subr.mxu0 0.0
        %1313 = vmatpush1.xpose.msra.mxu0 %v498
        %1314 = vmatprep.subr.mxu0 0.0
        %1315 = vmatpush1.xpose.msra.mxu0 %v499
        %1316 = vmatprep.subr.mxu0 0.0
        %1317 = vmatpush1.xpose.msra.mxu0 %v500
        %1318 = vmatprep.subr.mxu0 0.0
        %1319 = vmatpush1.xpose.msra.mxu0 %v501
        %1320 = vmatprep.subr.mxu0 0.0
        %1321 = vmatpush1.xpose.msra.mxu0 %v502
        %1322 = vmatprep.subr.mxu0 0.0
        %1323 = vmatpush1.xpose.msra.mxu0 %v503
        %1324 = vmatprep.subr.mxu0 0.0
        %1325 = vmatpush1.xpose.msra.mxu0 %v504
        %1326 = vmatprep.subr.mxu0 0.0
        %1327 = vmatpush1.xpose.msra.mxu0 %v505
        %1328 = vmatprep.subr.mxu0 0.0
        %1329 = vmatpush1.xpose.msra.mxu0 %v506
        %1330 = vmatprep.subr.mxu0 0.0
        %1331 = vmatpush1.xpose.msra.mxu0 %v507
        %1332 = vmatprep.subr.mxu0 0.0
        %1333 = vmatpush1.xpose.msra.mxu0 %v508
        %1334 = vmatprep.subr.mxu0 0.0
        %1335 = vmatpush1.xpose.msra.mxu0 %v509
        %1336 = vmatprep.subr.mxu0 0.0
        %1337 = vmatpush1.xpose.msra.mxu0 %v510
        %1338 = vmatprep.subr.mxu0 0.0
        %1339 = vmatpush1.xpose.msra.mxu0 %v511
        %1340 = vmatprep.subr.mxu0 0.0
        %1341 = vmatpush1.xpose.msra.mxu0 %v512
        %1342 = vmatprep.subr.mxu0 0.0
        %1343 = vmatpush1.xpose.msra.mxu0 %v513
        %1344 = vmatprep.subr.mxu0 0.0
        %1345 = vmatpush1.xpose.msra.mxu0 %v514
        %1346 = vmatprep.subr.mxu0 0.0
        %1347 = vmatpush1.xpose.msra.mxu0 %v515
        %1348 = vmatprep.subr.mxu0 0.0
        %1349 = vmatpush1.xpose.msra.mxu0 %v516
        %1350 = vmatprep.subr.mxu0 0.0
        %1351 = vmatpush1.xpose.msra.mxu0 %v517
        %1352 = vmatprep.subr.mxu0 0.0
        %1353 = vmatpush1.xpose.msra.mxu0 %v518
        %1354 = vmatprep.mubr.f32.mxu0 0.0
        %1355 = vmatmul.mubr.f32.gmra.mrb[0].mxu0 %v359
        %v1356 = vpop.f32.mrb[0].mxu0
        %v1357 = vadd.f32 0.0, %v1356
        %v1358 = vpop.f32.mrb[0].mxu0
        %v1359 = vadd.f32 0.0, %v1358
        %1360 = vmatprep.mubr.f32.mxu0 0.0
        %1361 = vmatmul.mubr.f32.gmra.mrb[0].mxu0 %v360
        %v1362 = vpop.f32.mrb[0].mxu0
        %v1363 = vadd.f32 0.0, %v1362
        %v1364 = vpop.f32.mrb[0].mxu0
        %v1365 = vadd.f32 0.0, %v1364
        %1366 = vmatprep.mubr.f32.mxu0 0.0
        %1367 = vmatmul.mubr.f32.gmra.mrb[0].mxu0 %v361
        %v1368 = vpop.f32.mrb[0].mxu0
        %v1369 = vadd.f32 0.0, %v1368
        %v1370 = vpop.f32.mrb[0].mxu0
        %v1371 = vadd.f32 0.0, %v1370
        %1372 = vmatprep.mubr.f32.mxu0 0.0
        %1373 = vmatmul.mubr.f32.gmra.mrb[0].mxu0 %v362
        %v1374 = vpop.f32.mrb[0].mxu0
        %v1375 = vadd.f32 0.0, %v1374
        %v1376 = vpop.f32.mrb[0].mxu0
        %v1377 = vadd.f32 0.0, %v1376
        %1378 = vmatprep.mubr.f32.mxu0 0.0
        %1379 = vmatmul.mubr.f32.gmra.mrb[0].mxu0 %v363
        %v1380 = vpop.f32.mrb[0].mxu0
        %v1381 = vadd.f32 0.0, %v1380
        %v1382 = vpop.f32.mrb[0].mxu0
        %v1383 = vadd.f32 0.0, %v1382
        %1384 = vmatprep.mubr.f32.mxu0 0.0
        %1385 = vmatmul.mubr.f32.gmra.mrb[0].mxu0 %v364
        %v1386 = vpop.f32.mrb[0].mxu0
        %v1387 = vadd.f32 0.0, %v1386
        %v1388 = vpop.f32.mrb[0].mxu0
        %v1389 = vadd.f32 0.0, %v1388
        %1390 = vmatprep.mubr.f32.mxu0 0.0
        %1391 = vmatmul.mubr.f32.gmra.mrb[0].mxu0 %v365
        %v1392 = vpop.f32.mrb[0].mxu0
        %v1393 = vadd.f32 0.0, %v1392
        %v1394 = vpop.f32.mrb[0].mxu0
        %v1395 = vadd.f32 0.0, %v1394
        %1396 = vmatprep.mubr.f32.mxu0 0.0
        %1397 = vmatmul.mubr.f32.gmra.mrb[0].mxu0 %v366
        %v1398 = vpop.f32.mrb[0].mxu0
        %v1399 = vadd.f32 0.0, %v1398
        %v1400 = vpop.f32.mrb[0].mxu0
        %v1401 = vadd.f32 0.0, %v1400
        %1402 = vmatprep.mubr.f32.mxu0 0.0
        %1403 = vmatmul.mubr.f32.gmra.mrb[0].mxu0 %v367
        %v1404 = vpop.f32.mrb[0].mxu0
        %v1405 = vadd.f32 0.0, %v1404
        %v1406 = vpop.f32.mrb[0].mxu0
        %v1407 = vadd.f32 0.0, %v1406
        %1408 = vmatprep.mubr.f32.mxu0 0.0
        %1409 = vmatmul.mubr.f32.gmra.mrb[0].mxu0 %v368
        %v1410 = vpop.f32.mrb[0].mxu0
        %v1411 = vadd.f32 0.0, %v1410
        %v1412 = vpop.f32.mrb[0].mxu0
        %v1413 = vadd.f32 0.0, %v1412
        %1414 = vmatprep.mubr.f32.mxu0 0.0
        %1415 = vmatmul.mubr.f32.gmra.mrb[0].mxu0 %v369
        %v1416 = vpop.f32.mrb[0].mxu0
        %v1417 = vadd.f32 0.0, %v1416
        %v1418 = vpop.f32.mrb[0].mxu0
        %v1419 = vadd.f32 0.0, %v1418
        %1420 = vmatprep.mubr.f32.mxu0 0.0
        %1421 = vmatmul.mubr.f32.gmra.mrb[0].mxu0 %v370
        %v1422 = vpop.f32.mrb[0].mxu0
        %v1423 = vadd.f32 0.0, %v1422
        %v1424 = vpop.f32.mrb[0].mxu0
        %v1425 = vadd.f32 0.0, %v1424
        %1426 = vmatprep.mubr.f32.mxu0 0.0
        %1427 = vmatmul.mubr.f32.gmra.mrb[0].mxu0 %v371
        %v1428 = vpop.f32.mrb[0].mxu0
        %v1429 = vadd.f32 0.0, %v1428
        %v1430 = vpop.f32.mrb[0].mxu0
        %v1431 = vadd.f32 0.0, %v1430
        %1432 = vmatprep.mubr.f32.mxu0 0.0
        %1433 = vmatmul.mubr.f32.gmra.mrb[0].mxu0 %v372
        %v1434 = vpop.f32.mrb[0].mxu0
        %v1435 = vadd.f32 0.0, %v1434
        %v1436 = vpop.f32.mrb[0].mxu0
        %v1437 = vadd.f32 0.0, %v1436
        %1438 = vmatprep.mubr.f32.mxu0 0.0
        %1439 = vmatmul.mubr.f32.gmra.mrb[0].mxu0 %v373
        %v1440 = vpop.f32.mrb[0].mxu0
        %v1441 = vadd.f32 0.0, %v1440
        %v1442 = vpop.f32.mrb[0].mxu0
        %v1443 = vadd.f32 0.0, %v1442
        %1444 = vmatprep.mubr.f32.mxu0 0.0
        %1445 = vmatmul.mubr.f32.gmra.mrb[0].mxu0 %v374
        %v1446 = vpop.f32.mrb[0].mxu0
        %v1447 = vadd.f32 0.0, %v1446
        %v1448 = vpop.f32.mrb[0].mxu0
        %v1449 = vadd.f32 0.0, %v1448
        %1450 = vmatprep.mubr.f32.mxu0 0.0
        %1451 = vmatmul.mubr.f32.gmra.mrb[0].mxu0 %v375
        %v1452 = vpop.f32.mrb[0].mxu0
        %v1453 = vadd.f32 0.0, %v1452
        %v1454 = vpop.f32.mrb[0].mxu0
        %v1455 = vadd.f32 0.0, %v1454
        %1456 = vmatprep.mubr.f32.mxu0 0.0
        %1457 = vmatmul.mubr.f32.gmra.mrb[0].mxu0 %v376
        %v1458 = vpop.f32.mrb[0].mxu0
        %v1459 = vadd.f32 0.0, %v1458
        %v1460 = vpop.f32.mrb[0].mxu0
        %v1461 = vadd.f32 0.0, %v1460
        %1462 = vmatprep.mubr.f32.mxu0 0.0
        %1463 = vmatmul.mubr.f32.gmra.mrb[0].mxu0 %v377
        %v1464 = vpop.f32.mrb[0].mxu0
        %v1465 = vadd.f32 0.0, %v1464
        %v1466 = vpop.f32.mrb[0].mxu0
        %v1467 = vadd.f32 0.0, %v1466
        %1468 = vmatprep.mubr.f32.mxu0 0.0
        %1469 = vmatmul.mubr.f32.gmra.mrb[0].mxu0 %v378
        %v1470 = vpop.f32.mrb[0].mxu0
        %v1471 = vadd.f32 0.0, %v1470
        %v1472 = vpop.f32.mrb[0].mxu0
        %v1473 = vadd.f32 0.0, %v1472
        %1474 = vmatprep.mubr.f32.mxu0 0.0
        %1475 = vmatmul.mubr.f32.gmra.mrb[0].mxu0 %v379
        %v1476 = vpop.f32.mrb[0].mxu0
        %v1477 = vadd.f32 0.0, %v1476
        %v1478 = vpop.f32.mrb[0].mxu0
        %v1479 = vadd.f32 0.0, %v1478
        %1480 = vmatprep.mubr.f32.mxu0 0.0
        %1481 = vmatmul.mubr.f32.gmra.mrb[0].mxu0 %v380
        %v1482 = vpop.f32.mrb[0].mxu0
        %v1483 = vadd.f32 0.0, %v1482
        %v1484 = vpop.f32.mrb[0].mxu0
        %v1485 = vadd.f32 0.0, %v1484
        %1486 = vmatprep.mubr.f32.mxu0 0.0
        %1487 = vmatmul.mubr.f32.gmra.mrb[0].mxu0 %v381
        %v1488 = vpop.f32.mrb[0].mxu0
        %v1489 = vadd.f32 0.0, %v1488
        %v1490 = vpop.f32.mrb[0].mxu0
        %v1491 = vadd.f32 0.0, %v1490
        %1492 = vmatprep.mubr.f32.mxu0 0.0
        %1493 = vmatmul.mubr.f32.gmra.mrb[0].mxu0 %v382
        %v1494 = vpop.f32.mrb[0].mxu0
        %v1495 = vadd.f32 0.0, %v1494
        %v1496 = vpop.f32.mrb[0].mxu0
        %v1497 = vadd.f32 0.0, %v1496
        %1498 = vmatprep.mubr.f32.mxu0 0.0
        %1499 = vmatmul.mubr.f32.gmra.mrb[0].mxu0 %v383
        %v1500 = vpop.f32.mrb[0].mxu0
        %v1501 = vadd.f32 0.0, %v1500
        %v1502 = vpop.f32.mrb[0].mxu0
        %v1503 = vadd.f32 0.0, %v1502
        %1504 = vmatprep.mubr.f32.mxu0 0.0
        %1505 = vmatmul.mubr.f32.gmra.mrb[0].mxu0 %v384
        %v1506 = vpop.f32.mrb[0].mxu0
        %v1507 = vadd.f32 0.0, %v1506
        %v1508 = vpop.f32.mrb[0].mxu0
        %v1509 = vadd.f32 0.0, %v1508
        %1510 = vmatprep.mubr.f32.mxu0 0.0
        %1511 = vmatmul.mubr.f32.gmra.mrb[0].mxu0 %v385
        %v1512 = vpop.f32.mrb[0].mxu0
        %v1513 = vadd.f32 0.0, %v1512
        %v1514 = vpop.f32.mrb[0].mxu0
        %v1515 = vadd.f32 0.0, %v1514
        %1516 = vmatprep.mubr.f32.mxu0 0.0
        %1517 = vmatmul.mubr.f32.gmra.mrb[0].mxu0 %v386
        %v1518 = vpop.f32.mrb[0].mxu0
        %v1519 = vadd.f32 0.0, %v1518
        %v1520 = vpop.f32.mrb[0].mxu0
        %v1521 = vadd.f32 0.0, %v1520
        %1522 = vmatprep.mubr.f32.mxu0 0.0
        %1523 = vmatmul.mubr.f32.gmra.mrb[0].mxu0 %v387
        %v1524 = vpop.f32.mrb[0].mxu0
        %v1525 = vadd.f32 0.0, %v1524
        %v1526 = vpop.f32.mrb[0].mxu0
        %v1527 = vadd.f32 0.0, %v1526
        %1528 = vmatprep.mubr.f32.mxu0 0.0
        %1529 = vmatmul.mubr.f32.gmra.mrb[0].mxu0 %v388
        %v1530 = vpop.f32.mrb[0].mxu0
        %v1531 = vadd.f32 0.0, %v1530
        %v1532 = vpop.f32.mrb[0].mxu0
        %v1533 = vadd.f32 0.0, %v1532
        %1534 = vmatprep.mubr.f32.mxu0 0.0
        %1535 = vmatmul.mubr.f32.gmra.mrb[0].mxu0 %v389
        %v1536 = vpop.f32.mrb[0].mxu0
        %v1537 = vadd.f32 0.0, %v1536
        %v1538 = vpop.f32.mrb[0].mxu0
        %v1539 = vadd.f32 0.0, %v1538
        %1540 = vmatprep.mubr.f32.mxu0 0.0
        %1541 = vmatmul.mubr.f32.gmra.mrb[0].mxu0 %v390
        %v1542 = vpop.f32.mrb[0].mxu0
        %v1543 = vadd.f32 0.0, %v1542
        %v1544 = vpop.f32.mrb[0].mxu0
        %v1545 = vadd.f32 0.0, %v1544
        %1546 = vdwg.mxu0
        %v1547 = vmax.f32 %v586, %v588
        %v1548 = vmax.f32 %v1547, %v843
        %v1549 = vmax.f32 %v1548, %v845
        %v1550 = vmax.f32 %v1549, %v1100
        %v1551 = vmax.f32 %v1550, %v1102
        %v1552 = vmax.f32 %v1551, %v1357
        %v1553 = vmax.f32 %v1552, %v1359
        %1554 = vmax.xlane.f32.xlu0 %v1553
        %v1555 = vpop.xlane.xlu0 %1554
        %v1556 = vmax.f32 %v592, %v594
        %v1557 = vmax.f32 %v1556, %v849
        %v1558 = vmax.f32 %v1557, %v851
        %v1559 = vmax.f32 %v1558, %v1106
        %v1560 = vmax.f32 %v1559, %v1108
        %v1561 = vmax.f32 %v1560, %v1363
        %v1562 = vmax.f32 %v1561, %v1365
        %1563 = vmax.xlane.f32.xlu0 %v1562
        %v1564 = vpop.xlane.xlu0 %1563
        %v1565 = vmax.f32 %v598, %v600
        %v1566 = vmax.f32 %v1565, %v855
        %v1567 = vmax.f32 %v1566, %v857
        %v1568 = vmax.f32 %v1567, %v1112
        %v1569 = vmax.f32 %v1568, %v1114
        %v1570 = vmax.f32 %v1569, %v1369
        %v1571 = vmax.f32 %v1570, %v1371
        %1572 = vmax.xlane.f32.xlu0 %v1571
        %v1573 = vpop.xlane.xlu0 %1572
        %v1574 = vmax.f32 %v604, %v606
        %v1575 = vmax.f32 %v1574, %v861
        %v1576 = vmax.f32 %v1575, %v863
        %v1577 = vmax.f32 %v1576, %v1118
        %v1578 = vmax.f32 %v1577, %v1120
        %v1579 = vmax.f32 %v1578, %v1375
        %v1580 = vmax.f32 %v1579, %v1377
        %1581 = vmax.xlane.f32.xlu0 %v1580
        %v1582 = vpop.xlane.xlu0 %1581
        %v1583 = vmax.f32 %v610, %v612
        %v1584 = vmax.f32 %v1583, %v867
        %v1585 = vmax.f32 %v1584, %v869
        %v1586 = vmax.f32 %v1585, %v1124
        %v1587 = vmax.f32 %v1586, %v1126
        %v1588 = vmax.f32 %v1587, %v1381
        %v1589 = vmax.f32 %v1588, %v1383
        %1590 = vmax.xlane.f32.xlu0 %v1589
        %v1591 = vpop.xlane.xlu0 %1590
        %v1592 = vmax.f32 %v616, %v618
        %v1593 = vmax.f32 %v1592, %v873
        %v1594 = vmax.f32 %v1593, %v875
        %v1595 = vmax.f32 %v1594, %v1130
        %v1596 = vmax.f32 %v1595, %v1132
        %v1597 = vmax.f32 %v1596, %v1387
        %v1598 = vmax.f32 %v1597, %v1389
        %1599 = vmax.xlane.f32.xlu0 %v1598
        %v1600 = vpop.xlane.xlu0 %1599
        %v1601 = vmax.f32 %v622, %v624
        %v1602 = vmax.f32 %v1601, %v879
        %v1603 = vmax.f32 %v1602, %v881
        %v1604 = vmax.f32 %v1603, %v1136
        %v1605 = vmax.f32 %v1604, %v1138
        %v1606 = vmax.f32 %v1605, %v1393
        %v1607 = vmax.f32 %v1606, %v1395
        %1608 = vmax.xlane.f32.xlu0 %v1607
        %v1609 = vpop.xlane.xlu0 %1608
        %v1610 = vmax.f32 %v628, %v630
        %v1611 = vmax.f32 %v1610, %v885
        %v1612 = vmax.f32 %v1611, %v887
        %v1613 = vmax.f32 %v1612, %v1142
        %v1614 = vmax.f32 %v1613, %v1144
        %v1615 = vmax.f32 %v1614, %v1399
        %v1616 = vmax.f32 %v1615, %v1401
        %1617 = vmax.xlane.f32.xlu0 %v1616
        %v1618 = vpop.xlane.xlu0 %1617
        %v1619 = vmax.f32 %v634, %v636
        %v1620 = vmax.f32 %v1619, %v891
        %v1621 = vmax.f32 %v1620, %v893
        %v1622 = vmax.f32 %v1621, %v1148
        %v1623 = vmax.f32 %v1622, %v1150
        %v1624 = vmax.f32 %v1623, %v1405
        %v1625 = vmax.f32 %v1624, %v1407
        %1626 = vmax.xlane.f32.xlu0 %v1625
        %v1627 = vpop.xlane.xlu0 %1626
        %v1628 = vmax.f32 %v640, %v642
        %v1629 = vmax.f32 %v1628, %v897
        %v1630 = vmax.f32 %v1629, %v899
        %v1631 = vmax.f32 %v1630, %v1154
        %v1632 = vmax.f32 %v1631, %v1156
        %v1633 = vmax.f32 %v1632, %v1411
        %v1634 = vmax.f32 %v1633, %v1413
        %1635 = vmax.xlane.f32.xlu0 %v1634
        %v1636 = vpop.xlane.xlu0 %1635
        %v1637 = vmax.f32 %v646, %v648
        %v1638 = vmax.f32 %v1637, %v903
        %v1639 = vmax.f32 %v1638, %v905
        %v1640 = vmax.f32 %v1639, %v1160
        %v1641 = vmax.f32 %v1640, %v1162
        %v1642 = vmax.f32 %v1641, %v1417
        %v1643 = vmax.f32 %v1642, %v1419
        %1644 = vmax.xlane.f32.xlu0 %v1643
        %v1645 = vpop.xlane.xlu0 %1644
        %v1646 = vmax.f32 %v652, %v654
        %v1647 = vmax.f32 %v1646, %v909
        %v1648 = vmax.f32 %v1647, %v911
        %v1649 = vmax.f32 %v1648, %v1166
        %v1650 = vmax.f32 %v1649, %v1168
        %v1651 = vmax.f32 %v1650, %v1423
        %v1652 = vmax.f32 %v1651, %v1425
        %1653 = vmax.xlane.f32.xlu0 %v1652
        %v1654 = vpop.xlane.xlu0 %1653
        %v1655 = vmax.f32 %v658, %v660
        %v1656 = vmax.f32 %v1655, %v915
        %v1657 = vmax.f32 %v1656, %v917
        %v1658 = vmax.f32 %v1657, %v1172
        %v1659 = vmax.f32 %v1658, %v1174
        %v1660 = vmax.f32 %v1659, %v1429
        %v1661 = vmax.f32 %v1660, %v1431
        %1662 = vmax.xlane.f32.xlu0 %v1661
        %v1663 = vpop.xlane.xlu0 %1662
        %v1664 = vmax.f32 %v664, %v666
        %v1665 = vmax.f32 %v1664, %v921
        %v1666 = vmax.f32 %v1665, %v923
        %v1667 = vmax.f32 %v1666, %v1178
        %v1668 = vmax.f32 %v1667, %v1180
        %v1669 = vmax.f32 %v1668, %v1435
        %v1670 = vmax.f32 %v1669, %v1437
        %1671 = vmax.xlane.f32.xlu0 %v1670
        %v1672 = vpop.xlane.xlu0 %1671
        %v1673 = vmax.f32 %v670, %v672
        %v1674 = vmax.f32 %v1673, %v927
        %v1675 = vmax.f32 %v1674, %v929
        %v1676 = vmax.f32 %v1675, %v1184
        %v1677 = vmax.f32 %v1676, %v1186
        %v1678 = vmax.f32 %v1677, %v1441
        %v1679 = vmax.f32 %v1678, %v1443
        %1680 = vmax.xlane.f32.xlu0 %v1679
        %v1681 = vpop.xlane.xlu0 %1680
        %v1682 = vmax.f32 %v676, %v678
        %v1683 = vmax.f32 %v1682, %v933
        %v1684 = vmax.f32 %v1683, %v935
        %v1685 = vmax.f32 %v1684, %v1190
        %v1686 = vmax.f32 %v1685, %v1192
        %v1687 = vmax.f32 %v1686, %v1447
        %v1688 = vmax.f32 %v1687, %v1449
        %1689 = vmax.xlane.f32.xlu0 %v1688
        %v1690 = vpop.xlane.xlu0 %1689
        %v1691 = vmax.f32 %v682, %v684
        %v1692 = vmax.f32 %v1691, %v939
        %v1693 = vmax.f32 %v1692, %v941
        %v1694 = vmax.f32 %v1693, %v1196
        %v1695 = vmax.f32 %v1694, %v1198
        %v1696 = vmax.f32 %v1695, %v1453
        %v1697 = vmax.f32 %v1696, %v1455
        %1698 = vmax.xlane.f32.xlu0 %v1697
        %v1699 = vpop.xlane.xlu0 %1698
        %v1700 = vmax.f32 %v688, %v690
        %v1701 = vmax.f32 %v1700, %v945
        %v1702 = vmax.f32 %v1701, %v947
        %v1703 = vmax.f32 %v1702, %v1202
        %v1704 = vmax.f32 %v1703, %v1204
        %v1705 = vmax.f32 %v1704, %v1459
        %v1706 = vmax.f32 %v1705, %v1461
        %1707 = vmax.xlane.f32.xlu0 %v1706
        %v1708 = vpop.xlane.xlu0 %1707
        %v1709 = vmax.f32 %v694, %v696
        %v1710 = vmax.f32 %v1709, %v951
        %v1711 = vmax.f32 %v1710, %v953
        %v1712 = vmax.f32 %v1711, %v1208
        %v1713 = vmax.f32 %v1712, %v1210
        %v1714 = vmax.f32 %v1713, %v1465
        %v1715 = vmax.f32 %v1714, %v1467
        %1716 = vmax.xlane.f32.xlu0 %v1715
        %v1717 = vpop.xlane.xlu0 %1716
        %v1718 = vmax.f32 %v700, %v702
        %v1719 = vmax.f32 %v1718, %v957
        %v1720 = vmax.f32 %v1719, %v959
        %v1721 = vmax.f32 %v1720, %v1214
        %v1722 = vmax.f32 %v1721, %v1216
        %v1723 = vmax.f32 %v1722, %v1471
        %v1724 = vmax.f32 %v1723, %v1473
        %1725 = vmax.xlane.f32.xlu0 %v1724
        %v1726 = vpop.xlane.xlu0 %1725
        %v1727 = vmax.f32 %v706, %v708
        %v1728 = vmax.f32 %v1727, %v963
        %v1729 = vmax.f32 %v1728, %v965
        %v1730 = vmax.f32 %v1729, %v1220
        %v1731 = vmax.f32 %v1730, %v1222
        %v1732 = vmax.f32 %v1731, %v1477
        %v1733 = vmax.f32 %v1732, %v1479
        %1734 = vmax.xlane.f32.xlu0 %v1733
        %v1735 = vpop.xlane.xlu0 %1734
        %v1736 = vmax.f32 %v712, %v714
        %v1737 = vmax.f32 %v1736, %v969
        %v1738 = vmax.f32 %v1737, %v971
        %v1739 = vmax.f32 %v1738, %v1226
        %v1740 = vmax.f32 %v1739, %v1228
        %v1741 = vmax.f32 %v1740, %v1483
        %v1742 = vmax.f32 %v1741, %v1485
        %1743 = vmax.xlane.f32.xlu0 %v1742
        %v1744 = vpop.xlane.xlu0 %1743
        %v1745 = vmax.f32 %v718, %v720
        %v1746 = vmax.f32 %v1745, %v975
        %v1747 = vmax.f32 %v1746, %v977
        %v1748 = vmax.f32 %v1747, %v1232
        %v1749 = vmax.f32 %v1748, %v1234
        %v1750 = vmax.f32 %v1749, %v1489
        %v1751 = vmax.f32 %v1750, %v1491
        %1752 = vmax.xlane.f32.xlu0 %v1751
        %v1753 = vpop.xlane.xlu0 %1752
        %v1754 = vmax.f32 %v724, %v726
        %v1755 = vmax.f32 %v1754, %v981
        %v1756 = vmax.f32 %v1755, %v983
        %v1757 = vmax.f32 %v1756, %v1238
        %v1758 = vmax.f32 %v1757, %v1240
        %v1759 = vmax.f32 %v1758, %v1495
        %v1760 = vmax.f32 %v1759, %v1497
        %1761 = vmax.xlane.f32.xlu0 %v1760
        %v1762 = vpop.xlane.xlu0 %1761
        %v1763 = vmax.f32 %v730, %v732
        %v1764 = vmax.f32 %v1763, %v987
        %v1765 = vmax.f32 %v1764, %v989
        %v1766 = vmax.f32 %v1765, %v1244
        %v1767 = vmax.f32 %v1766, %v1246
        %v1768 = vmax.f32 %v1767, %v1501
        %v1769 = vmax.f32 %v1768, %v1503
        %1770 = vmax.xlane.f32.xlu0 %v1769
        %v1771 = vpop.xlane.xlu0 %1770
        %v1772 = vmax.f32 %v736, %v738
        %v1773 = vmax.f32 %v1772, %v993
        %v1774 = vmax.f32 %v1773, %v995
        %v1775 = vmax.f32 %v1774, %v1250
        %v1776 = vmax.f32 %v1775, %v1252
        %v1777 = vmax.f32 %v1776, %v1507
        %v1778 = vmax.f32 %v1777, %v1509
        %1779 = vmax.xlane.f32.xlu0 %v1778
        %v1780 = vpop.xlane.xlu0 %1779
        %v1781 = vmax.f32 %v742, %v744
        %v1782 = vmax.f32 %v1781, %v999
        %v1783 = vmax.f32 %v1782, %v1001
        %v1784 = vmax.f32 %v1783, %v1256
        %v1785 = vmax.f32 %v1784, %v1258
        %v1786 = vmax.f32 %v1785, %v1513
        %v1787 = vmax.f32 %v1786, %v1515
        %1788 = vmax.xlane.f32.xlu0 %v1787
        %v1789 = vpop.xlane.xlu0 %1788
        %v1790 = vmax.f32 %v748, %v750
        %v1791 = vmax.f32 %v1790, %v1005
        %v1792 = vmax.f32 %v1791, %v1007
        %v1793 = vmax.f32 %v1792, %v1262
        %v1794 = vmax.f32 %v1793, %v1264
        %v1795 = vmax.f32 %v1794, %v1519
        %v1796 = vmax.f32 %v1795, %v1521
        %1797 = vmax.xlane.f32.xlu0 %v1796
        %v1798 = vpop.xlane.xlu0 %1797
        %v1799 = vmax.f32 %v754, %v756
        %v1800 = vmax.f32 %v1799, %v1011
        %v1801 = vmax.f32 %v1800, %v1013
        %v1802 = vmax.f32 %v1801, %v1268
        %v1803 = vmax.f32 %v1802, %v1270
        %v1804 = vmax.f32 %v1803, %v1525
        %v1805 = vmax.f32 %v1804, %v1527
        %1806 = vmax.xlane.f32.xlu0 %v1805
        %v1807 = vpop.xlane.xlu0 %1806
        %v1808 = vmax.f32 %v760, %v762
        %v1809 = vmax.f32 %v1808, %v1017
        %v1810 = vmax.f32 %v1809, %v1019
        %v1811 = vmax.f32 %v1810, %v1274
        %v1812 = vmax.f32 %v1811, %v1276
        %v1813 = vmax.f32 %v1812, %v1531
        %v1814 = vmax.f32 %v1813, %v1533
        %1815 = vmax.xlane.f32.xlu0 %v1814
        %v1816 = vpop.xlane.xlu0 %1815
        %v1817 = vmax.f32 %v766, %v768
        %v1818 = vmax.f32 %v1817, %v1023
        %v1819 = vmax.f32 %v1818, %v1025
        %v1820 = vmax.f32 %v1819, %v1280
        %v1821 = vmax.f32 %v1820, %v1282
        %v1822 = vmax.f32 %v1821, %v1537
        %v1823 = vmax.f32 %v1822, %v1539
        %1824 = vmax.xlane.f32.xlu0 %v1823
        %v1825 = vpop.xlane.xlu0 %1824
        %v1826 = vmax.f32 %v772, %v774
        %v1827 = vmax.f32 %v1826, %v1029
        %v1828 = vmax.f32 %v1827, %v1031
        %v1829 = vmax.f32 %v1828, %v1286
        %v1830 = vmax.f32 %v1829, %v1288
        %v1831 = vmax.f32 %v1830, %v1543
        %v1832 = vmax.f32 %v1831, %v1545
        %1833 = vmax.xlane.f32.xlu0 %v1832
        %v1834 = vpop.xlane.xlu0 %1833
        %v1835 = vsub.f32 %v586, %v1555
        %v1836 = vsub.f32 %v588, %v1555
        %v1837 = vsub.f32 %v843, %v1555
        %v1838 = vsub.f32 %v845, %v1555
        %v1839 = vsub.f32 %v1100, %v1555
        %v1840 = vsub.f32 %v1102, %v1555
        %v1841 = vsub.f32 %v1357, %v1555
        %v1842 = vsub.f32 %v1359, %v1555
        %v1843 = vsub.f32 %v592, %v1564
        %v1844 = vsub.f32 %v594, %v1564
        %v1845 = vsub.f32 %v849, %v1564
        %v1846 = vsub.f32 %v851, %v1564
        %v1847 = vsub.f32 %v1106, %v1564
        %v1848 = vsub.f32 %v1108, %v1564
        %v1849 = vsub.f32 %v1363, %v1564
        %v1850 = vsub.f32 %v1365, %v1564
        %v1851 = vsub.f32 %v598, %v1573
        %v1852 = vsub.f32 %v600, %v1573
        %v1853 = vsub.f32 %v855, %v1573
        %v1854 = vsub.f32 %v857, %v1573
        %v1855 = vsub.f32 %v1112, %v1573
        %v1856 = vsub.f32 %v1114, %v1573
        %v1857 = vsub.f32 %v1369, %v1573
        %v1858 = vsub.f32 %v1371, %v1573
        %v1859 = vsub.f32 %v604, %v1582
        %v1860 = vsub.f32 %v606, %v1582
        %v1861 = vsub.f32 %v861, %v1582
        %v1862 = vsub.f32 %v863, %v1582
        %v1863 = vsub.f32 %v1118, %v1582
        %v1864 = vsub.f32 %v1120, %v1582
        %v1865 = vsub.f32 %v1375, %v1582
        %v1866 = vsub.f32 %v1377, %v1582
        %v1867 = vsub.f32 %v610, %v1591
        %v1868 = vsub.f32 %v612, %v1591
        %v1869 = vsub.f32 %v867, %v1591
        %v1870 = vsub.f32 %v869, %v1591
        %v1871 = vsub.f32 %v1124, %v1591
        %v1872 = vsub.f32 %v1126, %v1591
        %v1873 = vsub.f32 %v1381, %v1591
        %v1874 = vsub.f32 %v1383, %v1591
        %v1875 = vsub.f32 %v616, %v1600
        %v1876 = vsub.f32 %v618, %v1600
        %v1877 = vsub.f32 %v873, %v1600
        %v1878 = vsub.f32 %v875, %v1600
        %v1879 = vsub.f32 %v1130, %v1600
        %v1880 = vsub.f32 %v1132, %v1600
        %v1881 = vsub.f32 %v1387, %v1600
        %v1882 = vsub.f32 %v1389, %v1600
        %v1883 = vsub.f32 %v622, %v1609
        %v1884 = vsub.f32 %v624, %v1609
        %v1885 = vsub.f32 %v879, %v1609
        %v1886 = vsub.f32 %v881, %v1609
        %v1887 = vsub.f32 %v1136, %v1609
        %v1888 = vsub.f32 %v1138, %v1609
        %v1889 = vsub.f32 %v1393, %v1609
        %v1890 = vsub.f32 %v1395, %v1609
        %v1891 = vsub.f32 %v628, %v1618
        %v1892 = vsub.f32 %v630, %v1618
        %v1893 = vsub.f32 %v885, %v1618
        %v1894 = vsub.f32 %v887, %v1618
        %v1895 = vsub.f32 %v1142, %v1618
        %v1896 = vsub.f32 %v1144, %v1618
        %v1897 = vsub.f32 %v1399, %v1618
        %v1898 = vsub.f32 %v1401, %v1618
        %v1899 = vsub.f32 %v634, %v1627
        %v1900 = vsub.f32 %v636, %v1627
        %v1901 = vsub.f32 %v891, %v1627
        %v1902 = vsub.f32 %v893, %v1627
        %v1903 = vsub.f32 %v1148, %v1627
        %v1904 = vsub.f32 %v1150, %v1627
        %v1905 = vsub.f32 %v1405, %v1627
        %v1906 = vsub.f32 %v1407, %v1627
        %v1907 = vsub.f32 %v640, %v1636
        %v1908 = vsub.f32 %v642, %v1636
        %v1909 = vsub.f32 %v897, %v1636
        %v1910 = vsub.f32 %v899, %v1636
        %v1911 = vsub.f32 %v1154, %v1636
        %v1912 = vsub.f32 %v1156, %v1636
        %v1913 = vsub.f32 %v1411, %v1636
        %v1914 = vsub.f32 %v1413, %v1636
        %v1915 = vsub.f32 %v646, %v1645
        %v1916 = vsub.f32 %v648, %v1645
        %v1917 = vsub.f32 %v903, %v1645
        %v1918 = vsub.f32 %v905, %v1645
        %v1919 = vsub.f32 %v1160, %v1645
        %v1920 = vsub.f32 %v1162, %v1645
        %v1921 = vsub.f32 %v1417, %v1645
        %v1922 = vsub.f32 %v1419, %v1645
        %v1923 = vsub.f32 %v652, %v1654
        %v1924 = vsub.f32 %v654, %v1654
        %v1925 = vsub.f32 %v909, %v1654
        %v1926 = vsub.f32 %v911, %v1654
        %v1927 = vsub.f32 %v1166, %v1654
        %v1928 = vsub.f32 %v1168, %v1654
        %v1929 = vsub.f32 %v1423, %v1654
        %v1930 = vsub.f32 %v1425, %v1654
        %v1931 = vsub.f32 %v658, %v1663
        %v1932 = vsub.f32 %v660, %v1663
        %v1933 = vsub.f32 %v915, %v1663
        %v1934 = vsub.f32 %v917, %v1663
        %v1935 = vsub.f32 %v1172, %v1663
        %v1936 = vsub.f32 %v1174, %v1663
        %v1937 = vsub.f32 %v1429, %v1663
        %v1938 = vsub.f32 %v1431, %v1663
        %v1939 = vsub.f32 %v664, %v1672
        %v1940 = vsub.f32 %v666, %v1672
        %v1941 = vsub.f32 %v921, %v1672
        %v1942 = vsub.f32 %v923, %v1672
        %v1943 = vsub.f32 %v1178, %v1672
        %v1944 = vsub.f32 %v1180, %v1672
        %v1945 = vsub.f32 %v1435, %v1672
        %v1946 = vsub.f32 %v1437, %v1672
        %v1947 = vsub.f32 %v670, %v1681
        %v1948 = vsub.f32 %v672, %v1681
        %v1949 = vsub.f32 %v927, %v1681
        %v1950 = vsub.f32 %v929, %v1681
        %v1951 = vsub.f32 %v1184, %v1681
        %v1952 = vsub.f32 %v1186, %v1681
        %v1953 = vsub.f32 %v1441, %v1681
        %v1954 = vsub.f32 %v1443, %v1681
        %v1955 = vsub.f32 %v676, %v1690
        %v1956 = vsub.f32 %v678, %v1690
        %v1957 = vsub.f32 %v933, %v1690
        %v1958 = vsub.f32 %v935, %v1690
        %v1959 = vsub.f32 %v1190, %v1690
        %v1960 = vsub.f32 %v1192, %v1690
        %v1961 = vsub.f32 %v1447, %v1690
        %v1962 = vsub.f32 %v1449, %v1690
        %v1963 = vsub.f32 %v682, %v1699
        %v1964 = vsub.f32 %v684, %v1699
        %v1965 = vsub.f32 %v939, %v1699
        %v1966 = vsub.f32 %v941, %v1699
        %v1967 = vsub.f32 %v1196, %v1699
        %v1968 = vsub.f32 %v1198, %v1699
        %v1969 = vsub.f32 %v1453, %v1699
        %v1970 = vsub.f32 %v1455, %v1699
        %v1971 = vsub.f32 %v688, %v1708
        %v1972 = vsub.f32 %v690, %v1708
        %v1973 = vsub.f32 %v945, %v1708
        %v1974 = vsub.f32 %v947, %v1708
        %v1975 = vsub.f32 %v1202, %v1708
        %v1976 = vsub.f32 %v1204, %v1708
        %v1977 = vsub.f32 %v1459, %v1708
        %v1978 = vsub.f32 %v1461, %v1708
        %v1979 = vsub.f32 %v694, %v1717
        %v1980 = vsub.f32 %v696, %v1717
        %v1981 = vsub.f32 %v951, %v1717
        %v1982 = vsub.f32 %v953, %v1717
        %v1983 = vsub.f32 %v1208, %v1717
        %v1984 = vsub.f32 %v1210, %v1717
        %v1985 = vsub.f32 %v1465, %v1717
        %v1986 = vsub.f32 %v1467, %v1717
        %v1987 = vsub.f32 %v700, %v1726
        %v1988 = vsub.f32 %v702, %v1726
        %v1989 = vsub.f32 %v957, %v1726
        %v1990 = vsub.f32 %v959, %v1726
        %v1991 = vsub.f32 %v1214, %v1726
        %v1992 = vsub.f32 %v1216, %v1726
        %v1993 = vsub.f32 %v1471, %v1726
        %v1994 = vsub.f32 %v1473, %v1726
        %v1995 = vsub.f32 %v706, %v1735
        %v1996 = vsub.f32 %v708, %v1735
        %v1997 = vsub.f32 %v963, %v1735
        %v1998 = vsub.f32 %v965, %v1735
        %v1999 = vsub.f32 %v1220, %v1735
        %v2000 = vsub.f32 %v1222, %v1735
        %v2001 = vsub.f32 %v1477, %v1735
        %v2002 = vsub.f32 %v1479, %v1735
        %v2003 = vsub.f32 %v712, %v1744
        %v2004 = vsub.f32 %v714, %v1744
        %v2005 = vsub.f32 %v969, %v1744
        %v2006 = vsub.f32 %v971, %v1744
        %v2007 = vsub.f32 %v1226, %v1744
        %v2008 = vsub.f32 %v1228, %v1744
        %v2009 = vsub.f32 %v1483, %v1744
        %v2010 = vsub.f32 %v1485, %v1744
        %v2011 = vsub.f32 %v718, %v1753
        %v2012 = vsub.f32 %v720, %v1753
        %v2013 = vsub.f32 %v975, %v1753
        %v2014 = vsub.f32 %v977, %v1753
        %v2015 = vsub.f32 %v1232, %v1753
        %v2016 = vsub.f32 %v1234, %v1753
        %v2017 = vsub.f32 %v1489, %v1753
        %v2018 = vsub.f32 %v1491, %v1753
        %v2019 = vsub.f32 %v724, %v1762
        %v2020 = vsub.f32 %v726, %v1762
        %v2021 = vsub.f32 %v981, %v1762
        %v2022 = vsub.f32 %v983, %v1762
        %v2023 = vsub.f32 %v1238, %v1762
        %v2024 = vsub.f32 %v1240, %v1762
        %v2025 = vsub.f32 %v1495, %v1762
        %v2026 = vsub.f32 %v1497, %v1762
        %v2027 = vsub.f32 %v730, %v1771
        %v2028 = vsub.f32 %v732, %v1771
        %v2029 = vsub.f32 %v987, %v1771
        %v2030 = vsub.f32 %v989, %v1771
        %v2031 = vsub.f32 %v1244, %v1771
        %v2032 = vsub.f32 %v1246, %v1771
        %v2033 = vsub.f32 %v1501, %v1771
        %v2034 = vsub.f32 %v1503, %v1771
        %v2035 = vsub.f32 %v736, %v1780
        %v2036 = vsub.f32 %v738, %v1780
        %v2037 = vsub.f32 %v993, %v1780
        %v2038 = vsub.f32 %v995, %v1780
        %v2039 = vsub.f32 %v1250, %v1780
        %v2040 = vsub.f32 %v1252, %v1780
        %v2041 = vsub.f32 %v1507, %v1780
        %v2042 = vsub.f32 %v1509, %v1780
        %v2043 = vsub.f32 %v742, %v1789
        %v2044 = vsub.f32 %v744, %v1789
        %v2045 = vsub.f32 %v999, %v1789
        %v2046 = vsub.f32 %v1001, %v1789
        %v2047 = vsub.f32 %v1256, %v1789
        %v2048 = vsub.f32 %v1258, %v1789
        %v2049 = vsub.f32 %v1513, %v1789
        %v2050 = vsub.f32 %v1515, %v1789
        %v2051 = vsub.f32 %v748, %v1798
        %v2052 = vsub.f32 %v750, %v1798
        %v2053 = vsub.f32 %v1005, %v1798
        %v2054 = vsub.f32 %v1007, %v1798
        %v2055 = vsub.f32 %v1262, %v1798
        %v2056 = vsub.f32 %v1264, %v1798
        %v2057 = vsub.f32 %v1519, %v1798
        %v2058 = vsub.f32 %v1521, %v1798
        %v2059 = vsub.f32 %v754, %v1807
        %v2060 = vsub.f32 %v756, %v1807
        %v2061 = vsub.f32 %v1011, %v1807
        %v2062 = vsub.f32 %v1013, %v1807
        %v2063 = vsub.f32 %v1268, %v1807
        %v2064 = vsub.f32 %v1270, %v1807
        %v2065 = vsub.f32 %v1525, %v1807
        %v2066 = vsub.f32 %v1527, %v1807
        %v2067 = vsub.f32 %v760, %v1816
        %v2068 = vsub.f32 %v762, %v1816
        %v2069 = vsub.f32 %v1017, %v1816
        %v2070 = vsub.f32 %v1019, %v1816
        %v2071 = vsub.f32 %v1274, %v1816
        %v2072 = vsub.f32 %v1276, %v1816
        %v2073 = vsub.f32 %v1531, %v1816
        %v2074 = vsub.f32 %v1533, %v1816
        %v2075 = vsub.f32 %v766, %v1825
        %v2076 = vsub.f32 %v768, %v1825
        %v2077 = vsub.f32 %v1023, %v1825
        %v2078 = vsub.f32 %v1025, %v1825
        %v2079 = vsub.f32 %v1280, %v1825
        %v2080 = vsub.f32 %v1282, %v1825
        %v2081 = vsub.f32 %v1537, %v1825
        %v2082 = vsub.f32 %v1539, %v1825
        %v2083 = vsub.f32 %v772, %v1834
        %v2084 = vsub.f32 %v774, %v1834
        %v2085 = vsub.f32 %v1029, %v1834
        %v2086 = vsub.f32 %v1031, %v1834
        %v2087 = vsub.f32 %v1286, %v1834
        %v2088 = vsub.f32 %v1288, %v1834
        %v2089 = vsub.f32 %v1543, %v1834
        %v2090 = vsub.f32 %v1545, %v1834
        %v2091 = vmul.f32 %v1835, 1.442695
        %v2092 = vpow.pop %v2091
        %v2093 = vmul.f32 %v1836, 1.442695
        %v2094 = vpow.pop %v2093
        %v2095 = vmul.f32 %v1837, 1.442695
        %v2096 = vpow.pop %v2095
        %v2097 = vmul.f32 %v1838, 1.442695
        %v2098 = vpow.pop %v2097
        %v2099 = vmul.f32 %v1839, 1.442695
        %v2100 = vpow.pop %v2099
        %v2101 = vmul.f32 %v1840, 1.442695
        %v2102 = vpow.pop %v2101
        %v2103 = vmul.f32 %v1841, 1.442695
        %v2104 = vpow.pop %v2103
        %v2105 = vmul.f32 %v1842, 1.442695
        %v2106 = vpow.pop %v2105
        %v2107 = vmul.f32 %v1843, 1.442695
        %v2108 = vpow.pop %v2107
        %v2109 = vmul.f32 %v1844, 1.442695
        %v2110 = vpow.pop %v2109
        %v2111 = vmul.f32 %v1845, 1.442695
        %v2112 = vpow.pop %v2111
        %v2113 = vmul.f32 %v1846, 1.442695
        %v2114 = vpow.pop %v2113
        %v2115 = vmul.f32 %v1847, 1.442695
        %v2116 = vpow.pop %v2115
        %v2117 = vmul.f32 %v1848, 1.442695
        %v2118 = vpow.pop %v2117
        %v2119 = vmul.f32 %v1849, 1.442695
        %v2120 = vpow.pop %v2119
        %v2121 = vmul.f32 %v1850, 1.442695
        %v2122 = vpow.pop %v2121
        %v2123 = vmul.f32 %v1851, 1.442695
        %v2124 = vpow.pop %v2123
        %v2125 = vmul.f32 %v1852, 1.442695
        %v2126 = vpow.pop %v2125
        %v2127 = vmul.f32 %v1853, 1.442695
        %v2128 = vpow.pop %v2127
        %v2129 = vmul.f32 %v1854, 1.442695
        %v2130 = vpow.pop %v2129
        %v2131 = vmul.f32 %v1855, 1.442695
        %v2132 = vpow.pop %v2131
        %v2133 = vmul.f32 %v1856, 1.442695
        %v2134 = vpow.pop %v2133
        %v2135 = vmul.f32 %v1857, 1.442695
        %v2136 = vpow.pop %v2135
        %v2137 = vmul.f32 %v1858, 1.442695
        %v2138 = vpow.pop %v2137
        %v2139 = vmul.f32 %v1859, 1.442695
        %v2140 = vpow.pop %v2139
        %v2141 = vmul.f32 %v1860, 1.442695
        %v2142 = vpow.pop %v2141
        %v2143 = vmul.f32 %v1861, 1.442695
        %v2144 = vpow.pop %v2143
        %v2145 = vmul.f32 %v1862, 1.442695
        %v2146 = vpow.pop %v2145
        %v2147 = vmul.f32 %v1863, 1.442695
        %v2148 = vpow.pop %v2147
        %v2149 = vmul.f32 %v1864, 1.442695
        %v2150 = vpow.pop %v2149
        %v2151 = vmul.f32 %v1865, 1.442695
        %v2152 = vpow.pop %v2151
        %v2153 = vmul.f32 %v1866, 1.442695
        %v2154 = vpow.pop %v2153
        %v2155 = vmul.f32 %v1867, 1.442695
        %v2156 = vpow.pop %v2155
        %v2157 = vmul.f32 %v1868, 1.442695
        %v2158 = vpow.pop %v2157
        %v2159 = vmul.f32 %v1869, 1.442695
        %v2160 = vpow.pop %v2159
        %v2161 = vmul.f32 %v1870, 1.442695
        %v2162 = vpow.pop %v2161
        %v2163 = vmul.f32 %v1871, 1.442695
        %v2164 = vpow.pop %v2163
        %v2165 = vmul.f32 %v1872, 1.442695
        %v2166 = vpow.pop %v2165
        %v2167 = vmul.f32 %v1873, 1.442695
        %v2168 = vpow.pop %v2167
        %v2169 = vmul.f32 %v1874, 1.442695
        %v2170 = vpow.pop %v2169
        %v2171 = vmul.f32 %v1875, 1.442695
        %v2172 = vpow.pop %v2171
        %v2173 = vmul.f32 %v1876, 1.442695
        %v2174 = vpow.pop %v2173
        %v2175 = vmul.f32 %v1877, 1.442695
        %v2176 = vpow.pop %v2175
        %v2177 = vmul.f32 %v1878, 1.442695
        %v2178 = vpow.pop %v2177
        %v2179 = vmul.f32 %v1879, 1.442695
        %v2180 = vpow.pop %v2179
        %v2181 = vmul.f32 %v1880, 1.442695
        %v2182 = vpow.pop %v2181
        %v2183 = vmul.f32 %v1881, 1.442695
        %v2184 = vpow.pop %v2183
        %v2185 = vmul.f32 %v1882, 1.442695
        %v2186 = vpow.pop %v2185
        %v2187 = vmul.f32 %v1883, 1.442695
        %v2188 = vpow.pop %v2187
        %v2189 = vmul.f32 %v1884, 1.442695
        %v2190 = vpow.pop %v2189
        %v2191 = vmul.f32 %v1885, 1.442695
        %v2192 = vpow.pop %v2191
        %v2193 = vmul.f32 %v1886, 1.442695
        %v2194 = vpow.pop %v2193
        %v2195 = vmul.f32 %v1887, 1.442695
        %v2196 = vpow.pop %v2195
        %v2197 = vmul.f32 %v1888, 1.442695
        %v2198 = vpow.pop %v2197
        %v2199 = vmul.f32 %v1889, 1.442695
        %v2200 = vpow.pop %v2199
        %v2201 = vmul.f32 %v1890, 1.442695
        %v2202 = vpow.pop %v2201
        %v2203 = vmul.f32 %v1891, 1.442695
        %v2204 = vpow.pop %v2203
        %v2205 = vmul.f32 %v1892, 1.442695
        %v2206 = vpow.pop %v2205
        %v2207 = vmul.f32 %v1893, 1.442695
        %v2208 = vpow.pop %v2207
        %v2209 = vmul.f32 %v1894, 1.442695
        %v2210 = vpow.pop %v2209
        %v2211 = vmul.f32 %v1895, 1.442695
        %v2212 = vpow.pop %v2211
        %v2213 = vmul.f32 %v1896, 1.442695
        %v2214 = vpow.pop %v2213
        %v2215 = vmul.f32 %v1897, 1.442695
        %v2216 = vpow.pop %v2215
        %v2217 = vmul.f32 %v1898, 1.442695
        %v2218 = vpow.pop %v2217
        %v2219 = vmul.f32 %v1899, 1.442695
        %v2220 = vpow.pop %v2219
        %v2221 = vmul.f32 %v1900, 1.442695
        %v2222 = vpow.pop %v2221
        %v2223 = vmul.f32 %v1901, 1.442695
        %v2224 = vpow.pop %v2223
        %v2225 = vmul.f32 %v1902, 1.442695
        %v2226 = vpow.pop %v2225
        %v2227 = vmul.f32 %v1903, 1.442695
        %v2228 = vpow.pop %v2227
        %v2229 = vmul.f32 %v1904, 1.442695
        %v2230 = vpow.pop %v2229
        %v2231 = vmul.f32 %v1905, 1.442695
        %v2232 = vpow.pop %v2231
        %v2233 = vmul.f32 %v1906, 1.442695
        %v2234 = vpow.pop %v2233
        %v2235 = vmul.f32 %v1907, 1.442695
        %v2236 = vpow.pop %v2235
        %v2237 = vmul.f32 %v1908, 1.442695
        %v2238 = vpow.pop %v2237
        %v2239 = vmul.f32 %v1909, 1.442695
        %v2240 = vpow.pop %v2239
        %v2241 = vmul.f32 %v1910, 1.442695
        %v2242 = vpow.pop %v2241
        %v2243 = vmul.f32 %v1911, 1.442695
        %v2244 = vpow.pop %v2243
        %v2245 = vmul.f32 %v1912, 1.442695
        %v2246 = vpow.pop %v2245
        %v2247 = vmul.f32 %v1913, 1.442695
        %v2248 = vpow.pop %v2247
        %v2249 = vmul.f32 %v1914, 1.442695
        %v2250 = vpow.pop %v2249
        %v2251 = vmul.f32 %v1915, 1.442695
        %v2252 = vpow.pop %v2251
        %v2253 = vmul.f32 %v1916, 1.442695
        %v2254 = vpow.pop %v2253
        %v2255 = vmul.f32 %v1917, 1.442695
        %v2256 = vpow.pop %v2255
        %v2257 = vmul.f32 %v1918, 1.442695
        %v2258 = vpow.pop %v2257
        %v2259 = vmul.f32 %v1919, 1.442695
        %v2260 = vpow.pop %v2259
        %v2261 = vmul.f32 %v1920, 1.442695
        %v2262 = vpow.pop %v2261
        %v2263 = vmul.f32 %v1921, 1.442695
        %v2264 = vpow.pop %v2263
        %v2265 = vmul.f32 %v1922, 1.442695
        %v2266 = vpow.pop %v2265
        %v2267 = vmul.f32 %v1923, 1.442695
        %v2268 = vpow.pop %v2267
        %v2269 = vmul.f32 %v1924, 1.442695
        %v2270 = vpow.pop %v2269
        %v2271 = vmul.f32 %v1925, 1.442695
        %v2272 = vpow.pop %v2271
        %v2273 = vmul.f32 %v1926, 1.442695
        %v2274 = vpow.pop %v2273
        %v2275 = vmul.f32 %v1927, 1.442695
        %v2276 = vpow.pop %v2275
        %v2277 = vmul.f32 %v1928, 1.442695
        %v2278 = vpow.pop %v2277
        %v2279 = vmul.f32 %v1929, 1.442695
        %v2280 = vpow.pop %v2279
        %v2281 = vmul.f32 %v1930, 1.442695
        %v2282 = vpow.pop %v2281
        %v2283 = vmul.f32 %v1931, 1.442695
        %v2284 = vpow.pop %v2283
        %v2285 = vmul.f32 %v1932, 1.442695
        %v2286 = vpow.pop %v2285
        %v2287 = vmul.f32 %v1933, 1.442695
        %v2288 = vpow.pop %v2287
        %v2289 = vmul.f32 %v1934, 1.442695
        %v2290 = vpow.pop %v2289
        %v2291 = vmul.f32 %v1935, 1.442695
        %v2292 = vpow.pop %v2291
        %v2293 = vmul.f32 %v1936, 1.442695
        %v2294 = vpow.pop %v2293
        %v2295 = vmul.f32 %v1937, 1.442695
        %v2296 = vpow.pop %v2295
        %v2297 = vmul.f32 %v1938, 1.442695
        %v2298 = vpow.pop %v2297
        %v2299 = vmul.f32 %v1939, 1.442695
        %v2300 = vpow.pop %v2299
        %v2301 = vmul.f32 %v1940, 1.442695
        %v2302 = vpow.pop %v2301
        %v2303 = vmul.f32 %v1941, 1.442695
        %v2304 = vpow.pop %v2303
        %v2305 = vmul.f32 %v1942, 1.442695
        %v2306 = vpow.pop %v2305
        %v2307 = vmul.f32 %v1943, 1.442695
        %v2308 = vpow.pop %v2307
        %v2309 = vmul.f32 %v1944, 1.442695
        %v2310 = vpow.pop %v2309
        %v2311 = vmul.f32 %v1945, 1.442695
        %v2312 = vpow.pop %v2311
        %v2313 = vmul.f32 %v1946, 1.442695
        %v2314 = vpow.pop %v2313
        %v2315 = vmul.f32 %v1947, 1.442695
        %v2316 = vpow.pop %v2315
        %v2317 = vmul.f32 %v1948, 1.442695
        %v2318 = vpow.pop %v2317
        %v2319 = vmul.f32 %v1949, 1.442695
        %v2320 = vpow.pop %v2319
        %v2321 = vmul.f32 %v1950, 1.442695
        %v2322 = vpow.pop %v2321
        %v2323 = vmul.f32 %v1951, 1.442695
        %v2324 = vpow.pop %v2323
        %v2325 = vmul.f32 %v1952, 1.442695
        %v2326 = vpow.pop %v2325
        %v2327 = vmul.f32 %v1953, 1.442695
        %v2328 = vpow.pop %v2327
        %v2329 = vmul.f32 %v1954, 1.442695
        %v2330 = vpow.pop %v2329
        %v2331 = vmul.f32 %v1955, 1.442695
        %v2332 = vpow.pop %v2331
        %v2333 = vmul.f32 %v1956, 1.442695
        %v2334 = vpow.pop %v2333
        %v2335 = vmul.f32 %v1957, 1.442695
        %v2336 = vpow.pop %v2335
        %v2337 = vmul.f32 %v1958, 1.442695
        %v2338 = vpow.pop %v2337
        %v2339 = vmul.f32 %v1959, 1.442695
        %v2340 = vpow.pop %v2339
        %v2341 = vmul.f32 %v1960, 1.442695
        %v2342 = vpow.pop %v2341
        %v2343 = vmul.f32 %v1961, 1.442695
        %v2344 = vpow.pop %v2343
        %v2345 = vmul.f32 %v1962, 1.442695
        %v2346 = vpow.pop %v2345
        %v2347 = vmul.f32 %v1963, 1.442695
        %v2348 = vpow.pop %v2347
        %v2349 = vmul.f32 %v1964, 1.442695
        %v2350 = vpow.pop %v2349
        %v2351 = vmul.f32 %v1965, 1.442695
        %v2352 = vpow.pop %v2351
        %v2353 = vmul.f32 %v1966, 1.442695
        %v2354 = vpow.pop %v2353
        %v2355 = vmul.f32 %v1967, 1.442695
        %v2356 = vpow.pop %v2355
        %v2357 = vmul.f32 %v1968, 1.442695
        %v2358 = vpow.pop %v2357
        %v2359 = vmul.f32 %v1969, 1.442695
        %v2360 = vpow.pop %v2359
        %v2361 = vmul.f32 %v1970, 1.442695
        %v2362 = vpow.pop %v2361
        %v2363 = vmul.f32 %v1971, 1.442695
        %v2364 = vpow.pop %v2363
        %v2365 = vmul.f32 %v1972, 1.442695
        %v2366 = vpow.pop %v2365
        %v2367 = vmul.f32 %v1973, 1.442695
        %v2368 = vpow.pop %v2367
        %v2369 = vmul.f32 %v1974, 1.442695
        %v2370 = vpow.pop %v2369
        %v2371 = vmul.f32 %v1975, 1.442695
        %v2372 = vpow.pop %v2371
        %v2373 = vmul.f32 %v1976, 1.442695
        %v2374 = vpow.pop %v2373
        %v2375 = vmul.f32 %v1977, 1.442695
        %v2376 = vpow.pop %v2375
        %v2377 = vmul.f32 %v1978, 1.442695
        %v2378 = vpow.pop %v2377
        %v2379 = vmul.f32 %v1979, 1.442695
        %v2380 = vpow.pop %v2379
        %v2381 = vmul.f32 %v1980, 1.442695
        %v2382 = vpow.pop %v2381
        %v2383 = vmul.f32 %v1981, 1.442695
        %v2384 = vpow.pop %v2383
        %v2385 = vmul.f32 %v1982, 1.442695
        %v2386 = vpow.pop %v2385
        %v2387 = vmul.f32 %v1983, 1.442695
        %v2388 = vpow.pop %v2387
        %v2389 = vmul.f32 %v1984, 1.442695
        %v2390 = vpow.pop %v2389
        %v2391 = vmul.f32 %v1985, 1.442695
        %v2392 = vpow.pop %v2391
        %v2393 = vmul.f32 %v1986, 1.442695
        %v2394 = vpow.pop %v2393
        %v2395 = vmul.f32 %v1987, 1.442695
        %v2396 = vpow.pop %v2395
        %v2397 = vmul.f32 %v1988, 1.442695
        %v2398 = vpow.pop %v2397
        %v2399 = vmul.f32 %v1989, 1.442695
        %v2400 = vpow.pop %v2399
        %v2401 = vmul.f32 %v1990, 1.442695
        %v2402 = vpow.pop %v2401
        %v2403 = vmul.f32 %v1991, 1.442695
        %v2404 = vpow.pop %v2403
        %v2405 = vmul.f32 %v1992, 1.442695
        %v2406 = vpow.pop %v2405
        %v2407 = vmul.f32 %v1993, 1.442695
        %v2408 = vpow.pop %v2407
        %v2409 = vmul.f32 %v1994, 1.442695
        %v2410 = vpow.pop %v2409
        %v2411 = vmul.f32 %v1995, 1.442695
        %v2412 = vpow.pop %v2411
        %v2413 = vmul.f32 %v1996, 1.442695
        %v2414 = vpow.pop %v2413
        %v2415 = vmul.f32 %v1997, 1.442695
        %v2416 = vpow.pop %v2415
        %v2417 = vmul.f32 %v1998, 1.442695
        %v2418 = vpow.pop %v2417
        %v2419 = vmul.f32 %v1999, 1.442695
        %v2420 = vpow.pop %v2419
        %v2421 = vmul.f32 %v2000, 1.442695
        %v2422 = vpow.pop %v2421
        %v2423 = vmul.f32 %v2001, 1.442695
        %v2424 = vpow.pop %v2423
        %v2425 = vmul.f32 %v2002, 1.442695
        %v2426 = vpow.pop %v2425
        %v2427 = vmul.f32 %v2003, 1.442695
        %v2428 = vpow.pop %v2427
        %v2429 = vmul.f32 %v2004, 1.442695
        %v2430 = vpow.pop %v2429
        %v2431 = vmul.f32 %v2005, 1.442695
        %v2432 = vpow.pop %v2431
        %v2433 = vmul.f32 %v2006, 1.442695
        %v2434 = vpow.pop %v2433
        %v2435 = vmul.f32 %v2007, 1.442695
        %v2436 = vpow.pop %v2435
        %v2437 = vmul.f32 %v2008, 1.442695
        %v2438 = vpow.pop %v2437
        %v2439 = vmul.f32 %v2009, 1.442695
        %v2440 = vpow.pop %v2439
        %v2441 = vmul.f32 %v2010, 1.442695
        %v2442 = vpow.pop %v2441
        %v2443 = vmul.f32 %v2011, 1.442695
        %v2444 = vpow.pop %v2443
        %v2445 = vmul.f32 %v2012, 1.442695
        %v2446 = vpow.pop %v2445
        %v2447 = vmul.f32 %v2013, 1.442695
        %v2448 = vpow.pop %v2447
        %v2449 = vmul.f32 %v2014, 1.442695
        %v2450 = vpow.pop %v2449
        %v2451 = vmul.f32 %v2015, 1.442695
        %v2452 = vpow.pop %v2451
        %v2453 = vmul.f32 %v2016, 1.442695
        %v2454 = vpow.pop %v2453
        %v2455 = vmul.f32 %v2017, 1.442695
        %v2456 = vpow.pop %v2455
        %v2457 = vmul.f32 %v2018, 1.442695
        %v2458 = vpow.pop %v2457
        %v2459 = vmul.f32 %v2019, 1.442695
        %v2460 = vpow.pop %v2459
        %v2461 = vmul.f32 %v2020, 1.442695
        %v2462 = vpow.pop %v2461
        %v2463 = vmul.f32 %v2021, 1.442695
        %v2464 = vpow.pop %v2463
        %v2465 = vmul.f32 %v2022, 1.442695
        %v2466 = vpow.pop %v2465
        %v2467 = vmul.f32 %v2023, 1.442695
        %v2468 = vpow.pop %v2467
        %v2469 = vmul.f32 %v2024, 1.442695
        %v2470 = vpow.pop %v2469
        %v2471 = vmul.f32 %v2025, 1.442695
        %v2472 = vpow.pop %v2471
        %v2473 = vmul.f32 %v2026, 1.442695
        %v2474 = vpow.pop %v2473
        %v2475 = vmul.f32 %v2027, 1.442695
        %v2476 = vpow.pop %v2475
        %v2477 = vmul.f32 %v2028, 1.442695
        %v2478 = vpow.pop %v2477
        %v2479 = vmul.f32 %v2029, 1.442695
        %v2480 = vpow.pop %v2479
        %v2481 = vmul.f32 %v2030, 1.442695
        %v2482 = vpow.pop %v2481
        %v2483 = vmul.f32 %v2031, 1.442695
        %v2484 = vpow.pop %v2483
        %v2485 = vmul.f32 %v2032, 1.442695
        %v2486 = vpow.pop %v2485
        %v2487 = vmul.f32 %v2033, 1.442695
        %v2488 = vpow.pop %v2487
        %v2489 = vmul.f32 %v2034, 1.442695
        %v2490 = vpow.pop %v2489
        %v2491 = vmul.f32 %v2035, 1.442695
        %v2492 = vpow.pop %v2491
        %v2493 = vmul.f32 %v2036, 1.442695
        %v2494 = vpow.pop %v2493
        %v2495 = vmul.f32 %v2037, 1.442695
        %v2496 = vpow.pop %v2495
        %v2497 = vmul.f32 %v2038, 1.442695
        %v2498 = vpow.pop %v2497
        %v2499 = vmul.f32 %v2039, 1.442695
        %v2500 = vpow.pop %v2499
        %v2501 = vmul.f32 %v2040, 1.442695
        %v2502 = vpow.pop %v2501
        %v2503 = vmul.f32 %v2041, 1.442695
        %v2504 = vpow.pop %v2503
        %v2505 = vmul.f32 %v2042, 1.442695
        %v2506 = vpow.pop %v2505
        %v2507 = vmul.f32 %v2043, 1.442695
        %v2508 = vpow.pop %v2507
        %v2509 = vmul.f32 %v2044, 1.442695
        %v2510 = vpow.pop %v2509
        %v2511 = vmul.f32 %v2045, 1.442695
        %v2512 = vpow.pop %v2511
        %v2513 = vmul.f32 %v2046, 1.442695
        %v2514 = vpow.pop %v2513
        %v2515 = vmul.f32 %v2047, 1.442695
        %v2516 = vpow.pop %v2515
        %v2517 = vmul.f32 %v2048, 1.442695
        %v2518 = vpow.pop %v2517
        %v2519 = vmul.f32 %v2049, 1.442695
        %v2520 = vpow.pop %v2519
        %v2521 = vmul.f32 %v2050, 1.442695
        %v2522 = vpow.pop %v2521
        %v2523 = vmul.f32 %v2051, 1.442695
        %v2524 = vpow.pop %v2523
        %v2525 = vmul.f32 %v2052, 1.442695
        %v2526 = vpow.pop %v2525
        %v2527 = vmul.f32 %v2053, 1.442695
        %v2528 = vpow.pop %v2527
        %v2529 = vmul.f32 %v2054, 1.442695
        %v2530 = vpow.pop %v2529
        %v2531 = vmul.f32 %v2055, 1.442695
        %v2532 = vpow.pop %v2531
        %v2533 = vmul.f32 %v2056, 1.442695
        %v2534 = vpow.pop %v2533
        %v2535 = vmul.f32 %v2057, 1.442695
        %v2536 = vpow.pop %v2535
        %v2537 = vmul.f32 %v2058, 1.442695
        %v2538 = vpow.pop %v2537
        %v2539 = vmul.f32 %v2059, 1.442695
        %v2540 = vpow.pop %v2539
        %v2541 = vmul.f32 %v2060, 1.442695
        %v2542 = vpow.pop %v2541
        %v2543 = vmul.f32 %v2061, 1.442695
        %v2544 = vpow.pop %v2543
        %v2545 = vmul.f32 %v2062, 1.442695
        %v2546 = vpow.pop %v2545
        %v2547 = vmul.f32 %v2063, 1.442695
        %v2548 = vpow.pop %v2547
        %v2549 = vmul.f32 %v2064, 1.442695
        %v2550 = vpow.pop %v2549
        %v2551 = vmul.f32 %v2065, 1.442695
        %v2552 = vpow.pop %v2551
        %v2553 = vmul.f32 %v2066, 1.442695
        %v2554 = vpow.pop %v2553
        %v2555 = vmul.f32 %v2067, 1.442695
        %v2556 = vpow.pop %v2555
        %v2557 = vmul.f32 %v2068, 1.442695
        %v2558 = vpow.pop %v2557
        %v2559 = vmul.f32 %v2069, 1.442695
        %v2560 = vpow.pop %v2559
        %v2561 = vmul.f32 %v2070, 1.442695
        %v2562 = vpow.pop %v2561
        %v2563 = vmul.f32 %v2071, 1.442695
        %v2564 = vpow.pop %v2563
        %v2565 = vmul.f32 %v2072, 1.442695
        %v2566 = vpow.pop %v2565
        %v2567 = vmul.f32 %v2073, 1.442695
        %v2568 = vpow.pop %v2567
        %v2569 = vmul.f32 %v2074, 1.442695
        %v2570 = vpow.pop %v2569
        %v2571 = vmul.f32 %v2075, 1.442695
        %v2572 = vpow.pop %v2571
        %v2573 = vmul.f32 %v2076, 1.442695
        %v2574 = vpow.pop %v2573
        %v2575 = vmul.f32 %v2077, 1.442695
        %v2576 = vpow.pop %v2575
        %v2577 = vmul.f32 %v2078, 1.442695
        %v2578 = vpow.pop %v2577
        %v2579 = vmul.f32 %v2079, 1.442695
        %v2580 = vpow.pop %v2579
        %v2581 = vmul.f32 %v2080, 1.442695
        %v2582 = vpow.pop %v2581
        %v2583 = vmul.f32 %v2081, 1.442695
        %v2584 = vpow.pop %v2583
        %v2585 = vmul.f32 %v2082, 1.442695
        %v2586 = vpow.pop %v2585
        %v2587 = vmul.f32 %v2083, 1.442695
        %v2588 = vpow.pop %v2587
        %v2589 = vmul.f32 %v2084, 1.442695
        %v2590 = vpow.pop %v2589
        %v2591 = vmul.f32 %v2085, 1.442695
        %v2592 = vpow.pop %v2591
        %v2593 = vmul.f32 %v2086, 1.442695
        %v2594 = vpow.pop %v2593
        %v2595 = vmul.f32 %v2087, 1.442695
        %v2596 = vpow.pop %v2595
        %v2597 = vmul.f32 %v2088, 1.442695
        %v2598 = vpow.pop %v2597
        %v2599 = vmul.f32 %v2089, 1.442695
        %v2600 = vpow.pop %v2599
        %v2601 = vmul.f32 %v2090, 1.442695
        %v2602 = vpow.pop %v2601
        %v2603 = vadd.f32 %v2092, %v2094
        %v2604 = vadd.f32 %v2603, %v2096
        %v2605 = vadd.f32 %v2604, %v2098
        %v2606 = vadd.f32 %v2605, %v2100
        %v2607 = vadd.f32 %v2606, %v2102
        %v2608 = vadd.f32 %v2607, %v2104
        %v2609 = vadd.f32 %v2608, %v2106
        %2610 = vadd.xlane.f32.xlu0 %v2609
        %v2611 = vpop.xlane.xlu0 %2610
        %v2612 = vadd.f32 %v2108, %v2110
        %v2613 = vadd.f32 %v2612, %v2112
        %v2614 = vadd.f32 %v2613, %v2114
        %v2615 = vadd.f32 %v2614, %v2116
        %v2616 = vadd.f32 %v2615, %v2118
        %v2617 = vadd.f32 %v2616, %v2120
        %v2618 = vadd.f32 %v2617, %v2122
        %2619 = vadd.xlane.f32.xlu0 %v2618
        %v2620 = vpop.xlane.xlu0 %2619
        %v2621 = vadd.f32 %v2124, %v2126
        %v2622 = vadd.f32 %v2621, %v2128
        %v2623 = vadd.f32 %v2622, %v2130
        %v2624 = vadd.f32 %v2623, %v2132
        %v2625 = vadd.f32 %v2624, %v2134
        %v2626 = vadd.f32 %v2625, %v2136
        %v2627 = vadd.f32 %v2626, %v2138
        %2628 = vadd.xlane.f32.xlu0 %v2627
        %v2629 = vpop.xlane.xlu0 %2628
        %v2630 = vadd.f32 %v2140, %v2142
        %v2631 = vadd.f32 %v2630, %v2144
        %v2632 = vadd.f32 %v2631, %v2146
        %v2633 = vadd.f32 %v2632, %v2148
        %v2634 = vadd.f32 %v2633, %v2150
        %v2635 = vadd.f32 %v2634, %v2152
        %v2636 = vadd.f32 %v2635, %v2154
        %2637 = vadd.xlane.f32.xlu0 %v2636
        %v2638 = vpop.xlane.xlu0 %2637
        %v2639 = vadd.f32 %v2156, %v2158
        %v2640 = vadd.f32 %v2639, %v2160
        %v2641 = vadd.f32 %v2640, %v2162
        %v2642 = vadd.f32 %v2641, %v2164
        %v2643 = vadd.f32 %v2642, %v2166
        %v2644 = vadd.f32 %v2643, %v2168
        %v2645 = vadd.f32 %v2644, %v2170
        %2646 = vadd.xlane.f32.xlu0 %v2645
        %v2647 = vpop.xlane.xlu0 %2646
        %v2648 = vadd.f32 %v2172, %v2174
        %v2649 = vadd.f32 %v2648, %v2176
        %v2650 = vadd.f32 %v2649, %v2178
        %v2651 = vadd.f32 %v2650, %v2180
        %v2652 = vadd.f32 %v2651, %v2182
        %v2653 = vadd.f32 %v2652, %v2184
        %v2654 = vadd.f32 %v2653, %v2186
        %2655 = vadd.xlane.f32.xlu0 %v2654
        %v2656 = vpop.xlane.xlu0 %2655
        %v2657 = vadd.f32 %v2188, %v2190
        %v2658 = vadd.f32 %v2657, %v2192
        %v2659 = vadd.f32 %v2658, %v2194
        %v2660 = vadd.f32 %v2659, %v2196
        %v2661 = vadd.f32 %v2660, %v2198
        %v2662 = vadd.f32 %v2661, %v2200
        %v2663 = vadd.f32 %v2662, %v2202
        %2664 = vadd.xlane.f32.xlu0 %v2663
        %v2665 = vpop.xlane.xlu0 %2664
        %v2666 = vadd.f32 %v2204, %v2206
        %v2667 = vadd.f32 %v2666, %v2208
        %v2668 = vadd.f32 %v2667, %v2210
        %v2669 = vadd.f32 %v2668, %v2212
        %v2670 = vadd.f32 %v2669, %v2214
        %v2671 = vadd.f32 %v2670, %v2216
        %v2672 = vadd.f32 %v2671, %v2218
        %2673 = vadd.xlane.f32.xlu0 %v2672
        %v2674 = vpop.xlane.xlu0 %2673
        %v2675 = vadd.f32 %v2220, %v2222
        %v2676 = vadd.f32 %v2675, %v2224
        %v2677 = vadd.f32 %v2676, %v2226
        %v2678 = vadd.f32 %v2677, %v2228
        %v2679 = vadd.f32 %v2678, %v2230
        %v2680 = vadd.f32 %v2679, %v2232
        %v2681 = vadd.f32 %v2680, %v2234
        %2682 = vadd.xlane.f32.xlu0 %v2681
        %v2683 = vpop.xlane.xlu0 %2682
        %v2684 = vadd.f32 %v2236, %v2238
        %v2685 = vadd.f32 %v2684, %v2240
        %v2686 = vadd.f32 %v2685, %v2242
        %v2687 = vadd.f32 %v2686, %v2244
        %v2688 = vadd.f32 %v2687, %v2246
        %v2689 = vadd.f32 %v2688, %v2248
        %v2690 = vadd.f32 %v2689, %v2250
        %2691 = vadd.xlane.f32.xlu0 %v2690
        %v2692 = vpop.xlane.xlu0 %2691
        %v2693 = vadd.f32 %v2252, %v2254
        %v2694 = vadd.f32 %v2693, %v2256
        %v2695 = vadd.f32 %v2694, %v2258
        %v2696 = vadd.f32 %v2695, %v2260
        %v2697 = vadd.f32 %v2696, %v2262
        %v2698 = vadd.f32 %v2697, %v2264
        %v2699 = vadd.f32 %v2698, %v2266
        %2700 = vadd.xlane.f32.xlu0 %v2699
        %v2701 = vpop.xlane.xlu0 %2700
        %v2702 = vadd.f32 %v2268, %v2270
        %v2703 = vadd.f32 %v2702, %v2272
        %v2704 = vadd.f32 %v2703, %v2274
        %v2705 = vadd.f32 %v2704, %v2276
        %v2706 = vadd.f32 %v2705, %v2278
        %v2707 = vadd.f32 %v2706, %v2280
        %v2708 = vadd.f32 %v2707, %v2282
        %2709 = vadd.xlane.f32.xlu0 %v2708
        %v2710 = vpop.xlane.xlu0 %2709
        %v2711 = vadd.f32 %v2284, %v2286
        %v2712 = vadd.f32 %v2711, %v2288
        %v2713 = vadd.f32 %v2712, %v2290
        %v2714 = vadd.f32 %v2713, %v2292
        %v2715 = vadd.f32 %v2714, %v2294
        %v2716 = vadd.f32 %v2715, %v2296
        %v2717 = vadd.f32 %v2716, %v2298
        %2718 = vadd.xlane.f32.xlu0 %v2717
        %v2719 = vpop.xlane.xlu0 %2718
        %v2720 = vadd.f32 %v2300, %v2302
        %v2721 = vadd.f32 %v2720, %v2304
        %v2722 = vadd.f32 %v2721, %v2306
        %v2723 = vadd.f32 %v2722, %v2308
        %v2724 = vadd.f32 %v2723, %v2310
        %v2725 = vadd.f32 %v2724, %v2312
        %v2726 = vadd.f32 %v2725, %v2314
        %2727 = vadd.xlane.f32.xlu0 %v2726
        %v2728 = vpop.xlane.xlu0 %2727
        %v2729 = vadd.f32 %v2316, %v2318
        %v2730 = vadd.f32 %v2729, %v2320
        %v2731 = vadd.f32 %v2730, %v2322
        %v2732 = vadd.f32 %v2731, %v2324
        %v2733 = vadd.f32 %v2732, %v2326
        %v2734 = vadd.f32 %v2733, %v2328
        %v2735 = vadd.f32 %v2734, %v2330
        %2736 = vadd.xlane.f32.xlu0 %v2735
        %v2737 = vpop.xlane.xlu0 %2736
        %v2738 = vadd.f32 %v2332, %v2334
        %v2739 = vadd.f32 %v2738, %v2336
        %v2740 = vadd.f32 %v2739, %v2338
        %v2741 = vadd.f32 %v2740, %v2340
        %v2742 = vadd.f32 %v2741, %v2342
        %v2743 = vadd.f32 %v2742, %v2344
        %v2744 = vadd.f32 %v2743, %v2346
        %2745 = vadd.xlane.f32.xlu0 %v2744
        %v2746 = vpop.xlane.xlu0 %2745
        %v2747 = vadd.f32 %v2348, %v2350
        %v2748 = vadd.f32 %v2747, %v2352
        %v2749 = vadd.f32 %v2748, %v2354
        %v2750 = vadd.f32 %v2749, %v2356
        %v2751 = vadd.f32 %v2750, %v2358
        %v2752 = vadd.f32 %v2751, %v2360
        %v2753 = vadd.f32 %v2752, %v2362
        %2754 = vadd.xlane.f32.xlu0 %v2753
        %v2755 = vpop.xlane.xlu0 %2754
        %v2756 = vadd.f32 %v2364, %v2366
        %v2757 = vadd.f32 %v2756, %v2368
        %v2758 = vadd.f32 %v2757, %v2370
        %v2759 = vadd.f32 %v2758, %v2372
        %v2760 = vadd.f32 %v2759, %v2374
        %v2761 = vadd.f32 %v2760, %v2376
        %v2762 = vadd.f32 %v2761, %v2378
        %2763 = vadd.xlane.f32.xlu0 %v2762
        %v2764 = vpop.xlane.xlu0 %2763
        %v2765 = vadd.f32 %v2380, %v2382
        %v2766 = vadd.f32 %v2765, %v2384
        %v2767 = vadd.f32 %v2766, %v2386
        %v2768 = vadd.f32 %v2767, %v2388
        %v2769 = vadd.f32 %v2768, %v2390
        %v2770 = vadd.f32 %v2769, %v2392
        %v2771 = vadd.f32 %v2770, %v2394
        %2772 = vadd.xlane.f32.xlu0 %v2771
        %v2773 = vpop.xlane.xlu0 %2772
        %v2774 = vadd.f32 %v2396, %v2398
        %v2775 = vadd.f32 %v2774, %v2400
        %v2776 = vadd.f32 %v2775, %v2402
        %v2777 = vadd.f32 %v2776, %v2404
        %v2778 = vadd.f32 %v2777, %v2406
        %v2779 = vadd.f32 %v2778, %v2408
        %v2780 = vadd.f32 %v2779, %v2410
        %2781 = vadd.xlane.f32.xlu0 %v2780
        %v2782 = vpop.xlane.xlu0 %2781
        %v2783 = vadd.f32 %v2412, %v2414
        %v2784 = vadd.f32 %v2783, %v2416
        %v2785 = vadd.f32 %v2784, %v2418
        %v2786 = vadd.f32 %v2785, %v2420
        %v2787 = vadd.f32 %v2786, %v2422
        %v2788 = vadd.f32 %v2787, %v2424
        %v2789 = vadd.f32 %v2788, %v2426
        %2790 = vadd.xlane.f32.xlu0 %v2789
        %v2791 = vpop.xlane.xlu0 %2790
        %v2792 = vadd.f32 %v2428, %v2430
        %v2793 = vadd.f32 %v2792, %v2432
        %v2794 = vadd.f32 %v2793, %v2434
        %v2795 = vadd.f32 %v2794, %v2436
        %v2796 = vadd.f32 %v2795, %v2438
        %v2797 = vadd.f32 %v2796, %v2440
        %v2798 = vadd.f32 %v2797, %v2442
        %2799 = vadd.xlane.f32.xlu0 %v2798
        %v2800 = vpop.xlane.xlu0 %2799
        %v2801 = vadd.f32 %v2444, %v2446
        %v2802 = vadd.f32 %v2801, %v2448
        %v2803 = vadd.f32 %v2802, %v2450
        %v2804 = vadd.f32 %v2803, %v2452
        %v2805 = vadd.f32 %v2804, %v2454
        %v2806 = vadd.f32 %v2805, %v2456
        %v2807 = vadd.f32 %v2806, %v2458
        %2808 = vadd.xlane.f32.xlu0 %v2807
        %v2809 = vpop.xlane.xlu0 %2808
        %v2810 = vadd.f32 %v2460, %v2462
        %v2811 = vadd.f32 %v2810, %v2464
        %v2812 = vadd.f32 %v2811, %v2466
        %v2813 = vadd.f32 %v2812, %v2468
        %v2814 = vadd.f32 %v2813, %v2470
        %v2815 = vadd.f32 %v2814, %v2472
        %v2816 = vadd.f32 %v2815, %v2474
        %2817 = vadd.xlane.f32.xlu0 %v2816
        %v2818 = vpop.xlane.xlu0 %2817
        %v2819 = vadd.f32 %v2476, %v2478
        %v2820 = vadd.f32 %v2819, %v2480
        %v2821 = vadd.f32 %v2820, %v2482
        %v2822 = vadd.f32 %v2821, %v2484
        %v2823 = vadd.f32 %v2822, %v2486
        %v2824 = vadd.f32 %v2823, %v2488
        %v2825 = vadd.f32 %v2824, %v2490
        %2826 = vadd.xlane.f32.xlu0 %v2825
        %v2827 = vpop.xlane.xlu0 %2826
        %v2828 = vadd.f32 %v2492, %v2494
        %v2829 = vadd.f32 %v2828, %v2496
        %v2830 = vadd.f32 %v2829, %v2498
        %v2831 = vadd.f32 %v2830, %v2500
        %v2832 = vadd.f32 %v2831, %v2502
        %v2833 = vadd.f32 %v2832, %v2504
        %v2834 = vadd.f32 %v2833, %v2506
        %2835 = vadd.xlane.f32.xlu0 %v2834
        %v2836 = vpop.xlane.xlu0 %2835
        %v2837 = vadd.f32 %v2508, %v2510
        %v2838 = vadd.f32 %v2837, %v2512
        %v2839 = vadd.f32 %v2838, %v2514
        %v2840 = vadd.f32 %v2839, %v2516
        %v2841 = vadd.f32 %v2840, %v2518
        %v2842 = vadd.f32 %v2841, %v2520
        %v2843 = vadd.f32 %v2842, %v2522
        %2844 = vadd.xlane.f32.xlu0 %v2843
        %v2845 = vpop.xlane.xlu0 %2844
        %v2846 = vadd.f32 %v2524, %v2526
        %v2847 = vadd.f32 %v2846, %v2528
        %v2848 = vadd.f32 %v2847, %v2530
        %v2849 = vadd.f32 %v2848, %v2532
        %v2850 = vadd.f32 %v2849, %v2534
        %v2851 = vadd.f32 %v2850, %v2536
        %v2852 = vadd.f32 %v2851, %v2538
        %2853 = vadd.xlane.f32.xlu0 %v2852
        %v2854 = vpop.xlane.xlu0 %2853
        %v2855 = vadd.f32 %v2540, %v2542
        %v2856 = vadd.f32 %v2855, %v2544
        %v2857 = vadd.f32 %v2856, %v2546
        %v2858 = vadd.f32 %v2857, %v2548
        %v2859 = vadd.f32 %v2858, %v2550
        %v2860 = vadd.f32 %v2859, %v2552
        %v2861 = vadd.f32 %v2860, %v2554
        %2862 = vadd.xlane.f32.xlu0 %v2861
        %v2863 = vpop.xlane.xlu0 %2862
        %v2864 = vadd.f32 %v2556, %v2558
        %v2865 = vadd.f32 %v2864, %v2560
        %v2866 = vadd.f32 %v2865, %v2562
        %v2867 = vadd.f32 %v2866, %v2564
        %v2868 = vadd.f32 %v2867, %v2566
        %v2869 = vadd.f32 %v2868, %v2568
        %v2870 = vadd.f32 %v2869, %v2570
        %2871 = vadd.xlane.f32.xlu0 %v2870
        %v2872 = vpop.xlane.xlu0 %2871
        %v2873 = vadd.f32 %v2572, %v2574
        %v2874 = vadd.f32 %v2873, %v2576
        %v2875 = vadd.f32 %v2874, %v2578
        %v2876 = vadd.f32 %v2875, %v2580
        %v2877 = vadd.f32 %v2876, %v2582
        %v2878 = vadd.f32 %v2877, %v2584
        %v2879 = vadd.f32 %v2878, %v2586
        %2880 = vadd.xlane.f32.xlu0 %v2879
        %v2881 = vpop.xlane.xlu0 %2880
        %v2882 = vadd.f32 %v2588, %v2590
        %v2883 = vadd.f32 %v2882, %v2592
        %v2884 = vadd.f32 %v2883, %v2594
        %v2885 = vadd.f32 %v2884, %v2596
        %v2886 = vadd.f32 %v2885, %v2598
        %v2887 = vadd.f32 %v2886, %v2600
        %v2888 = vadd.f32 %v2887, %v2602
        %2889 = vadd.xlane.f32.xlu0 %v2888
        %v2890 = vpop.xlane.xlu0 %2889
        %v2891 = vrcp.pop %v2611
        %v2892 = vrcp.pop %v2620
        %v2893 = vrcp.pop %v2629
        %v2894 = vrcp.pop %v2638
        %v2895 = vrcp.pop %v2647
        %v2896 = vrcp.pop %v2656
        %v2897 = vrcp.pop %v2665
        %v2898 = vrcp.pop %v2674
        %v2899 = vrcp.pop %v2683
        %v2900 = vrcp.pop %v2692
        %v2901 = vrcp.pop %v2701
        %v2902 = vrcp.pop %v2710
        %v2903 = vrcp.pop %v2719
        %v2904 = vrcp.pop %v2728
        %v2905 = vrcp.pop %v2737
        %v2906 = vrcp.pop %v2746
        %v2907 = vrcp.pop %v2755
        %v2908 = vrcp.pop %v2764
        %v2909 = vrcp.pop %v2773
        %v2910 = vrcp.pop %v2782
        %v2911 = vrcp.pop %v2791
        %v2912 = vrcp.pop %v2800
        %v2913 = vrcp.pop %v2809
        %v2914 = vrcp.pop %v2818
        %v2915 = vrcp.pop %v2827
        %v2916 = vrcp.pop %v2836
        %v2917 = vrcp.pop %v2845
        %v2918 = vrcp.pop %v2854
        %v2919 = vrcp.pop %v2863
        %v2920 = vrcp.pop %v2872
        %v2921 = vrcp.pop %v2881
        %v2922 = vrcp.pop %v2890
        %v2923 = vmul.f32 %v2092, %v2891
        %v2924 = vmul.f32 %v2094, %v2891
        %v2925 = vmul.f32 %v2096, %v2891
        %v2926 = vmul.f32 %v2098, %v2891
        %v2927 = vmul.f32 %v2100, %v2891
        %v2928 = vmul.f32 %v2102, %v2891
        %v2929 = vmul.f32 %v2104, %v2891
        %v2930 = vmul.f32 %v2106, %v2891
        %v2931 = vmul.f32 %v2108, %v2892
        %v2932 = vmul.f32 %v2110, %v2892
        %v2933 = vmul.f32 %v2112, %v2892
        %v2934 = vmul.f32 %v2114, %v2892
        %v2935 = vmul.f32 %v2116, %v2892
        %v2936 = vmul.f32 %v2118, %v2892
        %v2937 = vmul.f32 %v2120, %v2892
        %v2938 = vmul.f32 %v2122, %v2892
        %v2939 = vmul.f32 %v2124, %v2893
        %v2940 = vmul.f32 %v2126, %v2893
        %v2941 = vmul.f32 %v2128, %v2893
        %v2942 = vmul.f32 %v2130, %v2893
        %v2943 = vmul.f32 %v2132, %v2893
        %v2944 = vmul.f32 %v2134, %v2893
        %v2945 = vmul.f32 %v2136, %v2893
        %v2946 = vmul.f32 %v2138, %v2893
        %v2947 = vmul.f32 %v2140, %v2894
        %v2948 = vmul.f32 %v2142, %v2894
        %v2949 = vmul.f32 %v2144, %v2894
        %v2950 = vmul.f32 %v2146, %v2894
        %v2951 = vmul.f32 %v2148, %v2894
        %v2952 = vmul.f32 %v2150, %v2894
        %v2953 = vmul.f32 %v2152, %v2894
        %v2954 = vmul.f32 %v2154, %v2894
        %v2955 = vmul.f32 %v2156, %v2895
        %v2956 = vmul.f32 %v2158, %v2895
        %v2957 = vmul.f32 %v2160, %v2895
        %v2958 = vmul.f32 %v2162, %v2895
        %v2959 = vmul.f32 %v2164, %v2895
        %v2960 = vmul.f32 %v2166, %v2895
        %v2961 = vmul.f32 %v2168, %v2895
        %v2962 = vmul.f32 %v2170, %v2895
        %v2963 = vmul.f32 %v2172, %v2896
        %v2964 = vmul.f32 %v2174, %v2896
        %v2965 = vmul.f32 %v2176, %v2896
        %v2966 = vmul.f32 %v2178, %v2896
        %v2967 = vmul.f32 %v2180, %v2896
        %v2968 = vmul.f32 %v2182, %v2896
        %v2969 = vmul.f32 %v2184, %v2896
        %v2970 = vmul.f32 %v2186, %v2896
        %v2971 = vmul.f32 %v2188, %v2897
        %v2972 = vmul.f32 %v2190, %v2897
        %v2973 = vmul.f32 %v2192, %v2897
        %v2974 = vmul.f32 %v2194, %v2897
        %v2975 = vmul.f32 %v2196, %v2897
        %v2976 = vmul.f32 %v2198, %v2897
        %v2977 = vmul.f32 %v2200, %v2897
        %v2978 = vmul.f32 %v2202, %v2897
        %v2979 = vmul.f32 %v2204, %v2898
        %v2980 = vmul.f32 %v2206, %v2898
        %v2981 = vmul.f32 %v2208, %v2898
        %v2982 = vmul.f32 %v2210, %v2898
        %v2983 = vmul.f32 %v2212, %v2898
        %v2984 = vmul.f32 %v2214, %v2898
        %v2985 = vmul.f32 %v2216, %v2898
        %v2986 = vmul.f32 %v2218, %v2898
        %v2987 = vmul.f32 %v2220, %v2899
        %v2988 = vmul.f32 %v2222, %v2899
        %v2989 = vmul.f32 %v2224, %v2899
        %v2990 = vmul.f32 %v2226, %v2899
        %v2991 = vmul.f32 %v2228, %v2899
        %v2992 = vmul.f32 %v2230, %v2899
        %v2993 = vmul.f32 %v2232, %v2899
        %v2994 = vmul.f32 %v2234, %v2899
        %v2995 = vmul.f32 %v2236, %v2900
        %v2996 = vmul.f32 %v2238, %v2900
        %v2997 = vmul.f32 %v2240, %v2900
        %v2998 = vmul.f32 %v2242, %v2900
        %v2999 = vmul.f32 %v2244, %v2900
        %v3000 = vmul.f32 %v2246, %v2900
        %v3001 = vmul.f32 %v2248, %v2900
        %v3002 = vmul.f32 %v2250, %v2900
        %v3003 = vmul.f32 %v2252, %v2901
        %v3004 = vmul.f32 %v2254, %v2901
        %v3005 = vmul.f32 %v2256, %v2901
        %v3006 = vmul.f32 %v2258, %v2901
        %v3007 = vmul.f32 %v2260, %v2901
        %v3008 = vmul.f32 %v2262, %v2901
        %v3009 = vmul.f32 %v2264, %v2901
        %v3010 = vmul.f32 %v2266, %v2901
        %v3011 = vmul.f32 %v2268, %v2902
        %v3012 = vmul.f32 %v2270, %v2902
        %v3013 = vmul.f32 %v2272, %v2902
        %v3014 = vmul.f32 %v2274, %v2902
        %v3015 = vmul.f32 %v2276, %v2902
        %v3016 = vmul.f32 %v2278, %v2902
        %v3017 = vmul.f32 %v2280, %v2902
        %v3018 = vmul.f32 %v2282, %v2902
        %v3019 = vmul.f32 %v2284, %v2903
        %v3020 = vmul.f32 %v2286, %v2903
        %v3021 = vmul.f32 %v2288, %v2903
        %v3022 = vmul.f32 %v2290, %v2903
        %v3023 = vmul.f32 %v2292, %v2903
        %v3024 = vmul.f32 %v2294, %v2903
        %v3025 = vmul.f32 %v2296, %v2903
        %v3026 = vmul.f32 %v2298, %v2903
        %v3027 = vmul.f32 %v2300, %v2904
        %v3028 = vmul.f32 %v2302, %v2904
        %v3029 = vmul.f32 %v2304, %v2904
        %v3030 = vmul.f32 %v2306, %v2904
        %v3031 = vmul.f32 %v2308, %v2904
        %v3032 = vmul.f32 %v2310, %v2904
        %v3033 = vmul.f32 %v2312, %v2904
        %v3034 = vmul.f32 %v2314, %v2904
        %v3035 = vmul.f32 %v2316, %v2905
        %v3036 = vmul.f32 %v2318, %v2905
        %v3037 = vmul.f32 %v2320, %v2905
        %v3038 = vmul.f32 %v2322, %v2905
        %v3039 = vmul.f32 %v2324, %v2905
        %v3040 = vmul.f32 %v2326, %v2905
        %v3041 = vmul.f32 %v2328, %v2905
        %v3042 = vmul.f32 %v2330, %v2905
        %v3043 = vmul.f32 %v2332, %v2906
        %v3044 = vmul.f32 %v2334, %v2906
        %v3045 = vmul.f32 %v2336, %v2906
        %v3046 = vmul.f32 %v2338, %v2906
        %v3047 = vmul.f32 %v2340, %v2906
        %v3048 = vmul.f32 %v2342, %v2906
        %v3049 = vmul.f32 %v2344, %v2906
        %v3050 = vmul.f32 %v2346, %v2906
        %v3051 = vmul.f32 %v2348, %v2907
        %v3052 = vmul.f32 %v2350, %v2907
        %v3053 = vmul.f32 %v2352, %v2907
        %v3054 = vmul.f32 %v2354, %v2907
        %v3055 = vmul.f32 %v2356, %v2907
        %v3056 = vmul.f32 %v2358, %v2907
        %v3057 = vmul.f32 %v2360, %v2907
        %v3058 = vmul.f32 %v2362, %v2907
        %v3059 = vmul.f32 %v2364, %v2908
        %v3060 = vmul.f32 %v2366, %v2908
        %v3061 = vmul.f32 %v2368, %v2908
        %v3062 = vmul.f32 %v2370, %v2908
        %v3063 = vmul.f32 %v2372, %v2908
        %v3064 = vmul.f32 %v2374, %v2908
        %v3065 = vmul.f32 %v2376, %v2908
        %v3066 = vmul.f32 %v2378, %v2908
        %v3067 = vmul.f32 %v2380, %v2909
        %v3068 = vmul.f32 %v2382, %v2909
        %v3069 = vmul.f32 %v2384, %v2909
        %v3070 = vmul.f32 %v2386, %v2909
        %v3071 = vmul.f32 %v2388, %v2909
        %v3072 = vmul.f32 %v2390, %v2909
        %v3073 = vmul.f32 %v2392, %v2909
        %v3074 = vmul.f32 %v2394, %v2909
        %v3075 = vmul.f32 %v2396, %v2910
        %v3076 = vmul.f32 %v2398, %v2910
        %v3077 = vmul.f32 %v2400, %v2910
        %v3078 = vmul.f32 %v2402, %v2910
        %v3079 = vmul.f32 %v2404, %v2910
        %v3080 = vmul.f32 %v2406, %v2910
        %v3081 = vmul.f32 %v2408, %v2910
        %v3082 = vmul.f32 %v2410, %v2910
        %v3083 = vmul.f32 %v2412, %v2911
        %v3084 = vmul.f32 %v2414, %v2911
        %v3085 = vmul.f32 %v2416, %v2911
        %v3086 = vmul.f32 %v2418, %v2911
        %v3087 = vmul.f32 %v2420, %v2911
        %v3088 = vmul.f32 %v2422, %v2911
        %v3089 = vmul.f32 %v2424, %v2911
        %v3090 = vmul.f32 %v2426, %v2911
        %v3091 = vmul.f32 %v2428, %v2912
        %v3092 = vmul.f32 %v2430, %v2912
        %v3093 = vmul.f32 %v2432, %v2912
        %v3094 = vmul.f32 %v2434, %v2912
        %v3095 = vmul.f32 %v2436, %v2912
        %v3096 = vmul.f32 %v2438, %v2912
        %v3097 = vmul.f32 %v2440, %v2912
        %v3098 = vmul.f32 %v2442, %v2912
        %v3099 = vmul.f32 %v2444, %v2913
        %v3100 = vmul.f32 %v2446, %v2913
        %v3101 = vmul.f32 %v2448, %v2913
        %v3102 = vmul.f32 %v2450, %v2913
        %v3103 = vmul.f32 %v2452, %v2913
        %v3104 = vmul.f32 %v2454, %v2913
        %v3105 = vmul.f32 %v2456, %v2913
        %v3106 = vmul.f32 %v2458, %v2913
        %v3107 = vmul.f32 %v2460, %v2914
        %v3108 = vmul.f32 %v2462, %v2914
        %v3109 = vmul.f32 %v2464, %v2914
        %v3110 = vmul.f32 %v2466, %v2914
        %v3111 = vmul.f32 %v2468, %v2914
        %v3112 = vmul.f32 %v2470, %v2914
        %v3113 = vmul.f32 %v2472, %v2914
        %v3114 = vmul.f32 %v2474, %v2914
        %v3115 = vmul.f32 %v2476, %v2915
        %v3116 = vmul.f32 %v2478, %v2915
        %v3117 = vmul.f32 %v2480, %v2915
        %v3118 = vmul.f32 %v2482, %v2915
        %v3119 = vmul.f32 %v2484, %v2915
        %v3120 = vmul.f32 %v2486, %v2915
        %v3121 = vmul.f32 %v2488, %v2915
        %v3122 = vmul.f32 %v2490, %v2915
        %v3123 = vmul.f32 %v2492, %v2916
        %v3124 = vmul.f32 %v2494, %v2916
        %v3125 = vmul.f32 %v2496, %v2916
        %v3126 = vmul.f32 %v2498, %v2916
        %v3127 = vmul.f32 %v2500, %v2916
        %v3128 = vmul.f32 %v2502, %v2916
        %v3129 = vmul.f32 %v2504, %v2916
        %v3130 = vmul.f32 %v2506, %v2916
        %v3131 = vmul.f32 %v2508, %v2917
        %v3132 = vmul.f32 %v2510, %v2917
        %v3133 = vmul.f32 %v2512, %v2917
        %v3134 = vmul.f32 %v2514, %v2917
        %v3135 = vmul.f32 %v2516, %v2917
        %v3136 = vmul.f32 %v2518, %v2917
        %v3137 = vmul.f32 %v2520, %v2917
        %v3138 = vmul.f32 %v2522, %v2917
        %v3139 = vmul.f32 %v2524, %v2918
        %v3140 = vmul.f32 %v2526, %v2918
        %v3141 = vmul.f32 %v2528, %v2918
        %v3142 = vmul.f32 %v2530, %v2918
        %v3143 = vmul.f32 %v2532, %v2918
        %v3144 = vmul.f32 %v2534, %v2918
        %v3145 = vmul.f32 %v2536, %v2918
        %v3146 = vmul.f32 %v2538, %v2918
        %v3147 = vmul.f32 %v2540, %v2919
        %v3148 = vmul.f32 %v2542, %v2919
        %v3149 = vmul.f32 %v2544, %v2919
        %v3150 = vmul.f32 %v2546, %v2919
        %v3151 = vmul.f32 %v2548, %v2919
        %v3152 = vmul.f32 %v2550, %v2919
        %v3153 = vmul.f32 %v2552, %v2919
        %v3154 = vmul.f32 %v2554, %v2919
        %v3155 = vmul.f32 %v2556, %v2920
        %v3156 = vmul.f32 %v2558, %v2920
        %v3157 = vmul.f32 %v2560, %v2920
        %v3158 = vmul.f32 %v2562, %v2920
        %v3159 = vmul.f32 %v2564, %v2920
        %v3160 = vmul.f32 %v2566, %v2920
        %v3161 = vmul.f32 %v2568, %v2920
        %v3162 = vmul.f32 %v2570, %v2920
        %v3163 = vmul.f32 %v2572, %v2921
        %v3164 = vmul.f32 %v2574, %v2921
        %v3165 = vmul.f32 %v2576, %v2921
        %v3166 = vmul.f32 %v2578, %v2921
        %v3167 = vmul.f32 %v2580, %v2921
        %v3168 = vmul.f32 %v2582, %v2921
        %v3169 = vmul.f32 %v2584, %v2921
        %v3170 = vmul.f32 %v2586, %v2921
        %v3171 = vmul.f32 %v2588, %v2922
        %v3172 = vmul.f32 %v2590, %v2922
        %v3173 = vmul.f32 %v2592, %v2922
        %v3174 = vmul.f32 %v2594, %v2922
        %v3175 = vmul.f32 %v2596, %v2922
        %v3176 = vmul.f32 %v2598, %v2922
        %v3177 = vmul.f32 %v2600, %v2922
        %v3178 = vmul.f32 %v2602, %v2922
        %v3179 = vld [vmem:[%s284] sm:$0xff]
        %v3180 = vld [vmem:[%s284 + $0x8] sm:$0xff]
        %v3181 = vld [vmem:[%s284 + $0x10] sm:$0xff]
        %v3182 = vld [vmem:[%s284 + $0x18] sm:$0xff]
        %v3183 = vld [vmem:[%s284 + $0x20] sm:$0xff]
        %v3184 = vld [vmem:[%s284 + $0x28] sm:$0xff]
        %v3185 = vld [vmem:[%s284 + $0x30] sm:$0xff]
        %v3186 = vld [vmem:[%s284 + $0x38] sm:$0xff]
        %v3187 = vld [vmem:[%s284 + $0x40] sm:$0xff]
        %v3188 = vld [vmem:[%s284 + $0x48] sm:$0xff]
        %v3189 = vld [vmem:[%s284 + $0x50] sm:$0xff]
        %v3190 = vld [vmem:[%s284 + $0x58] sm:$0xff]
        %v3191 = vld [vmem:[%s284 + $0x60] sm:$0xff]
        %v3192 = vld [vmem:[%s284 + $0x68] sm:$0xff]
        %v3193 = vld [vmem:[%s284 + $0x70] sm:$0xff]
        %v3194 = vld [vmem:[%s284 + $0x78] sm:$0xff]
        %v3195 = vld [vmem:[%s284 + $0x80] sm:$0xff]
        %v3196 = vld [vmem:[%s284 + $0x88] sm:$0xff]
        %v3197 = vld [vmem:[%s284 + $0x90] sm:$0xff]
        %v3198 = vld [vmem:[%s284 + $0x98] sm:$0xff]
        %v3199 = vld [vmem:[%s284 + $0xa0] sm:$0xff]
        %v3200 = vld [vmem:[%s284 + $0xa8] sm:$0xff]
        %v3201 = vld [vmem:[%s284 + $0xb0] sm:$0xff]
        %v3202 = vld [vmem:[%s284 + $0xb8] sm:$0xff]
        %v3203 = vld [vmem:[%s284 + $0xc0] sm:$0xff]
        %v3204 = vld [vmem:[%s284 + $0xc8] sm:$0xff]
        %v3205 = vld [vmem:[%s284 + $0xd0] sm:$0xff]
        %v3206 = vld [vmem:[%s284 + $0xd8] sm:$0xff]
        %v3207 = vld [vmem:[%s284 + $0xe0] sm:$0xff]
        %v3208 = vld [vmem:[%s284 + $0xe8] sm:$0xff]
        %v3209 = vld [vmem:[%s284 + $0xf0] sm:$0xff]
        %v3210 = vld [vmem:[%s284 + $0xf8] sm:$0xff]
        %v3211 = vld [vmem:[%s284 + $0x100] sm:$0xff]
        %v3212 = vld [vmem:[%s284 + $0x108] sm:$0xff]
        %v3213 = vld [vmem:[%s284 + $0x110] sm:$0xff]
        %v3214 = vld [vmem:[%s284 + $0x118] sm:$0xff]
        %v3215 = vld [vmem:[%s284 + $0x120] sm:$0xff]
        %v3216 = vld [vmem:[%s284 + $0x128] sm:$0xff]
        %v3217 = vld [vmem:[%s284 + $0x130] sm:$0xff]
        %v3218 = vld [vmem:[%s284 + $0x138] sm:$0xff]
        %v3219 = vld [vmem:[%s284 + $0x140] sm:$0xff]
        %v3220 = vld [vmem:[%s284 + $0x148] sm:$0xff]
        %v3221 = vld [vmem:[%s284 + $0x150] sm:$0xff]
        %v3222 = vld [vmem:[%s284 + $0x158] sm:$0xff]
        %v3223 = vld [vmem:[%s284 + $0x160] sm:$0xff]
        %v3224 = vld [vmem:[%s284 + $0x168] sm:$0xff]
        %v3225 = vld [vmem:[%s284 + $0x170] sm:$0xff]
        %v3226 = vld [vmem:[%s284 + $0x178] sm:$0xff]
        %v3227 = vld [vmem:[%s284 + $0x180] sm:$0xff]
        %v3228 = vld [vmem:[%s284 + $0x188] sm:$0xff]
        %v3229 = vld [vmem:[%s284 + $0x190] sm:$0xff]
        %v3230 = vld [vmem:[%s284 + $0x198] sm:$0xff]
        %v3231 = vld [vmem:[%s284 + $0x1a0] sm:$0xff]
        %v3232 = vld [vmem:[%s284 + $0x1a8] sm:$0xff]
        %v3233 = vld [vmem:[%s284 + $0x1b0] sm:$0xff]
        %v3234 = vld [vmem:[%s284 + $0x1b8] sm:$0xff]
        %v3235 = vld [vmem:[%s284 + $0x1c0] sm:$0xff]
        %v3236 = vld [vmem:[%s284 + $0x1c8] sm:$0xff]
        %v3237 = vld [vmem:[%s284 + $0x1d0] sm:$0xff]
        %v3238 = vld [vmem:[%s284 + $0x1d8] sm:$0xff]
        %v3239 = vld [vmem:[%s284 + $0x1e0] sm:$0xff]
        %v3240 = vld [vmem:[%s284 + $0x1e8] sm:$0xff]
        %v3241 = vld [vmem:[%s284 + $0x1f0] sm:$0xff]
        %v3242 = vld [vmem:[%s284 + $0x1f8] sm:$0xff]
        %v3243 = vld [vmem:[%s284 + $0x200] sm:$0xff]
        %v3244 = vld [vmem:[%s284 + $0x208] sm:$0xff]
        %v3245 = vld [vmem:[%s284 + $0x210] sm:$0xff]
        %v3246 = vld [vmem:[%s284 + $0x218] sm:$0xff]
        %v3247 = vld [vmem:[%s284 + $0x220] sm:$0xff]
        %v3248 = vld [vmem:[%s284 + $0x228] sm:$0xff]
        %v3249 = vld [vmem:[%s284 + $0x230] sm:$0xff]
        %v3250 = vld [vmem:[%s284 + $0x238] sm:$0xff]
        %v3251 = vld [vmem:[%s284 + $0x240] sm:$0xff]
        %v3252 = vld [vmem:[%s284 + $0x248] sm:$0xff]
        %v3253 = vld [vmem:[%s284 + $0x250] sm:$0xff]
        %v3254 = vld [vmem:[%s284 + $0x258] sm:$0xff]
        %v3255 = vld [vmem:[%s284 + $0x260] sm:$0xff]
        %v3256 = vld [vmem:[%s284 + $0x268] sm:$0xff]
        %v3257 = vld [vmem:[%s284 + $0x270] sm:$0xff]
        %v3258 = vld [vmem:[%s284 + $0x278] sm:$0xff]
        %v3259 = vld [vmem:[%s284 + $0x280] sm:$0xff]
        %v3260 = vld [vmem:[%s284 + $0x288] sm:$0xff]
        %v3261 = vld [vmem:[%s284 + $0x290] sm:$0xff]
        %v3262 = vld [vmem:[%s284 + $0x298] sm:$0xff]
        %v3263 = vld [vmem:[%s284 + $0x2a0] sm:$0xff]
        %v3264 = vld [vmem:[%s284 + $0x2a8] sm:$0xff]
        %v3265 = vld [vmem:[%s284 + $0x2b0] sm:$0xff]
        %v3266 = vld [vmem:[%s284 + $0x2b8] sm:$0xff]
        %v3267 = vld [vmem:[%s284 + $0x2c0] sm:$0xff]
        %v3268 = vld [vmem:[%s284 + $0x2c8] sm:$0xff]
        %v3269 = vld [vmem:[%s284 + $0x2d0] sm:$0xff]
        %v3270 = vld [vmem:[%s284 + $0x2d8] sm:$0xff]
        %v3271 = vld [vmem:[%s284 + $0x2e0] sm:$0xff]
        %v3272 = vld [vmem:[%s284 + $0x2e8] sm:$0xff]
        %v3273 = vld [vmem:[%s284 + $0x2f0] sm:$0xff]
        %v3274 = vld [vmem:[%s284 + $0x2f8] sm:$0xff]
        %v3275 = vld [vmem:[%s284 + $0x300] sm:$0xff]
        %v3276 = vld [vmem:[%s284 + $0x308] sm:$0xff]
        %v3277 = vld [vmem:[%s284 + $0x310] sm:$0xff]
        %v3278 = vld [vmem:[%s284 + $0x318] sm:$0xff]
        %v3279 = vld [vmem:[%s284 + $0x320] sm:$0xff]
        %v3280 = vld [vmem:[%s284 + $0x328] sm:$0xff]
        %v3281 = vld [vmem:[%s284 + $0x330] sm:$0xff]
        %v3282 = vld [vmem:[%s284 + $0x338] sm:$0xff]
        %v3283 = vld [vmem:[%s284 + $0x340] sm:$0xff]
        %v3284 = vld [vmem:[%s284 + $0x348] sm:$0xff]
        %v3285 = vld [vmem:[%s284 + $0x350] sm:$0xff]
        %v3286 = vld [vmem:[%s284 + $0x358] sm:$0xff]
        %v3287 = vld [vmem:[%s284 + $0x360] sm:$0xff]
        %v3288 = vld [vmem:[%s284 + $0x368] sm:$0xff]
        %v3289 = vld [vmem:[%s284 + $0x370] sm:$0xff]
        %v3290 = vld [vmem:[%s284 + $0x378] sm:$0xff]
        %v3291 = vld [vmem:[%s284 + $0x380] sm:$0xff]
        %v3292 = vld [vmem:[%s284 + $0x388] sm:$0xff]
        %v3293 = vld [vmem:[%s284 + $0x390] sm:$0xff]
        %v3294 = vld [vmem:[%s284 + $0x398] sm:$0xff]
        %v3295 = vld [vmem:[%s284 + $0x3a0] sm:$0xff]
        %v3296 = vld [vmem:[%s284 + $0x3a8] sm:$0xff]
        %v3297 = vld [vmem:[%s284 + $0x3b0] sm:$0xff]
        %v3298 = vld [vmem:[%s284 + $0x3b8] sm:$0xff]
        %v3299 = vld [vmem:[%s284 + $0x3c0] sm:$0xff]
        %v3300 = vld [vmem:[%s284 + $0x3c8] sm:$0xff]
        %v3301 = vld [vmem:[%s284 + $0x3d0] sm:$0xff]
        %v3302 = vld [vmem:[%s284 + $0x3d8] sm:$0xff]
        %v3303 = vld [vmem:[%s284 + $0x3e0] sm:$0xff]
        %v3304 = vld [vmem:[%s284 + $0x3e8] sm:$0xff]
        %v3305 = vld [vmem:[%s284 + $0x3f0] sm:$0xff]
        %v3306 = vld [vmem:[%s284 + $0x3f8] sm:$0xff]
        %3307 = vmatprep.subr.mxu0 0.0
        %3308 = vmatpush1.msra.mxu0 %v3179
        %3309 = vmatprep.subr.mxu0 0.0
        %3310 = vmatpush1.msra.mxu0 %v3180
        %3311 = vmatprep.subr.mxu0 0.0
        %3312 = vmatpush1.msra.mxu0 %v3181
        %3313 = vmatprep.subr.mxu0 0.0
        %3314 = vmatpush1.msra.mxu0 %v3182
        %3315 = vmatprep.subr.mxu0 0.0
        %3316 = vmatpush1.msra.mxu0 %v3183
        %3317 = vmatprep.subr.mxu0 0.0
        %3318 = vmatpush1.msra.mxu0 %v3184
        %3319 = vmatprep.subr.mxu0 0.0
        %3320 = vmatpush1.msra.mxu0 %v3185
        %3321 = vmatprep.subr.mxu0 0.0
        %3322 = vmatpush1.msra.mxu0 %v3186
        %3323 = vmatprep.subr.mxu0 0.0
        %3324 = vmatpush1.msra.mxu0 %v3187
        %3325 = vmatprep.subr.mxu0 0.0
        %3326 = vmatpush1.msra.mxu0 %v3188
        %3327 = vmatprep.subr.mxu0 0.0
        %3328 = vmatpush1.msra.mxu0 %v3189
        %3329 = vmatprep.subr.mxu0 0.0
        %3330 = vmatpush1.msra.mxu0 %v3190
        %3331 = vmatprep.subr.mxu0 0.0
        %3332 = vmatpush1.msra.mxu0 %v3191
        %3333 = vmatprep.subr.mxu0 0.0
        %3334 = vmatpush1.msra.mxu0 %v3192
        %3335 = vmatprep.subr.mxu0 0.0
        %3336 = vmatpush1.msra.mxu0 %v3193
        %3337 = vmatprep.subr.mxu0 0.0
        %3338 = vmatpush1.msra.mxu0 %v3194
        %3339 = vmatprep.subr.mxu0 0.0
        %3340 = vmatpush1.msra.mxu0 %v3195
        %3341 = vmatprep.subr.mxu0 0.0
        %3342 = vmatpush1.msra.mxu0 %v3196
        %3343 = vmatprep.subr.mxu0 0.0
        %3344 = vmatpush1.msra.mxu0 %v3197
        %3345 = vmatprep.subr.mxu0 0.0
        %3346 = vmatpush1.msra.mxu0 %v3198
        %3347 = vmatprep.subr.mxu0 0.0
        %3348 = vmatpush1.msra.mxu0 %v3199
        %3349 = vmatprep.subr.mxu0 0.0
        %3350 = vmatpush1.msra.mxu0 %v3200
        %3351 = vmatprep.subr.mxu0 0.0
        %3352 = vmatpush1.msra.mxu0 %v3201
        %3353 = vmatprep.subr.mxu0 0.0
        %3354 = vmatpush1.msra.mxu0 %v3202
        %3355 = vmatprep.subr.mxu0 0.0
        %3356 = vmatpush1.msra.mxu0 %v3203
        %3357 = vmatprep.subr.mxu0 0.0
        %3358 = vmatpush1.msra.mxu0 %v3204
        %3359 = vmatprep.subr.mxu0 0.0
        %3360 = vmatpush1.msra.mxu0 %v3205
        %3361 = vmatprep.subr.mxu0 0.0
        %3362 = vmatpush1.msra.mxu0 %v3206
        %3363 = vmatprep.subr.mxu0 0.0
        %3364 = vmatpush1.msra.mxu0 %v3207
        %3365 = vmatprep.subr.mxu0 0.0
        %3366 = vmatpush1.msra.mxu0 %v3208
        %3367 = vmatprep.subr.mxu0 0.0
        %3368 = vmatpush1.msra.mxu0 %v3209
        %3369 = vmatprep.subr.mxu0 0.0
        %3370 = vmatpush1.msra.mxu0 %v3210
        %3371 = vmatprep.mubr.f32.mxu0 %v2924
        %3372 = vmatmul.mubr.f32.gmra.mrb[0].mxu0 %v2923
        %v3373 = vpop.f32.mrb[0].mxu0
        %v3374 = vadd.f32 0.0, %v3373
        %v3375 = vpop.f32.mrb[0].mxu0
        %3376 = vmatprep.mubr.f32.mxu0 %v2932
        %3377 = vmatmul.mubr.f32.gmra.mrb[0].mxu0 %v2931
        %v3378 = vpop.f32.mrb[0].mxu0
        %v3379 = vadd.f32 0.0, %v3378
        %v3380 = vpop.f32.mrb[0].mxu0
        %3381 = vmatprep.mubr.f32.mxu0 %v2940
        %3382 = vmatmul.mubr.f32.gmra.mrb[0].mxu0 %v2939
        %v3383 = vpop.f32.mrb[0].mxu0
        %v3384 = vadd.f32 0.0, %v3383
        %v3385 = vpop.f32.mrb[0].mxu0
        %3386 = vmatprep.mubr.f32.mxu0 %v2948
        %3387 = vmatmul.mubr.f32.gmra.mrb[0].mxu0 %v2947
        %v3388 = vpop.f32.mrb[0].mxu0
        %v3389 = vadd.f32 0.0, %v3388
        %v3390 = vpop.f32.mrb[0].mxu0
        %3391 = vmatprep.mubr.f32.mxu0 %v2956
        %3392 = vmatmul.mubr.f32.gmra.mrb[0].mxu0 %v2955
        %v3393 = vpop.f32.mrb[0].mxu0
        %v3394 = vadd.f32 0.0, %v3393
        %v3395 = vpop.f32.mrb[0].mxu0
        %3396 = vmatprep.mubr.f32.mxu0 %v2964
        %3397 = vmatmul.mubr.f32.gmra.mrb[0].mxu0 %v2963
        %v3398 = vpop.f32.mrb[0].mxu0
        %v3399 = vadd.f32 0.0, %v3398
        %v3400 = vpop.f32.mrb[0].mxu0
        %3401 = vmatprep.mubr.f32.mxu0 %v2972
        %3402 = vmatmul.mubr.f32.gmra.mrb[0].mxu0 %v2971
        %v3403 = vpop.f32.mrb[0].mxu0
        %v3404 = vadd.f32 0.0, %v3403
        %v3405 = vpop.f32.mrb[0].mxu0
        %3406 = vmatprep.mubr.f32.mxu0 %v2980
        %3407 = vmatmul.mubr.f32.gmra.mrb[0].mxu0 %v2979
        %v3408 = vpop.f32.mrb[0].mxu0
        %v3409 = vadd.f32 0.0, %v3408
        %v3410 = vpop.f32.mrb[0].mxu0
        %3411 = vmatprep.mubr.f32.mxu0 %v2988
        %3412 = vmatmul.mubr.f32.gmra.mrb[0].mxu0 %v2987
        %v3413 = vpop.f32.mrb[0].mxu0
        %v3414 = vadd.f32 0.0, %v3413
        %v3415 = vpop.f32.mrb[0].mxu0
        %3416 = vmatprep.mubr.f32.mxu0 %v2996
        %3417 = vmatmul.mubr.f32.gmra.mrb[0].mxu0 %v2995
        %v3418 = vpop.f32.mrb[0].mxu0
        %v3419 = vadd.f32 0.0, %v3418
        %v3420 = vpop.f32.mrb[0].mxu0
        %3421 = vmatprep.mubr.f32.mxu0 %v3004
        %3422 = vmatmul.mubr.f32.gmra.mrb[0].mxu0 %v3003
        %v3423 = vpop.f32.mrb[0].mxu0
        %v3424 = vadd.f32 0.0, %v3423
        %v3425 = vpop.f32.mrb[0].mxu0
        %3426 = vmatprep.mubr.f32.mxu0 %v3012
        %3427 = vmatmul.mubr.f32.gmra.mrb[0].mxu0 %v3011
        %v3428 = vpop.f32.mrb[0].mxu0
        %v3429 = vadd.f32 0.0, %v3428
        %v3430 = vpop.f32.mrb[0].mxu0
        %3431 = vmatprep.mubr.f32.mxu0 %v3020
        %3432 = vmatmul.mubr.f32.gmra.mrb[0].mxu0 %v3019
        %v3433 = vpop.f32.mrb[0].mxu0
        %v3434 = vadd.f32 0.0, %v3433
        %v3435 = vpop.f32.mrb[0].mxu0
        %3436 = vmatprep.mubr.f32.mxu0 %v3028
        %3437 = vmatmul.mubr.f32.gmra.mrb[0].mxu0 %v3027
        %v3438 = vpop.f32.mrb[0].mxu0
        %v3439 = vadd.f32 0.0, %v3438
        %v3440 = vpop.f32.mrb[0].mxu0
        %3441 = vmatprep.mubr.f32.mxu0 %v3036
        %3442 = vmatmul.mubr.f32.gmra.mrb[0].mxu0 %v3035
        %v3443 = vpop.f32.mrb[0].mxu0
        %v3444 = vadd.f32 0.0, %v3443
        %v3445 = vpop.f32.mrb[0].mxu0
        %3446 = vmatprep.mubr.f32.mxu0 %v3044
        %3447 = vmatmul.mubr.f32.gmra.mrb[0].mxu0 %v3043
        %v3448 = vpop.f32.mrb[0].mxu0
        %v3449 = vadd.f32 0.0, %v3448
        %v3450 = vpop.f32.mrb[0].mxu0
        %3451 = vmatprep.mubr.f32.mxu0 %v3052
        %3452 = vmatmul.mubr.f32.gmra.mrb[0].mxu0 %v3051
        %v3453 = vpop.f32.mrb[0].mxu0
        %v3454 = vadd.f32 0.0, %v3453
        %v3455 = vpop.f32.mrb[0].mxu0
        %3456 = vmatprep.mubr.f32.mxu0 %v3060
        %3457 = vmatmul.mubr.f32.gmra.mrb[0].mxu0 %v3059
        %v3458 = vpop.f32.mrb[0].mxu0
        %v3459 = vadd.f32 0.0, %v3458
        %v3460 = vpop.f32.mrb[0].mxu0
        %3461 = vmatprep.mubr.f32.mxu0 %v3068
        %3462 = vmatmul.mubr.f32.gmra.mrb[0].mxu0 %v3067
        %v3463 = vpop.f32.mrb[0].mxu0
        %v3464 = vadd.f32 0.0, %v3463
        %v3465 = vpop.f32.mrb[0].mxu0
        %3466 = vmatprep.mubr.f32.mxu0 %v3076
        %3467 = vmatmul.mubr.f32.gmra.mrb[0].mxu0 %v3075
        %v3468 = vpop.f32.mrb[0].mxu0
        %v3469 = vadd.f32 0.0, %v3468
        %v3470 = vpop.f32.mrb[0].mxu0
        %3471 = vmatprep.mubr.f32.mxu0 %v3084
        %3472 = vmatmul.mubr.f32.gmra.mrb[0].mxu0 %v3083
        %v3473 = vpop.f32.mrb[0].mxu0
        %v3474 = vadd.f32 0.0, %v3473
        %v3475 = vpop.f32.mrb[0].mxu0
        %3476 = vmatprep.mubr.f32.mxu0 %v3092
        %3477 = vmatmul.mubr.f32.gmra.mrb[0].mxu0 %v3091
        %v3478 = vpop.f32.mrb[0].mxu0
        %v3479 = vadd.f32 0.0, %v3478
        %v3480 = vpop.f32.mrb[0].mxu0
        %3481 = vmatprep.mubr.f32.mxu0 %v3100
        %3482 = vmatmul.mubr.f32.gmra.mrb[0].mxu0 %v3099
        %v3483 = vpop.f32.mrb[0].mxu0
        %v3484 = vadd.f32 0.0, %v3483
        %v3485 = vpop.f32.mrb[0].mxu0
        %3486 = vmatprep.mubr.f32.mxu0 %v3108
        %3487 = vmatmul.mubr.f32.gmra.mrb[0].mxu0 %v3107
        %v3488 = vpop.f32.mrb[0].mxu0
        %v3489 = vadd.f32 0.0, %v3488
        %v3490 = vpop.f32.mrb[0].mxu0
        %3491 = vmatprep.mubr.f32.mxu0 %v3116
        %3492 = vmatmul.mubr.f32.gmra.mrb[0].mxu0 %v3115
        %v3493 = vpop.f32.mrb[0].mxu0
        %v3494 = vadd.f32 0.0, %v3493
        %v3495 = vpop.f32.mrb[0].mxu0
        %3496 = vmatprep.mubr.f32.mxu0 %v3124
        %3497 = vmatmul.mubr.f32.gmra.mrb[0].mxu0 %v3123
        %v3498 = vpop.f32.mrb[0].mxu0
        %v3499 = vadd.f32 0.0, %v3498
        %v3500 = vpop.f32.mrb[0].mxu0
        %3501 = vmatprep.mubr.f32.mxu0 %v3132
        %3502 = vmatmul.mubr.f32.gmra.mrb[0].mxu0 %v3131
        %v3503 = vpop.f32.mrb[0].mxu0
        %v3504 = vadd.f32 0.0, %v3503
        %v3505 = vpop.f32.mrb[0].mxu0
        %3506 = vmatprep.mubr.f32.mxu0 %v3140
        %3507 = vmatmul.mubr.f32.gmra.mrb[0].mxu0 %v3139
        %v3508 = vpop.f32.mrb[0].mxu0
        %v3509 = vadd.f32 0.0, %v3508
        %v3510 = vpop.f32.mrb[0].mxu0
        %3511 = vmatprep.mubr.f32.mxu0 %v3148
        %3512 = vmatmul.mubr.f32.gmra.mrb[0].mxu0 %v3147
        %v3513 = vpop.f32.mrb[0].mxu0
        %v3514 = vadd.f32 0.0, %v3513
        %v3515 = vpop.f32.mrb[0].mxu0
        %3516 = vmatprep.mubr.f32.mxu0 %v3156
        %3517 = vmatmul.mubr.f32.gmra.mrb[0].mxu0 %v3155
        %v3518 = vpop.f32.mrb[0].mxu0
        %v3519 = vadd.f32 0.0, %v3518
        %v3520 = vpop.f32.mrb[0].mxu0
        %3521 = vmatprep.mubr.f32.mxu0 %v3164
        %3522 = vmatmul.mubr.f32.gmra.mrb[0].mxu0 %v3163
        %v3523 = vpop.f32.mrb[0].mxu0
        %v3524 = vadd.f32 0.0, %v3523
        %v3525 = vpop.f32.mrb[0].mxu0
        %3526 = vmatprep.mubr.f32.mxu0 %v3172
        %3527 = vmatmul.mubr.f32.gmra.mrb[0].mxu0 %v3171
        %v3528 = vpop.f32.mrb[0].mxu0
        %v3529 = vadd.f32 0.0, %v3528
        %v3530 = vpop.f32.mrb[0].mxu0
        %3531 = vdwg.mxu0
        %3532 = vmatprep.subr.mxu0 0.0
        %3533 = vmatpush1.msra.mxu0 %v3211
        %3534 = vmatprep.subr.mxu0 0.0
        %3535 = vmatpush1.msra.mxu0 %v3212
        %3536 = vmatprep.subr.mxu0 0.0
        %3537 = vmatpush1.msra.mxu0 %v3213
        %3538 = vmatprep.subr.mxu0 0.0
        %3539 = vmatpush1.msra.mxu0 %v3214
        %3540 = vmatprep.subr.mxu0 0.0
        %3541 = vmatpush1.msra.mxu0 %v3215
        %3542 = vmatprep.subr.mxu0 0.0
        %3543 = vmatpush1.msra.mxu0 %v3216
        %3544 = vmatprep.subr.mxu0 0.0
        %3545 = vmatpush1.msra.mxu0 %v3217
        %3546 = vmatprep.subr.mxu0 0.0
        %3547 = vmatpush1.msra.mxu0 %v3218
        %3548 = vmatprep.subr.mxu0 0.0
        %3549 = vmatpush1.msra.mxu0 %v3219
        %3550 = vmatprep.subr.mxu0 0.0
        %3551 = vmatpush1.msra.mxu0 %v3220
        %3552 = vmatprep.subr.mxu0 0.0
        %3553 = vmatpush1.msra.mxu0 %v3221
        %3554 = vmatprep.subr.mxu0 0.0
        %3555 = vmatpush1.msra.mxu0 %v3222
        %3556 = vmatprep.subr.mxu0 0.0
        %3557 = vmatpush1.msra.mxu0 %v3223
        %3558 = vmatprep.subr.mxu0 0.0
        %3559 = vmatpush1.msra.mxu0 %v3224
        %3560 = vmatprep.subr.mxu0 0.0
        %3561 = vmatpush1.msra.mxu0 %v3225
        %3562 = vmatprep.subr.mxu0 0.0
        %3563 = vmatpush1.msra.mxu0 %v3226
        %3564 = vmatprep.subr.mxu0 0.0
        %3565 = vmatpush1.msra.mxu0 %v3227
        %3566 = vmatprep.subr.mxu0 0.0
        %3567 = vmatpush1.msra.mxu0 %v3228
        %3568 = vmatprep.subr.mxu0 0.0
        %3569 = vmatpush1.msra.mxu0 %v3229
        %3570 = vmatprep.subr.mxu0 0.0
        %3571 = vmatpush1.msra.mxu0 %v3230
        %3572 = vmatprep.subr.mxu0 0.0
        %3573 = vmatpush1.msra.mxu0 %v3231
        %3574 = vmatprep.subr.mxu0 0.0
        %3575 = vmatpush1.msra.mxu0 %v3232
        %3576 = vmatprep.subr.mxu0 0.0
        %3577 = vmatpush1.msra.mxu0 %v3233
        %3578 = vmatprep.subr.mxu0 0.0
        %3579 = vmatpush1.msra.mxu0 %v3234
        %3580 = vmatprep.subr.mxu0 0.0
        %3581 = vmatpush1.msra.mxu0 %v3235
        %3582 = vmatprep.subr.mxu0 0.0
        %3583 = vmatpush1.msra.mxu0 %v3236
        %3584 = vmatprep.subr.mxu0 0.0
        %3585 = vmatpush1.msra.mxu0 %v3237
        %3586 = vmatprep.subr.mxu0 0.0
        %3587 = vmatpush1.msra.mxu0 %v3238
        %3588 = vmatprep.subr.mxu0 0.0
        %3589 = vmatpush1.msra.mxu0 %v3239
        %3590 = vmatprep.subr.mxu0 0.0
        %3591 = vmatpush1.msra.mxu0 %v3240
        %3592 = vmatprep.subr.mxu0 0.0
        %3593 = vmatpush1.msra.mxu0 %v3241
        %3594 = vmatprep.subr.mxu0 0.0
        %3595 = vmatpush1.msra.mxu0 %v3242
        %3596 = vmatprep.mubr.f32.mxu0 %v2926
        %3597 = vmatmul.mubr.f32.gmra.mrb[0].mxu0 %v2925
        %v3598 = vpop.f32.mrb[0].mxu0
        %v3599 = vadd.f32 %v3374, %v3598
        %v3600 = vpop.f32.mrb[0].mxu0
        %3601 = vmatprep.mubr.f32.mxu0 %v2934
        %3602 = vmatmul.mubr.f32.gmra.mrb[0].mxu0 %v2933
        %v3603 = vpop.f32.mrb[0].mxu0
        %v3604 = vadd.f32 %v3379, %v3603
        %v3605 = vpop.f32.mrb[0].mxu0
        %3606 = vmatprep.mubr.f32.mxu0 %v2942
        %3607 = vmatmul.mubr.f32.gmra.mrb[0].mxu0 %v2941
        %v3608 = vpop.f32.mrb[0].mxu0
        %v3609 = vadd.f32 %v3384, %v3608
        %v3610 = vpop.f32.mrb[0].mxu0
        %3611 = vmatprep.mubr.f32.mxu0 %v2950
        %3612 = vmatmul.mubr.f32.gmra.mrb[0].mxu0 %v2949
        %v3613 = vpop.f32.mrb[0].mxu0
        %v3614 = vadd.f32 %v3389, %v3613
        %v3615 = vpop.f32.mrb[0].mxu0
        %3616 = vmatprep.mubr.f32.mxu0 %v2958
        %3617 = vmatmul.mubr.f32.gmra.mrb[0].mxu0 %v2957
        %v3618 = vpop.f32.mrb[0].mxu0
        %v3619 = vadd.f32 %v3394, %v3618
        %v3620 = vpop.f32.mrb[0].mxu0
        %3621 = vmatprep.mubr.f32.mxu0 %v2966
        %3622 = vmatmul.mubr.f32.gmra.mrb[0].mxu0 %v2965
        %v3623 = vpop.f32.mrb[0].mxu0
        %v3624 = vadd.f32 %v3399, %v3623
        %v3625 = vpop.f32.mrb[0].mxu0
        %3626 = vmatprep.mubr.f32.mxu0 %v2974
        %3627 = vmatmul.mubr.f32.gmra.mrb[0].mxu0 %v2973
        %v3628 = vpop.f32.mrb[0].mxu0
        %v3629 = vadd.f32 %v3404, %v3628
        %v3630 = vpop.f32.mrb[0].mxu0
        %3631 = vmatprep.mubr.f32.mxu0 %v2982
        %3632 = vmatmul.mubr.f32.gmra.mrb[0].mxu0 %v2981
        %v3633 = vpop.f32.mrb[0].mxu0
        %v3634 = vadd.f32 %v3409, %v3633
        %v3635 = vpop.f32.mrb[0].mxu0
        %3636 = vmatprep.mubr.f32.mxu0 %v2990
        %3637 = vmatmul.mubr.f32.gmra.mrb[0].mxu0 %v2989
        %v3638 = vpop.f32.mrb[0].mxu0
        %v3639 = vadd.f32 %v3414, %v3638
        %v3640 = vpop.f32.mrb[0].mxu0
        %3641 = vmatprep.mubr.f32.mxu0 %v2998
        %3642 = vmatmul.mubr.f32.gmra.mrb[0].mxu0 %v2997
        %v3643 = vpop.f32.mrb[0].mxu0
        %v3644 = vadd.f32 %v3419, %v3643
        %v3645 = vpop.f32.mrb[0].mxu0
        %3646 = vmatprep.mubr.f32.mxu0 %v3006
        %3647 = vmatmul.mubr.f32.gmra.mrb[0].mxu0 %v3005
        %v3648 = vpop.f32.mrb[0].mxu0
        %v3649 = vadd.f32 %v3424, %v3648
        %v3650 = vpop.f32.mrb[0].mxu0
        %3651 = vmatprep.mubr.f32.mxu0 %v3014
        %3652 = vmatmul.mubr.f32.gmra.mrb[0].mxu0 %v3013
        %v3653 = vpop.f32.mrb[0].mxu0
        %v3654 = vadd.f32 %v3429, %v3653
        %v3655 = vpop.f32.mrb[0].mxu0
        %3656 = vmatprep.mubr.f32.mxu0 %v3022
        %3657 = vmatmul.mubr.f32.gmra.mrb[0].mxu0 %v3021
        %v3658 = vpop.f32.mrb[0].mxu0
        %v3659 = vadd.f32 %v3434, %v3658
        %v3660 = vpop.f32.mrb[0].mxu0
        %3661 = vmatprep.mubr.f32.mxu0 %v3030
        %3662 = vmatmul.mubr.f32.gmra.mrb[0].mxu0 %v3029
        %v3663 = vpop.f32.mrb[0].mxu0
        %v3664 = vadd.f32 %v3439, %v3663
        %v3665 = vpop.f32.mrb[0].mxu0
        %3666 = vmatprep.mubr.f32.mxu0 %v3038
        %3667 = vmatmul.mubr.f32.gmra.mrb[0].mxu0 %v3037
        %v3668 = vpop.f32.mrb[0].mxu0
        %v3669 = vadd.f32 %v3444, %v3668
        %v3670 = vpop.f32.mrb[0].mxu0
        %3671 = vmatprep.mubr.f32.mxu0 %v3046
        %3672 = vmatmul.mubr.f32.gmra.mrb[0].mxu0 %v3045
        %v3673 = vpop.f32.mrb[0].mxu0
        %v3674 = vadd.f32 %v3449, %v3673
        %v3675 = vpop.f32.mrb[0].mxu0
        %3676 = vmatprep.mubr.f32.mxu0 %v3054
        %3677 = vmatmul.mubr.f32.gmra.mrb[0].mxu0 %v3053
        %v3678 = vpop.f32.mrb[0].mxu0
        %v3679 = vadd.f32 %v3454, %v3678
        %v3680 = vpop.f32.mrb[0].mxu0
        %3681 = vmatprep.mubr.f32.mxu0 %v3062
        %3682 = vmatmul.mubr.f32.gmra.mrb[0].mxu0 %v3061
        %v3683 = vpop.f32.mrb[0].mxu0
        %v3684 = vadd.f32 %v3459, %v3683
        %v3685 = vpop.f32.mrb[0].mxu0
        %3686 = vmatprep.mubr.f32.mxu0 %v3070
        %3687 = vmatmul.mubr.f32.gmra.mrb[0].mxu0 %v3069
        %v3688 = vpop.f32.mrb[0].mxu0
        %v3689 = vadd.f32 %v3464, %v3688
        %v3690 = vpop.f32.mrb[0].mxu0
        %3691 = vmatprep.mubr.f32.mxu0 %v3078
        %3692 = vmatmul.mubr.f32.gmra.mrb[0].mxu0 %v3077
        %v3693 = vpop.f32.mrb[0].mxu0
        %v3694 = vadd.f32 %v3469, %v3693
        %v3695 = vpop.f32.mrb[0].mxu0
        %3696 = vmatprep.mubr.f32.mxu0 %v3086
        %3697 = vmatmul.mubr.f32.gmra.mrb[0].mxu0 %v3085
        %v3698 = vpop.f32.mrb[0].mxu0
        %v3699 = vadd.f32 %v3474, %v3698
        %v3700 = vpop.f32.mrb[0].mxu0
        %3701 = vmatprep.mubr.f32.mxu0 %v3094
        %3702 = vmatmul.mubr.f32.gmra.mrb[0].mxu0 %v3093
        %v3703 = vpop.f32.mrb[0].mxu0
        %v3704 = vadd.f32 %v3479, %v3703
        %v3705 = vpop.f32.mrb[0].mxu0
        %3706 = vmatprep.mubr.f32.mxu0 %v3102
        %3707 = vmatmul.mubr.f32.gmra.mrb[0].mxu0 %v3101
        %v3708 = vpop.f32.mrb[0].mxu0
        %v3709 = vadd.f32 %v3484, %v3708
        %v3710 = vpop.f32.mrb[0].mxu0
        %3711 = vmatprep.mubr.f32.mxu0 %v3110
        %3712 = vmatmul.mubr.f32.gmra.mrb[0].mxu0 %v3109
        %v3713 = vpop.f32.mrb[0].mxu0
        %v3714 = vadd.f32 %v3489, %v3713
        %v3715 = vpop.f32.mrb[0].mxu0
        %3716 = vmatprep.mubr.f32.mxu0 %v3118
        %3717 = vmatmul.mubr.f32.gmra.mrb[0].mxu0 %v3117
        %v3718 = vpop.f32.mrb[0].mxu0
        %v3719 = vadd.f32 %v3494, %v3718
        %v3720 = vpop.f32.mrb[0].mxu0
        %3721 = vmatprep.mubr.f32.mxu0 %v3126
        %3722 = vmatmul.mubr.f32.gmra.mrb[0].mxu0 %v3125
        %v3723 = vpop.f32.mrb[0].mxu0
        %v3724 = vadd.f32 %v3499, %v3723
        %v3725 = vpop.f32.mrb[0].mxu0
        %3726 = vmatprep.mubr.f32.mxu0 %v3134
        %3727 = vmatmul.mubr.f32.gmra.mrb[0].mxu0 %v3133
        %v3728 = vpop.f32.mrb[0].mxu0
        %v3729 = vadd.f32 %v3504, %v3728
        %v3730 = vpop.f32.mrb[0].mxu0
        %3731 = vmatprep.mubr.f32.mxu0 %v3142
        %3732 = vmatmul.mubr.f32.gmra.mrb[0].mxu0 %v3141
        %v3733 = vpop.f32.mrb[0].mxu0
        %v3734 = vadd.f32 %v3509, %v3733
        %v3735 = vpop.f32.mrb[0].mxu0
        %3736 = vmatprep.mubr.f32.mxu0 %v3150
        %3737 = vmatmul.mubr.f32.gmra.mrb[0].mxu0 %v3149
        %v3738 = vpop.f32.mrb[0].mxu0
        %v3739 = vadd.f32 %v3514, %v3738
        %v3740 = vpop.f32.mrb[0].mxu0
        %3741 = vmatprep.mubr.f32.mxu0 %v3158
        %3742 = vmatmul.mubr.f32.gmra.mrb[0].mxu0 %v3157
        %v3743 = vpop.f32.mrb[0].mxu0
        %v3744 = vadd.f32 %v3519, %v3743
        %v3745 = vpop.f32.mrb[0].mxu0
        %3746 = vmatprep.mubr.f32.mxu0 %v3166
        %3747 = vmatmul.mubr.f32.gmra.mrb[0].mxu0 %v3165
        %v3748 = vpop.f32.mrb[0].mxu0
        %v3749 = vadd.f32 %v3524, %v3748
        %v3750 = vpop.f32.mrb[0].mxu0
        %3751 = vmatprep.mubr.f32.mxu0 %v3174
        %3752 = vmatmul.mubr.f32.gmra.mrb[0].mxu0 %v3173
        %v3753 = vpop.f32.mrb[0].mxu0
        %v3754 = vadd.f32 %v3529, %v3753
        %v3755 = vpop.f32.mrb[0].mxu0
        %3756 = vdwg.mxu0
        %3757 = vmatprep.subr.mxu0 0.0
        %3758 = vmatpush1.msra.mxu0 %v3243
        %3759 = vmatprep.subr.mxu0 0.0
        %3760 = vmatpush1.msra.mxu0 %v3244
        %3761 = vmatprep.subr.mxu0 0.0
        %3762 = vmatpush1.msra.mxu0 %v3245
        %3763 = vmatprep.subr.mxu0 0.0
        %3764 = vmatpush1.msra.mxu0 %v3246
        %3765 = vmatprep.subr.mxu0 0.0
        %3766 = vmatpush1.msra.mxu0 %v3247
        %3767 = vmatprep.subr.mxu0 0.0
        %3768 = vmatpush1.msra.mxu0 %v3248
        %3769 = vmatprep.subr.mxu0 0.0
        %3770 = vmatpush1.msra.mxu0 %v3249
        %3771 = vmatprep.subr.mxu0 0.0
        %3772 = vmatpush1.msra.mxu0 %v3250
        %3773 = vmatprep.subr.mxu0 0.0
        %3774 = vmatpush1.msra.mxu0 %v3251
        %3775 = vmatprep.subr.mxu0 0.0
        %3776 = vmatpush1.msra.mxu0 %v3252
        %3777 = vmatprep.subr.mxu0 0.0
        %3778 = vmatpush1.msra.mxu0 %v3253
        %3779 = vmatprep.subr.mxu0 0.0
        %3780 = vmatpush1.msra.mxu0 %v3254
        %3781 = vmatprep.subr.mxu0 0.0
        %3782 = vmatpush1.msra.mxu0 %v3255
        %3783 = vmatprep.subr.mxu0 0.0
        %3784 = vmatpush1.msra.mxu0 %v3256
        %3785 = vmatprep.subr.mxu0 0.0
        %3786 = vmatpush1.msra.mxu0 %v3257
        %3787 = vmatprep.subr.mxu0 0.0
        %3788 = vmatpush1.msra.mxu0 %v3258
        %3789 = vmatprep.subr.mxu0 0.0
        %3790 = vmatpush1.msra.mxu0 %v3259
        %3791 = vmatprep.subr.mxu0 0.0
        %3792 = vmatpush1.msra.mxu0 %v3260
        %3793 = vmatprep.subr.mxu0 0.0
        %3794 = vmatpush1.msra.mxu0 %v3261
        %3795 = vmatprep.subr.mxu0 0.0
        %3796 = vmatpush1.msra.mxu0 %v3262
        %3797 = vmatprep.subr.mxu0 0.0
        %3798 = vmatpush1.msra.mxu0 %v3263
        %3799 = vmatprep.subr.mxu0 0.0
        %3800 = vmatpush1.msra.mxu0 %v3264
        %3801 = vmatprep.subr.mxu0 0.0
        %3802 = vmatpush1.msra.mxu0 %v3265
        %3803 = vmatprep.subr.mxu0 0.0
        %3804 = vmatpush1.msra.mxu0 %v3266
        %3805 = vmatprep.subr.mxu0 0.0
        %3806 = vmatpush1.msra.mxu0 %v3267
        %3807 = vmatprep.subr.mxu0 0.0
        %3808 = vmatpush1.msra.mxu0 %v3268
        %3809 = vmatprep.subr.mxu0 0.0
        %3810 = vmatpush1.msra.mxu0 %v3269
        %3811 = vmatprep.subr.mxu0 0.0
        %3812 = vmatpush1.msra.mxu0 %v3270
        %3813 = vmatprep.subr.mxu0 0.0
        %3814 = vmatpush1.msra.mxu0 %v3271
        %3815 = vmatprep.subr.mxu0 0.0
        %3816 = vmatpush1.msra.mxu0 %v3272
        %3817 = vmatprep.subr.mxu0 0.0
        %3818 = vmatpush1.msra.mxu0 %v3273
        %3819 = vmatprep.subr.mxu0 0.0
        %3820 = vmatpush1.msra.mxu0 %v3274
        %3821 = vmatprep.mubr.f32.mxu0 %v2928
        %3822 = vmatmul.mubr.f32.gmra.mrb[0].mxu0 %v2927
        %v3823 = vpop.f32.mrb[0].mxu0
        %v3824 = vadd.f32 %v3599, %v3823
        %v3825 = vpop.f32.mrb[0].mxu0
        %3826 = vmatprep.mubr.f32.mxu0 %v2936
        %3827 = vmatmul.mubr.f32.gmra.mrb[0].mxu0 %v2935
        %v3828 = vpop.f32.mrb[0].mxu0
        %v3829 = vadd.f32 %v3604, %v3828
        %v3830 = vpop.f32.mrb[0].mxu0
        %3831 = vmatprep.mubr.f32.mxu0 %v2944
        %3832 = vmatmul.mubr.f32.gmra.mrb[0].mxu0 %v2943
        %v3833 = vpop.f32.mrb[0].mxu0
        %v3834 = vadd.f32 %v3609, %v3833
        %v3835 = vpop.f32.mrb[0].mxu0
        %3836 = vmatprep.mubr.f32.mxu0 %v2952
        %3837 = vmatmul.mubr.f32.gmra.mrb[0].mxu0 %v2951
        %v3838 = vpop.f32.mrb[0].mxu0
        %v3839 = vadd.f32 %v3614, %v3838
        %v3840 = vpop.f32.mrb[0].mxu0
        %3841 = vmatprep.mubr.f32.mxu0 %v2960
        %3842 = vmatmul.mubr.f32.gmra.mrb[0].mxu0 %v2959
        %v3843 = vpop.f32.mrb[0].mxu0
        %v3844 = vadd.f32 %v3619, %v3843
        %v3845 = vpop.f32.mrb[0].mxu0
        %3846 = vmatprep.mubr.f32.mxu0 %v2968
        %3847 = vmatmul.mubr.f32.gmra.mrb[0].mxu0 %v2967
        %v3848 = vpop.f32.mrb[0].mxu0
        %v3849 = vadd.f32 %v3624, %v3848
        %v3850 = vpop.f32.mrb[0].mxu0
        %3851 = vmatprep.mubr.f32.mxu0 %v2976
        %3852 = vmatmul.mubr.f32.gmra.mrb[0].mxu0 %v2975
        %v3853 = vpop.f32.mrb[0].mxu0
        %v3854 = vadd.f32 %v3629, %v3853
        %v3855 = vpop.f32.mrb[0].mxu0
        %3856 = vmatprep.mubr.f32.mxu0 %v2984
        %3857 = vmatmul.mubr.f32.gmra.mrb[0].mxu0 %v2983
        %v3858 = vpop.f32.mrb[0].mxu0
        %v3859 = vadd.f32 %v3634, %v3858
        %v3860 = vpop.f32.mrb[0].mxu0
        %3861 = vmatprep.mubr.f32.mxu0 %v2992
        %3862 = vmatmul.mubr.f32.gmra.mrb[0].mxu0 %v2991
        %v3863 = vpop.f32.mrb[0].mxu0
        %v3864 = vadd.f32 %v3639, %v3863
        %v3865 = vpop.f32.mrb[0].mxu0
        %3866 = vmatprep.mubr.f32.mxu0 %v3000
        %3867 = vmatmul.mubr.f32.gmra.mrb[0].mxu0 %v2999
        %v3868 = vpop.f32.mrb[0].mxu0
        %v3869 = vadd.f32 %v3644, %v3868
        %v3870 = vpop.f32.mrb[0].mxu0
        %3871 = vmatprep.mubr.f32.mxu0 %v3008
        %3872 = vmatmul.mubr.f32.gmra.mrb[0].mxu0 %v3007
        %v3873 = vpop.f32.mrb[0].mxu0
        %v3874 = vadd.f32 %v3649, %v3873
        %v3875 = vpop.f32.mrb[0].mxu0
        %3876 = vmatprep.mubr.f32.mxu0 %v3016
        %3877 = vmatmul.mubr.f32.gmra.mrb[0].mxu0 %v3015
        %v3878 = vpop.f32.mrb[0].mxu0
        %v3879 = vadd.f32 %v3654, %v3878
        %v3880 = vpop.f32.mrb[0].mxu0
        %3881 = vmatprep.mubr.f32.mxu0 %v3024
        %3882 = vmatmul.mubr.f32.gmra.mrb[0].mxu0 %v3023
        %v3883 = vpop.f32.mrb[0].mxu0
        %v3884 = vadd.f32 %v3659, %v3883
        %v3885 = vpop.f32.mrb[0].mxu0
        %3886 = vmatprep.mubr.f32.mxu0 %v3032
        %3887 = vmatmul.mubr.f32.gmra.mrb[0].mxu0 %v3031
        %v3888 = vpop.f32.mrb[0].mxu0
        %v3889 = vadd.f32 %v3664, %v3888
        %v3890 = vpop.f32.mrb[0].mxu0
        %3891 = vmatprep.mubr.f32.mxu0 %v3040
        %3892 = vmatmul.mubr.f32.gmra.mrb[0].mxu0 %v3039
        %v3893 = vpop.f32.mrb[0].mxu0
        %v3894 = vadd.f32 %v3669, %v3893
        %v3895 = vpop.f32.mrb[0].mxu0
        %3896 = vmatprep.mubr.f32.mxu0 %v3048
        %3897 = vmatmul.mubr.f32.gmra.mrb[0].mxu0 %v3047
        %v3898 = vpop.f32.mrb[0].mxu0
        %v3899 = vadd.f32 %v3674, %v3898
        %v3900 = vpop.f32.mrb[0].mxu0
        %3901 = vmatprep.mubr.f32.mxu0 %v3056
        %3902 = vmatmul.mubr.f32.gmra.mrb[0].mxu0 %v3055
        %v3903 = vpop.f32.mrb[0].mxu0
        %v3904 = vadd.f32 %v3679, %v3903
        %v3905 = vpop.f32.mrb[0].mxu0
        %3906 = vmatprep.mubr.f32.mxu0 %v3064
        %3907 = vmatmul.mubr.f32.gmra.mrb[0].mxu0 %v3063
        %v3908 = vpop.f32.mrb[0].mxu0
        %v3909 = vadd.f32 %v3684, %v3908
        %v3910 = vpop.f32.mrb[0].mxu0
        %3911 = vmatprep.mubr.f32.mxu0 %v3072
        %3912 = vmatmul.mubr.f32.gmra.mrb[0].mxu0 %v3071
        %v3913 = vpop.f32.mrb[0].mxu0
        %v3914 = vadd.f32 %v3689, %v3913
        %v3915 = vpop.f32.mrb[0].mxu0
        %3916 = vmatprep.mubr.f32.mxu0 %v3080
        %3917 = vmatmul.mubr.f32.gmra.mrb[0].mxu0 %v3079
        %v3918 = vpop.f32.mrb[0].mxu0
        %v3919 = vadd.f32 %v3694, %v3918
        %v3920 = vpop.f32.mrb[0].mxu0
        %3921 = vmatprep.mubr.f32.mxu0 %v3088
        %3922 = vmatmul.mubr.f32.gmra.mrb[0].mxu0 %v3087
        %v3923 = vpop.f32.mrb[0].mxu0
        %v3924 = vadd.f32 %v3699, %v3923
        %v3925 = vpop.f32.mrb[0].mxu0
        %3926 = vmatprep.mubr.f32.mxu0 %v3096
        %3927 = vmatmul.mubr.f32.gmra.mrb[0].mxu0 %v3095
        %v3928 = vpop.f32.mrb[0].mxu0
        %v3929 = vadd.f32 %v3704, %v3928
        %v3930 = vpop.f32.mrb[0].mxu0
        %3931 = vmatprep.mubr.f32.mxu0 %v3104
        %3932 = vmatmul.mubr.f32.gmra.mrb[0].mxu0 %v3103
        %v3933 = vpop.f32.mrb[0].mxu0
        %v3934 = vadd.f32 %v3709, %v3933
        %v3935 = vpop.f32.mrb[0].mxu0
        %3936 = vmatprep.mubr.f32.mxu0 %v3112
        %3937 = vmatmul.mubr.f32.gmra.mrb[0].mxu0 %v3111
        %v3938 = vpop.f32.mrb[0].mxu0
        %v3939 = vadd.f32 %v3714, %v3938
        %v3940 = vpop.f32.mrb[0].mxu0
        %3941 = vmatprep.mubr.f32.mxu0 %v3120
        %3942 = vmatmul.mubr.f32.gmra.mrb[0].mxu0 %v3119
        %v3943 = vpop.f32.mrb[0].mxu0
        %v3944 = vadd.f32 %v3719, %v3943
        %v3945 = vpop.f32.mrb[0].mxu0
        %3946 = vmatprep.mubr.f32.mxu0 %v3128
        %3947 = vmatmul.mubr.f32.gmra.mrb[0].mxu0 %v3127
        %v3948 = vpop.f32.mrb[0].mxu0
        %v3949 = vadd.f32 %v3724, %v3948
        %v3950 = vpop.f32.mrb[0].mxu0
        %3951 = vmatprep.mubr.f32.mxu0 %v3136
        %3952 = vmatmul.mubr.f32.gmra.mrb[0].mxu0 %v3135
        %v3953 = vpop.f32.mrb[0].mxu0
        %v3954 = vadd.f32 %v3729, %v3953
        %v3955 = vpop.f32.mrb[0].mxu0
        %3956 = vmatprep.mubr.f32.mxu0 %v3144
        %3957 = vmatmul.mubr.f32.gmra.mrb[0].mxu0 %v3143
        %v3958 = vpop.f32.mrb[0].mxu0
        %v3959 = vadd.f32 %v3734, %v3958
        %v3960 = vpop.f32.mrb[0].mxu0
        %3961 = vmatprep.mubr.f32.mxu0 %v3152
        %3962 = vmatmul.mubr.f32.gmra.mrb[0].mxu0 %v3151
        %v3963 = vpop.f32.mrb[0].mxu0
        %v3964 = vadd.f32 %v3739, %v3963
        %v3965 = vpop.f32.mrb[0].mxu0
        %3966 = vmatprep.mubr.f32.mxu0 %v3160
        %3967 = vmatmul.mubr.f32.gmra.mrb[0].mxu0 %v3159
        %v3968 = vpop.f32.mrb[0].mxu0
        %v3969 = vadd.f32 %v3744, %v3968
        %v3970 = vpop.f32.mrb[0].mxu0
        %3971 = vmatprep.mubr.f32.mxu0 %v3168
        %3972 = vmatmul.mubr.f32.gmra.mrb[0].mxu0 %v3167
        %v3973 = vpop.f32.mrb[0].mxu0
        %v3974 = vadd.f32 %v3749, %v3973
        %v3975 = vpop.f32.mrb[0].mxu0
        %3976 = vmatprep.mubr.f32.mxu0 %v3176
        %3977 = vmatmul.mubr.f32.gmra.mrb[0].mxu0 %v3175
        %v3978 = vpop.f32.mrb[0].mxu0
        %v3979 = vadd.f32 %v3754, %v3978
        %v3980 = vpop.f32.mrb[0].mxu0
        %3981 = vdwg.mxu0
        %3982 = vmatprep.subr.mxu0 0.0
        %3983 = vmatpush1.msra.mxu0 %v3275
        %3984 = vmatprep.subr.mxu0 0.0
        %3985 = vmatpush1.msra.mxu0 %v3276
        %3986 = vmatprep.subr.mxu0 0.0
        %3987 = vmatpush1.msra.mxu0 %v3277
        %3988 = vmatprep.subr.mxu0 0.0
        %3989 = vmatpush1.msra.mxu0 %v3278
        %3990 = vmatprep.subr.mxu0 0.0
        %3991 = vmatpush1.msra.mxu0 %v3279
        %3992 = vmatprep.subr.mxu0 0.0
        %3993 = vmatpush1.msra.mxu0 %v3280
        %3994 = vmatprep.subr.mxu0 0.0
        %3995 = vmatpush1.msra.mxu0 %v3281
        %3996 = vmatprep.subr.mxu0 0.0
        %3997 = vmatpush1.msra.mxu0 %v3282
        %3998 = vmatprep.subr.mxu0 0.0
        %3999 = vmatpush1.msra.mxu0 %v3283
        %4000 = vmatprep.subr.mxu0 0.0
        %4001 = vmatpush1.msra.mxu0 %v3284
        %4002 = vmatprep.subr.mxu0 0.0
        %4003 = vmatpush1.msra.mxu0 %v3285
        %4004 = vmatprep.subr.mxu0 0.0
        %4005 = vmatpush1.msra.mxu0 %v3286
        %4006 = vmatprep.subr.mxu0 0.0
        %4007 = vmatpush1.msra.mxu0 %v3287
        %4008 = vmatprep.subr.mxu0 0.0
        %4009 = vmatpush1.msra.mxu0 %v3288
        %4010 = vmatprep.subr.mxu0 0.0
        %4011 = vmatpush1.msra.mxu0 %v3289
        %4012 = vmatprep.subr.mxu0 0.0
        %4013 = vmatpush1.msra.mxu0 %v3290
        %4014 = vmatprep.subr.mxu0 0.0
        %4015 = vmatpush1.msra.mxu0 %v3291
        %4016 = vmatprep.subr.mxu0 0.0
        %4017 = vmatpush1.msra.mxu0 %v3292
        %4018 = vmatprep.subr.mxu0 0.0
        %4019 = vmatpush1.msra.mxu0 %v3293
        %4020 = vmatprep.subr.mxu0 0.0
        %4021 = vmatpush1.msra.mxu0 %v3294
        %4022 = vmatprep.subr.mxu0 0.0
        %4023 = vmatpush1.msra.mxu0 %v3295
        %4024 = vmatprep.subr.mxu0 0.0
        %4025 = vmatpush1.msra.mxu0 %v3296
        %4026 = vmatprep.subr.mxu0 0.0
        %4027 = vmatpush1.msra.mxu0 %v3297
        %4028 = vmatprep.subr.mxu0 0.0
        %4029 = vmatpush1.msra.mxu0 %v3298
        %4030 = vmatprep.subr.mxu0 0.0
        %4031 = vmatpush1.msra.mxu0 %v3299
        %4032 = vmatprep.subr.mxu0 0.0
        %4033 = vmatpush1.msra.mxu0 %v3300
        %4034 = vmatprep.subr.mxu0 0.0
        %4035 = vmatpush1.msra.mxu0 %v3301
        %4036 = vmatprep.subr.mxu0 0.0
        %4037 = vmatpush1.msra.mxu0 %v3302
        %4038 = vmatprep.subr.mxu0 0.0
        %4039 = vmatpush1.msra.mxu0 %v3303
        %4040 = vmatprep.subr.mxu0 0.0
        %4041 = vmatpush1.msra.mxu0 %v3304
        %4042 = vmatprep.subr.mxu0 0.0
        %4043 = vmatpush1.msra.mxu0 %v3305
        %4044 = vmatprep.subr.mxu0 0.0
        %4045 = vmatpush1.msra.mxu0 %v3306
        %4046 = vmatprep.mubr.f32.mxu0 %v2930
        %4047 = vmatmul.mubr.f32.gmra.mrb[0].mxu0 %v2929
        %v4048 = vpop.f32.mrb[0].mxu0
        %v4049 = vadd.f32 %v3824, %v4048
        %v4050 = vpop.f32.mrb[0].mxu0
        %4051 = vmatprep.mubr.f32.mxu0 %v2938
        %4052 = vmatmul.mubr.f32.gmra.mrb[0].mxu0 %v2937
        %v4053 = vpop.f32.mrb[0].mxu0
        %v4054 = vadd.f32 %v3829, %v4053
        %v4055 = vpop.f32.mrb[0].mxu0
        %4056 = vmatprep.mubr.f32.mxu0 %v2946
        %4057 = vmatmul.mubr.f32.gmra.mrb[0].mxu0 %v2945
        %v4058 = vpop.f32.mrb[0].mxu0
        %v4059 = vadd.f32 %v3834, %v4058
        %v4060 = vpop.f32.mrb[0].mxu0
        %4061 = vmatprep.mubr.f32.mxu0 %v2954
        %4062 = vmatmul.mubr.f32.gmra.mrb[0].mxu0 %v2953
        %v4063 = vpop.f32.mrb[0].mxu0
        %v4064 = vadd.f32 %v3839, %v4063
        %v4065 = vpop.f32.mrb[0].mxu0
        %4066 = vmatprep.mubr.f32.mxu0 %v2962
        %4067 = vmatmul.mubr.f32.gmra.mrb[0].mxu0 %v2961
        %v4068 = vpop.f32.mrb[0].mxu0
        %v4069 = vadd.f32 %v3844, %v4068
        %v4070 = vpop.f32.mrb[0].mxu0
        %4071 = vmatprep.mubr.f32.mxu0 %v2970
        %4072 = vmatmul.mubr.f32.gmra.mrb[0].mxu0 %v2969
        %v4073 = vpop.f32.mrb[0].mxu0
        %v4074 = vadd.f32 %v3849, %v4073
        %v4075 = vpop.f32.mrb[0].mxu0
        %4076 = vmatprep.mubr.f32.mxu0 %v2978
        %4077 = vmatmul.mubr.f32.gmra.mrb[0].mxu0 %v2977
        %v4078 = vpop.f32.mrb[0].mxu0
        %v4079 = vadd.f32 %v3854, %v4078
        %v4080 = vpop.f32.mrb[0].mxu0
        %4081 = vmatprep.mubr.f32.mxu0 %v2986
        %4082 = vmatmul.mubr.f32.gmra.mrb[0].mxu0 %v2985
        %v4083 = vpop.f32.mrb[0].mxu0
        %v4084 = vadd.f32 %v3859, %v4083
        %v4085 = vpop.f32.mrb[0].mxu0
        %4086 = vmatprep.mubr.f32.mxu0 %v2994
        %4087 = vmatmul.mubr.f32.gmra.mrb[0].mxu0 %v2993
        %v4088 = vpop.f32.mrb[0].mxu0
        %v4089 = vadd.f32 %v3864, %v4088
        %v4090 = vpop.f32.mrb[0].mxu0
        %4091 = vmatprep.mubr.f32.mxu0 %v3002
        %4092 = vmatmul.mubr.f32.gmra.mrb[0].mxu0 %v3001
        %v4093 = vpop.f32.mrb[0].mxu0
        %v4094 = vadd.f32 %v3869, %v4093
        %v4095 = vpop.f32.mrb[0].mxu0
        %4096 = vmatprep.mubr.f32.mxu0 %v3010
        %4097 = vmatmul.mubr.f32.gmra.mrb[0].mxu0 %v3009
        %v4098 = vpop.f32.mrb[0].mxu0
        %v4099 = vadd.f32 %v3874, %v4098
        %v4100 = vpop.f32.mrb[0].mxu0
        %4101 = vmatprep.mubr.f32.mxu0 %v3018
        %4102 = vmatmul.mubr.f32.gmra.mrb[0].mxu0 %v3017
        %v4103 = vpop.f32.mrb[0].mxu0
        %v4104 = vadd.f32 %v3879, %v4103
        %v4105 = vpop.f32.mrb[0].mxu0
        %4106 = vmatprep.mubr.f32.mxu0 %v3026
        %4107 = vmatmul.mubr.f32.gmra.mrb[0].mxu0 %v3025
        %v4108 = vpop.f32.mrb[0].mxu0
        %v4109 = vadd.f32 %v3884, %v4108
        %v4110 = vpop.f32.mrb[0].mxu0
        %4111 = vmatprep.mubr.f32.mxu0 %v3034
        %4112 = vmatmul.mubr.f32.gmra.mrb[0].mxu0 %v3033
        %v4113 = vpop.f32.mrb[0].mxu0
        %v4114 = vadd.f32 %v3889, %v4113
        %v4115 = vpop.f32.mrb[0].mxu0
        %4116 = vmatprep.mubr.f32.mxu0 %v3042
        %4117 = vmatmul.mubr.f32.gmra.mrb[0].mxu0 %v3041
        %v4118 = vpop.f32.mrb[0].mxu0
        %v4119 = vadd.f32 %v3894, %v4118
        %v4120 = vpop.f32.mrb[0].mxu0
        %4121 = vmatprep.mubr.f32.mxu0 %v3050
        %4122 = vmatmul.mubr.f32.gmra.mrb[0].mxu0 %v3049
        %v4123 = vpop.f32.mrb[0].mxu0
        %v4124 = vadd.f32 %v3899, %v4123
        %v4125 = vpop.f32.mrb[0].mxu0
        %4126 = vmatprep.mubr.f32.mxu0 %v3058
        %4127 = vmatmul.mubr.f32.gmra.mrb[0].mxu0 %v3057
        %v4128 = vpop.f32.mrb[0].mxu0
        %v4129 = vadd.f32 %v3904, %v4128
        %v4130 = vpop.f32.mrb[0].mxu0
        %4131 = vmatprep.mubr.f32.mxu0 %v3066
        %4132 = vmatmul.mubr.f32.gmra.mrb[0].mxu0 %v3065
        %v4133 = vpop.f32.mrb[0].mxu0
        %v4134 = vadd.f32 %v3909, %v4133
        %v4135 = vpop.f32.mrb[0].mxu0
        %4136 = vmatprep.mubr.f32.mxu0 %v3074
        %4137 = vmatmul.mubr.f32.gmra.mrb[0].mxu0 %v3073
        %v4138 = vpop.f32.mrb[0].mxu0
        %v4139 = vadd.f32 %v3914, %v4138
        %v4140 = vpop.f32.mrb[0].mxu0
        %4141 = vmatprep.mubr.f32.mxu0 %v3082
        %4142 = vmatmul.mubr.f32.gmra.mrb[0].mxu0 %v3081
        %v4143 = vpop.f32.mrb[0].mxu0
        %v4144 = vadd.f32 %v3919, %v4143
        %v4145 = vpop.f32.mrb[0].mxu0
        %4146 = vmatprep.mubr.f32.mxu0 %v3090
        %4147 = vmatmul.mubr.f32.gmra.mrb[0].mxu0 %v3089
        %v4148 = vpop.f32.mrb[0].mxu0
        %v4149 = vadd.f32 %v3924, %v4148
        %v4150 = vpop.f32.mrb[0].mxu0
        %4151 = vmatprep.mubr.f32.mxu0 %v3098
        %4152 = vmatmul.mubr.f32.gmra.mrb[0].mxu0 %v3097
        %v4153 = vpop.f32.mrb[0].mxu0
        %v4154 = vadd.f32 %v3929, %v4153
        %v4155 = vpop.f32.mrb[0].mxu0
        %4156 = vmatprep.mubr.f32.mxu0 %v3106
        %4157 = vmatmul.mubr.f32.gmra.mrb[0].mxu0 %v3105
        %v4158 = vpop.f32.mrb[0].mxu0
        %v4159 = vadd.f32 %v3934, %v4158
        %v4160 = vpop.f32.mrb[0].mxu0
        %4161 = vmatprep.mubr.f32.mxu0 %v3114
        %4162 = vmatmul.mubr.f32.gmra.mrb[0].mxu0 %v3113
        %v4163 = vpop.f32.mrb[0].mxu0
        %v4164 = vadd.f32 %v3939, %v4163
        %v4165 = vpop.f32.mrb[0].mxu0
        %4166 = vmatprep.mubr.f32.mxu0 %v3122
        %4167 = vmatmul.mubr.f32.gmra.mrb[0].mxu0 %v3121
        %v4168 = vpop.f32.mrb[0].mxu0
        %v4169 = vadd.f32 %v3944, %v4168
        %v4170 = vpop.f32.mrb[0].mxu0
        %4171 = vmatprep.mubr.f32.mxu0 %v3130
        %4172 = vmatmul.mubr.f32.gmra.mrb[0].mxu0 %v3129
        %v4173 = vpop.f32.mrb[0].mxu0
        %v4174 = vadd.f32 %v3949, %v4173
        %v4175 = vpop.f32.mrb[0].mxu0
        %4176 = vmatprep.mubr.f32.mxu0 %v3138
        %4177 = vmatmul.mubr.f32.gmra.mrb[0].mxu0 %v3137
        %v4178 = vpop.f32.mrb[0].mxu0
        %v4179 = vadd.f32 %v3954, %v4178
        %v4180 = vpop.f32.mrb[0].mxu0
        %4181 = vmatprep.mubr.f32.mxu0 %v3146
        %4182 = vmatmul.mubr.f32.gmra.mrb[0].mxu0 %v3145
        %v4183 = vpop.f32.mrb[0].mxu0
        %v4184 = vadd.f32 %v3959, %v4183
        %v4185 = vpop.f32.mrb[0].mxu0
        %4186 = vmatprep.mubr.f32.mxu0 %v3154
        %4187 = vmatmul.mubr.f32.gmra.mrb[0].mxu0 %v3153
        %v4188 = vpop.f32.mrb[0].mxu0
        %v4189 = vadd.f32 %v3964, %v4188
        %v4190 = vpop.f32.mrb[0].mxu0
        %4191 = vmatprep.mubr.f32.mxu0 %v3162
        %4192 = vmatmul.mubr.f32.gmra.mrb[0].mxu0 %v3161
        %v4193 = vpop.f32.mrb[0].mxu0
        %v4194 = vadd.f32 %v3969, %v4193
        %v4195 = vpop.f32.mrb[0].mxu0
        %4196 = vmatprep.mubr.f32.mxu0 %v3170
        %4197 = vmatmul.mubr.f32.gmra.mrb[0].mxu0 %v3169
        %v4198 = vpop.f32.mrb[0].mxu0
        %v4199 = vadd.f32 %v3974, %v4198
        %v4200 = vpop.f32.mrb[0].mxu0
        %4201 = vmatprep.mubr.f32.mxu0 %v3178
        %4202 = vmatmul.mubr.f32.gmra.mrb[0].mxu0 %v3177
        %v4203 = vpop.f32.mrb[0].mxu0
        %v4204 = vadd.f32 %v3979, %v4203
        %v4205 = vpop.f32.mrb[0].mxu0
        %4206 = vdwg.mxu0
        %4207 = vst [vmem:[%s316] sm:$0xff] %v4049
        %4208 = vst [vmem:[%s316 + $0x8] sm:$0xff] %v4054
        %4209 = vst [vmem:[%s316 + $0x10] sm:$0xff] %v4059
        %4210 = vst [vmem:[%s316 + $0x18] sm:$0xff] %v4064
        %4211 = vst [vmem:[%s316 + $0x20] sm:$0xff] %v4069
        %4212 = vst [vmem:[%s316 + $0x28] sm:$0xff] %v4074
        %4213 = vst [vmem:[%s316 + $0x30] sm:$0xff] %v4079
        %4214 = vst [vmem:[%s316 + $0x38] sm:$0xff] %v4084
        %4215 = vst [vmem:[%s316 + $0x40] sm:$0xff] %v4089
        %4216 = vst [vmem:[%s316 + $0x48] sm:$0xff] %v4094
        %4217 = vst [vmem:[%s316 + $0x50] sm:$0xff] %v4099
        %4218 = vst [vmem:[%s316 + $0x58] sm:$0xff] %v4104
        %4219 = vst [vmem:[%s316 + $0x60] sm:$0xff] %v4109
        %4220 = vst [vmem:[%s316 + $0x68] sm:$0xff] %v4114
        %4221 = vst [vmem:[%s316 + $0x70] sm:$0xff] %v4119
        %4222 = vst [vmem:[%s316 + $0x78] sm:$0xff] %v4124
        %4223 = vst [vmem:[%s316 + $0x80] sm:$0xff] %v4129
        %4224 = vst [vmem:[%s316 + $0x88] sm:$0xff] %v4134
        %4225 = vst [vmem:[%s316 + $0x90] sm:$0xff] %v4139
        %4226 = vst [vmem:[%s316 + $0x98] sm:$0xff] %v4144
        %4227 = vst [vmem:[%s316 + $0xa0] sm:$0xff] %v4149
        %4228 = vst [vmem:[%s316 + $0xa8] sm:$0xff] %v4154
        %4229 = vst [vmem:[%s316 + $0xb0] sm:$0xff] %v4159
        %4230 = vst [vmem:[%s316 + $0xb8] sm:$0xff] %v4164
        %4231 = vst [vmem:[%s316 + $0xc0] sm:$0xff] %v4169
        %4232 = vst [vmem:[%s316 + $0xc8] sm:$0xff] %v4174
        %4233 = vst [vmem:[%s316 + $0xd0] sm:$0xff] %v4179
        %4234 = vst [vmem:[%s316 + $0xd8] sm:$0xff] %v4184
        %4235 = vst [vmem:[%s316 + $0xe0] sm:$0xff] %v4189
        %4236 = vst [vmem:[%s316 + $0xe8] sm:$0xff] %v4194
        %4237 = vst [vmem:[%s316 + $0xf0] sm:$0xff] %v4199
        %4238 = vst [vmem:[%s316 + $0xf8] sm:$0xff] %v4204
        %4239 = vst [vmem:[%s323] sm:$0xff] %v2923
        %4240 = vst [vmem:[%s323 + $0x8] sm:$0xff] %v2924
        %4241 = vst [vmem:[%s323 + $0x10] sm:$0xff] %v2925
        %4242 = vst [vmem:[%s323 + $0x18] sm:$0xff] %v2926
        %4243 = vst [vmem:[%s323 + $0x20] sm:$0xff] %v2927
        %4244 = vst [vmem:[%s323 + $0x28] sm:$0xff] %v2928
        %4245 = vst [vmem:[%s323 + $0x30] sm:$0xff] %v2929
        %4246 = vst [vmem:[%s323 + $0x38] sm:$0xff] %v2930
        %4247 = vst [vmem:[%s323 + $0x40] sm:$0xff] %v2931
        %4248 = vst [vmem:[%s323 + $0x48] sm:$0xff] %v2932
        %4249 = vst [vmem:[%s323 + $0x50] sm:$0xff] %v2933
        %4250 = vst [vmem:[%s323 + $0x58] sm:$0xff] %v2934
        %4251 = vst [vmem:[%s323 + $0x60] sm:$0xff] %v2935
        %4252 = vst [vmem:[%s323 + $0x68] sm:$0xff] %v2936
        %4253 = vst [vmem:[%s323 + $0x70] sm:$0xff] %v2937
        %4254 = vst [vmem:[%s323 + $0x78] sm:$0xff] %v2938
        %4255 = vst [vmem:[%s323 + $0x80] sm:$0xff] %v2939
        %4256 = vst [vmem:[%s323 + $0x88] sm:$0xff] %v2940
        %4257 = vst [vmem:[%s323 + $0x90] sm:$0xff] %v2941
        %4258 = vst [vmem:[%s323 + $0x98] sm:$0xff] %v2942
        %4259 = vst [vmem:[%s323 + $0xa0] sm:$0xff] %v2943
        %4260 = vst [vmem:[%s323 + $0xa8] sm:$0xff] %v2944
        %4261 = vst [vmem:[%s323 + $0xb0] sm:$0xff] %v2945
        %4262 = vst [vmem:[%s323 + $0xb8] sm:$0xff] %v2946
        %4263 = vst [vmem:[%s323 + $0xc0] sm:$0xff] %v2947
        %4264 = vst [vmem:[%s323 + $0xc8] sm:$0xff] %v2948
        %4265 = vst [vmem:[%s323 + $0xd0] sm:$0xff] %v2949
        %4266 = vst [vmem:[%s323 + $0xd8] sm:$0xff] %v2950
        %4267 = vst [vmem:[%s323 + $0xe0] sm:$0xff] %v2951
        %4268 = vst [vmem:[%s323 + $0xe8] sm:$0xff] %v2952
        %4269 = vst [vmem:[%s323 + $0xf0] sm:$0xff] %v2953
        %4270 = vst [vmem:[%s323 + $0xf8] sm:$0xff] %v2954
        %4271 = vst [vmem:[%s323 + $0x100] sm:$0xff] %v2955
        %4272 = vst [vmem:[%s323 + $0x108] sm:$0xff] %v2956
        %4273 = vst [vmem:[%s323 + $0x110] sm:$0xff] %v2957
        %4274 = vst [vmem:[%s323 + $0x118] sm:$0xff] %v2958
        %4275 = vst [vmem:[%s323 + $0x120] sm:$0xff] %v2959
        %4276 = vst [vmem:[%s323 + $0x128] sm:$0xff] %v2960
        %4277 = vst [vmem:[%s323 + $0x130] sm:$0xff] %v2961
        %4278 = vst [vmem:[%s323 + $0x138] sm:$0xff] %v2962
        %4279 = vst [vmem:[%s323 + $0x140] sm:$0xff] %v2963
        %4280 = vst [vmem:[%s323 + $0x148] sm:$0xff] %v2964
        %4281 = vst [vmem:[%s323 + $0x150] sm:$0xff] %v2965
        %4282 = vst [vmem:[%s323 + $0x158] sm:$0xff] %v2966
        %4283 = vst [vmem:[%s323 + $0x160] sm:$0xff] %v2967
        %4284 = vst [vmem:[%s323 + $0x168] sm:$0xff] %v2968
        %4285 = vst [vmem:[%s323 + $0x170] sm:$0xff] %v2969
        %4286 = vst [vmem:[%s323 + $0x178] sm:$0xff] %v2970
        %4287 = vst [vmem:[%s323 + $0x180] sm:$0xff] %v2971
        %4288 = vst [vmem:[%s323 + $0x188] sm:$0xff] %v2972
        %4289 = vst [vmem:[%s323 + $0x190] sm:$0xff] %v2973
        %4290 = vst [vmem:[%s323 + $0x198] sm:$0xff] %v2974
        %4291 = vst [vmem:[%s323 + $0x1a0] sm:$0xff] %v2975
        %4292 = vst [vmem:[%s323 + $0x1a8] sm:$0xff] %v2976
        %4293 = vst [vmem:[%s323 + $0x1b0] sm:$0xff] %v2977
        %4294 = vst [vmem:[%s323 + $0x1b8] sm:$0xff] %v2978
        %4295 = vst [vmem:[%s323 + $0x1c0] sm:$0xff] %v2979
        %4296 = vst [vmem:[%s323 + $0x1c8] sm:$0xff] %v2980
        %4297 = vst [vmem:[%s323 + $0x1d0] sm:$0xff] %v2981
        %4298 = vst [vmem:[%s323 + $0x1d8] sm:$0xff] %v2982
        %4299 = vst [vmem:[%s323 + $0x1e0] sm:$0xff] %v2983
        %4300 = vst [vmem:[%s323 + $0x1e8] sm:$0xff] %v2984
        %4301 = vst [vmem:[%s323 + $0x1f0] sm:$0xff] %v2985
        %4302 = vst [vmem:[%s323 + $0x1f8] sm:$0xff] %v2986
        %4303 = vst [vmem:[%s323 + $0x200] sm:$0xff] %v2987
        %4304 = vst [vmem:[%s323 + $0x208] sm:$0xff] %v2988
        %4305 = vst [vmem:[%s323 + $0x210] sm:$0xff] %v2989
        %4306 = vst [vmem:[%s323 + $0x218] sm:$0xff] %v2990
        %4307 = vst [vmem:[%s323 + $0x220] sm:$0xff] %v2991
        %4308 = vst [vmem:[%s323 + $0x228] sm:$0xff] %v2992
        %4309 = vst [vmem:[%s323 + $0x230] sm:$0xff] %v2993
        %4310 = vst [vmem:[%s323 + $0x238] sm:$0xff] %v2994
        %4311 = vst [vmem:[%s323 + $0x240] sm:$0xff] %v2995
        %4312 = vst [vmem:[%s323 + $0x248] sm:$0xff] %v2996
        %4313 = vst [vmem:[%s323 + $0x250] sm:$0xff] %v2997
        %4314 = vst [vmem:[%s323 + $0x258] sm:$0xff] %v2998
        %4315 = vst [vmem:[%s323 + $0x260] sm:$0xff] %v2999
        %4316 = vst [vmem:[%s323 + $0x268] sm:$0xff] %v3000
        %4317 = vst [vmem:[%s323 + $0x270] sm:$0xff] %v3001
        %4318 = vst [vmem:[%s323 + $0x278] sm:$0xff] %v3002
        %4319 = vst [vmem:[%s323 + $0x280] sm:$0xff] %v3003
        %4320 = vst [vmem:[%s323 + $0x288] sm:$0xff] %v3004
        %4321 = vst [vmem:[%s323 + $0x290] sm:$0xff] %v3005
        %4322 = vst [vmem:[%s323 + $0x298] sm:$0xff] %v3006
        %4323 = vst [vmem:[%s323 + $0x2a0] sm:$0xff] %v3007
        %4324 = vst [vmem:[%s323 + $0x2a8] sm:$0xff] %v3008
        %4325 = vst [vmem:[%s323 + $0x2b0] sm:$0xff] %v3009
        %4326 = vst [vmem:[%s323 + $0x2b8] sm:$0xff] %v3010
        %4327 = vst [vmem:[%s323 + $0x2c0] sm:$0xff] %v3011
        %4328 = vst [vmem:[%s323 + $0x2c8] sm:$0xff] %v3012
        %4329 = vst [vmem:[%s323 + $0x2d0] sm:$0xff] %v3013
        %4330 = vst [vmem:[%s323 + $0x2d8] sm:$0xff] %v3014
        %4331 = vst [vmem:[%s323 + $0x2e0] sm:$0xff] %v3015
        %4332 = vst [vmem:[%s323 + $0x2e8] sm:$0xff] %v3016
        %4333 = vst [vmem:[%s323 + $0x2f0] sm:$0xff] %v3017
        %4334 = vst [vmem:[%s323 + $0x2f8] sm:$0xff] %v3018
        %4335 = vst [vmem:[%s323 + $0x300] sm:$0xff] %v3019
        %4336 = vst [vmem:[%s323 + $0x308] sm:$0xff] %v3020
        %4337 = vst [vmem:[%s323 + $0x310] sm:$0xff] %v3021
        %4338 = vst [vmem:[%s323 + $0x318] sm:$0xff] %v3022
        %4339 = vst [vmem:[%s323 + $0x320] sm:$0xff] %v3023
        %4340 = vst [vmem:[%s323 + $0x328] sm:$0xff] %v3024
        %4341 = vst [vmem:[%s323 + $0x330] sm:$0xff] %v3025
        %4342 = vst [vmem:[%s323 + $0x338] sm:$0xff] %v3026
        %4343 = vst [vmem:[%s323 + $0x340] sm:$0xff] %v3027
        %4344 = vst [vmem:[%s323 + $0x348] sm:$0xff] %v3028
        %4345 = vst [vmem:[%s323 + $0x350] sm:$0xff] %v3029
        %4346 = vst [vmem:[%s323 + $0x358] sm:$0xff] %v3030
        %4347 = vst [vmem:[%s323 + $0x360] sm:$0xff] %v3031
        %4348 = vst [vmem:[%s323 + $0x368] sm:$0xff] %v3032
        %4349 = vst [vmem:[%s323 + $0x370] sm:$0xff] %v3033
        %4350 = vst [vmem:[%s323 + $0x378] sm:$0xff] %v3034
        %4351 = vst [vmem:[%s323 + $0x380] sm:$0xff] %v3035
        %4352 = vst [vmem:[%s323 + $0x388] sm:$0xff] %v3036
        %4353 = vst [vmem:[%s323 + $0x390] sm:$0xff] %v3037
        %4354 = vst [vmem:[%s323 + $0x398] sm:$0xff] %v3038
        %4355 = vst [vmem:[%s323 + $0x3a0] sm:$0xff] %v3039
        %4356 = vst [vmem:[%s323 + $0x3a8] sm:$0xff] %v3040
        %4357 = vst [vmem:[%s323 + $0x3b0] sm:$0xff] %v3041
        %4358 = vst [vmem:[%s323 + $0x3b8] sm:$0xff] %v3042
        %4359 = vst [vmem:[%s323 + $0x3c0] sm:$0xff] %v3043
        %4360 = vst [vmem:[%s323 + $0x3c8] sm:$0xff] %v3044
        %4361 = vst [vmem:[%s323 + $0x3d0] sm:$0xff] %v3045
        %4362 = vst [vmem:[%s323 + $0x3d8] sm:$0xff] %v3046
        %4363 = vst [vmem:[%s323 + $0x3e0] sm:$0xff] %v3047
        %4364 = vst [vmem:[%s323 + $0x3e8] sm:$0xff] %v3048
        %4365 = vst [vmem:[%s323 + $0x3f0] sm:$0xff] %v3049
        %4366 = vst [vmem:[%s323 + $0x3f8] sm:$0xff] %v3050
        %4367 = vst [vmem:[%s323 + $0x400] sm:$0xff] %v3051
        %4368 = vst [vmem:[%s323 + $0x408] sm:$0xff] %v3052
        %4369 = vst [vmem:[%s323 + $0x410] sm:$0xff] %v3053
        %4370 = vst [vmem:[%s323 + $0x418] sm:$0xff] %v3054
        %4371 = vst [vmem:[%s323 + $0x420] sm:$0xff] %v3055
        %4372 = vst [vmem:[%s323 + $0x428] sm:$0xff] %v3056
        %4373 = vst [vmem:[%s323 + $0x430] sm:$0xff] %v3057
        %4374 = vst [vmem:[%s323 + $0x438] sm:$0xff] %v3058
        %4375 = vst [vmem:[%s323 + $0x440] sm:$0xff] %v3059
        %4376 = vst [vmem:[%s323 + $0x448] sm:$0xff] %v3060
        %4377 = vst [vmem:[%s323 + $0x450] sm:$0xff] %v3061
        %4378 = vst [vmem:[%s323 + $0x458] sm:$0xff] %v3062
        %4379 = vst [vmem:[%s323 + $0x460] sm:$0xff] %v3063
        %4380 = vst [vmem:[%s323 + $0x468] sm:$0xff] %v3064
        %4381 = vst [vmem:[%s323 + $0x470] sm:$0xff] %v3065
        %4382 = vst [vmem:[%s323 + $0x478] sm:$0xff] %v3066
        %4383 = vst [vmem:[%s323 + $0x480] sm:$0xff] %v3067
        %4384 = vst [vmem:[%s323 + $0x488] sm:$0xff] %v3068
        %4385 = vst [vmem:[%s323 + $0x490] sm:$0xff] %v3069
        %4386 = vst [vmem:[%s323 + $0x498] sm:$0xff] %v3070
        %4387 = vst [vmem:[%s323 + $0x4a0] sm:$0xff] %v3071
        %4388 = vst [vmem:[%s323 + $0x4a8] sm:$0xff] %v3072
        %4389 = vst [vmem:[%s323 + $0x4b0] sm:$0xff] %v3073
        %4390 = vst [vmem:[%s323 + $0x4b8] sm:$0xff] %v3074
        %4391 = vst [vmem:[%s323 + $0x4c0] sm:$0xff] %v3075
        %4392 = vst [vmem:[%s323 + $0x4c8] sm:$0xff] %v3076
        %4393 = vst [vmem:[%s323 + $0x4d0] sm:$0xff] %v3077
        %4394 = vst [vmem:[%s323 + $0x4d8] sm:$0xff] %v3078
        %4395 = vst [vmem:[%s323 + $0x4e0] sm:$0xff] %v3079
        %4396 = vst [vmem:[%s323 + $0x4e8] sm:$0xff] %v3080
        %4397 = vst [vmem:[%s323 + $0x4f0] sm:$0xff] %v3081
        %4398 = vst [vmem:[%s323 + $0x4f8] sm:$0xff] %v3082
        %4399 = vst [vmem:[%s323 + $0x500] sm:$0xff] %v3083
        %4400 = vst [vmem:[%s323 + $0x508] sm:$0xff] %v3084
        %4401 = vst [vmem:[%s323 + $0x510] sm:$0xff] %v3085
        %4402 = vst [vmem:[%s323 + $0x518] sm:$0xff] %v3086
        %4403 = vst [vmem:[%s323 + $0x520] sm:$0xff] %v3087
        %4404 = vst [vmem:[%s323 + $0x528] sm:$0xff] %v3088
        %4405 = vst [vmem:[%s323 + $0x530] sm:$0xff] %v3089
        %4406 = vst [vmem:[%s323 + $0x538] sm:$0xff] %v3090
        %4407 = vst [vmem:[%s323 + $0x540] sm:$0xff] %v3091
        %4408 = vst [vmem:[%s323 + $0x548] sm:$0xff] %v3092
        %4409 = vst [vmem:[%s323 + $0x550] sm:$0xff] %v3093
        %4410 = vst [vmem:[%s323 + $0x558] sm:$0xff] %v3094
        %4411 = vst [vmem:[%s323 + $0x560] sm:$0xff] %v3095
        %4412 = vst [vmem:[%s323 + $0x568] sm:$0xff] %v3096
        %4413 = vst [vmem:[%s323 + $0x570] sm:$0xff] %v3097
        %4414 = vst [vmem:[%s323 + $0x578] sm:$0xff] %v3098
        %4415 = vst [vmem:[%s323 + $0x580] sm:$0xff] %v3099
        %4416 = vst [vmem:[%s323 + $0x588] sm:$0xff] %v3100
        %4417 = vst [vmem:[%s323 + $0x590] sm:$0xff] %v3101
        %4418 = vst [vmem:[%s323 + $0x598] sm:$0xff] %v3102
        %4419 = vst [vmem:[%s323 + $0x5a0] sm:$0xff] %v3103
        %4420 = vst [vmem:[%s323 + $0x5a8] sm:$0xff] %v3104
        %4421 = vst [vmem:[%s323 + $0x5b0] sm:$0xff] %v3105
        %4422 = vst [vmem:[%s323 + $0x5b8] sm:$0xff] %v3106
        %4423 = vst [vmem:[%s323 + $0x5c0] sm:$0xff] %v3107
        %4424 = vst [vmem:[%s323 + $0x5c8] sm:$0xff] %v3108
        %4425 = vst [vmem:[%s323 + $0x5d0] sm:$0xff] %v3109
        %4426 = vst [vmem:[%s323 + $0x5d8] sm:$0xff] %v3110
        %4427 = vst [vmem:[%s323 + $0x5e0] sm:$0xff] %v3111
        %4428 = vst [vmem:[%s323 + $0x5e8] sm:$0xff] %v3112
        %4429 = vst [vmem:[%s323 + $0x5f0] sm:$0xff] %v3113
        %4430 = vst [vmem:[%s323 + $0x5f8] sm:$0xff] %v3114
        %4431 = vst [vmem:[%s323 + $0x600] sm:$0xff] %v3115
        %4432 = vst [vmem:[%s323 + $0x608] sm:$0xff] %v3116
        %4433 = vst [vmem:[%s323 + $0x610] sm:$0xff] %v3117
        %4434 = vst [vmem:[%s323 + $0x618] sm:$0xff] %v3118
        %4435 = vst [vmem:[%s323 + $0x620] sm:$0xff] %v3119
        %4436 = vst [vmem:[%s323 + $0x628] sm:$0xff] %v3120
        %4437 = vst [vmem:[%s323 + $0x630] sm:$0xff] %v3121
        %4438 = vst [vmem:[%s323 + $0x638] sm:$0xff] %v3122
        %4439 = vst [vmem:[%s323 + $0x640] sm:$0xff] %v3123
        %4440 = vst [vmem:[%s323 + $0x648] sm:$0xff] %v3124
        %4441 = vst [vmem:[%s323 + $0x650] sm:$0xff] %v3125
        %4442 = vst [vmem:[%s323 + $0x658] sm:$0xff] %v3126
        %4443 = vst [vmem:[%s323 + $0x660] sm:$0xff] %v3127
        %4444 = vst [vmem:[%s323 + $0x668] sm:$0xff] %v3128
        %4445 = vst [vmem:[%s323 + $0x670] sm:$0xff] %v3129
        %4446 = vst [vmem:[%s323 + $0x678] sm:$0xff] %v3130
        %4447 = vst [vmem:[%s323 + $0x680] sm:$0xff] %v3131
        %4448 = vst [vmem:[%s323 + $0x688] sm:$0xff] %v3132
        %4449 = vst [vmem:[%s323 + $0x690] sm:$0xff] %v3133
        %4450 = vst [vmem:[%s323 + $0x698] sm:$0xff] %v3134
        %4451 = vst [vmem:[%s323 + $0x6a0] sm:$0xff] %v3135
        %4452 = vst [vmem:[%s323 + $0x6a8] sm:$0xff] %v3136
        %4453 = vst [vmem:[%s323 + $0x6b0] sm:$0xff] %v3137
        %4454 = vst [vmem:[%s323 + $0x6b8] sm:$0xff] %v3138
        %4455 = vst [vmem:[%s323 + $0x6c0] sm:$0xff] %v3139
        %4456 = vst [vmem:[%s323 + $0x6c8] sm:$0xff] %v3140
        %4457 = vst [vmem:[%s323 + $0x6d0] sm:$0xff] %v3141
        %4458 = vst [vmem:[%s323 + $0x6d8] sm:$0xff] %v3142
        %4459 = vst [vmem:[%s323 + $0x6e0] sm:$0xff] %v3143
        %4460 = vst [vmem:[%s323 + $0x6e8] sm:$0xff] %v3144
        %4461 = vst [vmem:[%s323 + $0x6f0] sm:$0xff] %v3145
        %4462 = vst [vmem:[%s323 + $0x6f8] sm:$0xff] %v3146
        %4463 = vst [vmem:[%s323 + $0x700] sm:$0xff] %v3147
        %4464 = vst [vmem:[%s323 + $0x708] sm:$0xff] %v3148
        %4465 = vst [vmem:[%s323 + $0x710] sm:$0xff] %v3149
        %4466 = vst [vmem:[%s323 + $0x718] sm:$0xff] %v3150
        %4467 = vst [vmem:[%s323 + $0x720] sm:$0xff] %v3151
        %4468 = vst [vmem:[%s323 + $0x728] sm:$0xff] %v3152
        %4469 = vst [vmem:[%s323 + $0x730] sm:$0xff] %v3153
        %4470 = vst [vmem:[%s323 + $0x738] sm:$0xff] %v3154
        %4471 = vst [vmem:[%s323 + $0x740] sm:$0xff] %v3155
        %4472 = vst [vmem:[%s323 + $0x748] sm:$0xff] %v3156
        %4473 = vst [vmem:[%s323 + $0x750] sm:$0xff] %v3157
        %4474 = vst [vmem:[%s323 + $0x758] sm:$0xff] %v3158
        %4475 = vst [vmem:[%s323 + $0x760] sm:$0xff] %v3159
        %4476 = vst [vmem:[%s323 + $0x768] sm:$0xff] %v3160
        %4477 = vst [vmem:[%s323 + $0x770] sm:$0xff] %v3161
        %4478 = vst [vmem:[%s323 + $0x778] sm:$0xff] %v3162
        %4479 = vst [vmem:[%s323 + $0x780] sm:$0xff] %v3163
        %4480 = vst [vmem:[%s323 + $0x788] sm:$0xff] %v3164
        %4481 = vst [vmem:[%s323 + $0x790] sm:$0xff] %v3165
        %4482 = vst [vmem:[%s323 + $0x798] sm:$0xff] %v3166
        %4483 = vst [vmem:[%s323 + $0x7a0] sm:$0xff] %v3167
        %4484 = vst [vmem:[%s323 + $0x7a8] sm:$0xff] %v3168
        %4485 = vst [vmem:[%s323 + $0x7b0] sm:$0xff] %v3169
        %4486 = vst [vmem:[%s323 + $0x7b8] sm:$0xff] %v3170
        %4487 = vst [vmem:[%s323 + $0x7c0] sm:$0xff] %v3171
        %4488 = vst [vmem:[%s323 + $0x7c8] sm:$0xff] %v3172
        %4489 = vst [vmem:[%s323 + $0x7d0] sm:$0xff] %v3173
        %4490 = vst [vmem:[%s323 + $0x7d8] sm:$0xff] %v3174
        %4491 = vst [vmem:[%s323 + $0x7e0] sm:$0xff] %v3175
        %4492 = vst [vmem:[%s323 + $0x7e8] sm:$0xff] %v3176
        %4493 = vst [vmem:[%s323 + $0x7f0] sm:$0xff] %v3177
        %4494 = vst [vmem:[%s323 + $0x7f8] sm:$0xff] %v3178
        %s4495 = sand.u32 %s130, 1
        %s4496 = scalar_lea.sflag [#allocation4], %s4495
        %s4497 = sand.u32 %s130, 1
        %s4498 = smul.addr %s4497, 256
        %s4499 = scalar_lea.vmem [#allocation8], %s4498
        %s4500 = sand.u32 %s158, 1
        %s4501 = scalar_lea.sflag [#allocation10], %s4500
        %s4502 = sand.u32 %s158, 1
        %s4503 = smul.addr %s4502, 2048
        %s4504 = scalar_lea.vmem [#allocation9], %s4503
        // Predicated region
        $region45: #{tpu_custom_call.1} parent=31 // pred_check
          %p4505 = pneg %p140
        $region46: #{tpu_custom_call.1} parent=31 // pred_check_branch
          %4507 = sbr.rel (%p4505) target = $region48
        $region47: #{tpu_custom_call.1} parent=31 // pred_region
          %s4508 = smul.u32 32, %s33
          %s4510 = ssub.s32 4096, 4096
          %4511 = vsyncadd %s4496, %s4510
          %s4512 = smul.addr %s32, 128
          %s4513 = sadd.s32 %s4508, %s4512
          %s4514 = smul.addr %s4513, 128
          %s4515 = scalar_lea.hbm %s3, %s4514
          %s4516 = sshll.u32 %s4499, 4
          %s4517 = int_to_ptr.vmem [resolvable:$true] %s4516
          %4522 = dma.vmem_to_hbm [thread:$0]  %s4517, 4096, %s4515, %s4496, 128, 128, 8
        $region48: #{tpu_custom_call.1} parent=31 // pred_fallthru
          _
        // Predicated region
        $region49: #{tpu_custom_call.1} parent=31 // pred_check
          %p4523 = pneg %p168
        $region50: #{tpu_custom_call.1} parent=31 // pred_check_branch
          %4525 = sbr.rel (%p4523) target = $region52
        $region51: #{tpu_custom_call.1} parent=31 // pred_region
          %s4526 = smul.u32 32, %s33
          %s4528 = ssub.s32 32768, 32768
          %4529 = vsyncadd %s4501, %s4528
          %s4530 = smul.addr %s4526, 8
          %s4531 = smul.addr %s32, 1024
          %s4532 = sadd.s32 %s4530, %s4531
          %s4533 = smul.addr %s4532, 128
          %s4534 = scalar_lea.hbm %s4, %s4533
          %s4535 = sshll.u32 %s4504, 4
          %s4536 = int_to_ptr.vmem [resolvable:$true] %s4535
          %4541 = dma.vmem_to_hbm [thread:$0]  %s4536, 32768, %s4534, %s4501, 1024, 1024, 64
        $region52: #{tpu_custom_call.1} parent=31 // pred_fallthru
          _
      $region32: #{tpu_custom_call.1} parent=5 // pred_fallthru
        _
      %p4542 = scmp.le.s32.totalorder 2, %s23
      // Predicated region
      $region53: #{tpu_custom_call.1} parent=5 // pred_check
        %p4543 = pneg %p4542
      $region54: #{tpu_custom_call.1} parent=5 // pred_check_branch
        %4545 = sbr.rel (%p4543) target = $region56
      $region55: #{tpu_custom_call.1} parent=5 // pred_region
        %s4546 = ssub.s32 %s23, 2
        // Predicated region
        $region57: #{tpu_custom_call.1} parent=55 // pred_check
          %p4547 = pneg %p146
        $region58: #{tpu_custom_call.1} parent=55 // pred_check_branch
          %4549 = sbr.rel (%p4547) target = $region60
        $region59: #{tpu_custom_call.1} parent=55 // pred_region
          %s4550 = sand.u32 %s131, 1
          %s4551 = scalar_lea.sflag [#allocation4], %s4550
          %s4552 = sand.u32 %s131, 1
          %s4553 = smul.addr %s4552, 256
          %s4554 = scalar_lea.vmem [#allocation8], %s4553
          %4555 = dma.done %s4551, 4096
        $region60: #{tpu_custom_call.1} parent=55 // pred_fallthru
          _
        // Predicated region
        $region61: #{tpu_custom_call.1} parent=55 // pred_check
          %p4556 = pneg %p174
        $region62: #{tpu_custom_call.1} parent=55 // pred_check_branch
          %4558 = sbr.rel (%p4556) target = $region64
        $region63: #{tpu_custom_call.1} parent=55 // pred_region
          %s4559 = sand.u32 %s159, 1
          %s4560 = scalar_lea.sflag [#allocation10], %s4559
          %s4561 = sand.u32 %s159, 1
          %s4562 = smul.addr %s4561, 2048
          %s4563 = scalar_lea.vmem [#allocation9], %s4562
          %4564 = dma.done %s4560, 32768
        $region64: #{tpu_custom_call.1} parent=55 // pred_fallthru
          _
      $region56: #{tpu_custom_call.1} parent=5 // pred_fallthru
        _
    $region6: #{tpu_custom_call.1} parent=1 // loop_footer
      %s27 = sadd.s32 1, %s23
    $region7: #{tpu_custom_call.1} parent=1 // loop_footer_branch
      %22 = sbr.rel target = $region3
    $region8: #{tpu_custom_call.1} parent=1 // loop_exit
      _
    %4565 = vsyncpa [#allocation3], 1
    %s4566 = scalar_lea.sflag [#allocation3], 1
    %4567 = vsyncpa %s4566, 1
    %4568 = vsyncpa [#allocation6], 1
    %s4569 = scalar_lea.sflag [#allocation6], 1
    %4570 = vsyncpa %s4569, 1
    %4571 = vsyncpa [#allocation4], 1
    %s4572 = scalar_lea.sflag [#allocation4], 1
    %4573 = vsyncpa %s4572, 1
    %4574 = vsyncpa [#allocation10], 1
    %s4575 = scalar_lea.sflag [#allocation10], 1
    %4576 = vsyncpa %s4575, 1

</llo_original>
